<compile_context>
chip_gen: v7x
topology: tpu7x:2x2x1
jax: 0.10.0
libtpu: 0.0.40
codegen_flags: <defaults>
</compile_context>

<pallas_src>
import functools

import jax
import jax.numpy as jnp
from jax.experimental import pallas as pl
from jax.experimental.pallas import tpu as pltpu

LN_EPS = 1e-5  # torch.nn.LayerNorm default


# ----------------------------- Pallas kernel -------------------------------
# One grid step = one batch element's full (N, C) sequence through ALL layers:
#   for l in layers:
#     x = x + Proj(Attn(LN1(x)))
#     x = x + FC2(relu(FC1(LN2(x))))
# Per-layer weights are stacked along a leading L axis and kept fully resident
# in VMEM (they are fetched once because their block index never changes).
def fused_transformer_kernel(x_ref, ln1w_ref, ln1b_ref, wqkv_ref, wp_ref,
                             bp_ref, ln2w_ref, ln2b_ref, w1_ref, b1_ref,
                             w2_ref, b2_ref, o_ref, *, num_layers, num_heads):
    n, c = x_ref.shape                       # (N, C) for this batch element
    d = c // num_heads
    scale = float(d) ** -0.5
    wdt = wqkv_ref.dtype                     # bf16 weights

    def layernorm(v, w, b):
        mu = jnp.mean(v, axis=-1, keepdims=True)
        var = jnp.mean((v - mu) ** 2, axis=-1, keepdims=True)  # biased, like torch
        return (v - mu) * jax.lax.rsqrt(var + LN_EPS) * w + b

    def layer_body(l, x):
        # ---- attention branch: x = x + Proj(Attn(LN1(x))) ----
        xn = layernorm(x, ln1w_ref[l], ln1b_ref[l])                        # (N, C) f32
        # lane-dense fused QKV projection (bf16 weights, f32 accumulation)
        qkv = jnp.dot(xn.astype(wdt), wqkv_ref[l],
                      preferred_element_type=jnp.float32)                  # (N, 3C)

        head_outs = []
        for h in range(num_heads):           # bounded static unroll over heads;
            lo = h * d                       # only activations are sliced (lanes)
            qh = qkv[:, lo:lo + d]
            kh = qkv[:, c + lo:c + lo + d]
            vh = qkv[:, 2 * c + lo:2 * c + lo + d]
            s = jax.lax.dot_general(qh, kh, (((1,), (1,)), ((), ())),
                                    preferred_element_type=jnp.float32) * scale  # (N, N)
            s = s - jnp.max(s, axis=-1, keepdims=True)
            e = jnp.exp(s)
            p = e * pl.reciprocal(jnp.sum(e, axis=-1, keepdims=True), approx=True)
            head_outs.append(jnp.dot(p, vh, preferred_element_type=jnp.float32))  # (N, d)

        attn = jnp.concatenate(head_outs, axis=-1)                         # (N, C) lane concat
        # single full-width output projection (K = C, full systolic depth)
        attn = jnp.dot(attn.astype(wdt), wp_ref[l],
                       preferred_element_type=jnp.float32) + bp_ref[l]
        x = x + attn

        # ---- MLP branch: x = x + FC2(relu(FC1(LN2(x)))) ----
        xn2 = layernorm(x, ln2w_ref[l], ln2b_ref[l])
        h1 = jnp.dot(xn2.astype(wdt), w1_ref[l],
                     preferred_element_type=jnp.float32) + b1_ref[l]
        h1 = jnp.maximum(h1, 0.0)                                          # ReLU
        x = x + jnp.dot(h1.astype(wdt), w2_ref[l],
                        preferred_element_type=jnp.float32) + b2_ref[l]
        return x

    x = x_ref[...].astype(jnp.float32)
    x = jax.lax.fori_loop(0, num_layers, layer_body, x,
                          unroll=bool(num_layers <= 4))
    o_ref[...] = x.astype(o_ref.dtype)       # written once, after all layers


# ------------------------------ wrappers ------------------------------------
PARAM_ORDER = ("ln1_w", "ln1_b", "wqkv", "wp", "bp",
               "ln2_w", "ln2_b", "w1", "b1", "w2", "b2")


def pack_params(layer_params, weight_dtype=jnp.bfloat16):
    """Stack per-layer params along a leading L axis; fuse Q|K|V weights."""

    def stack(key, dtype=None):
        a = jnp.stack([p[key] for p in layer_params], axis=0)
        return a.astype(dtype) if dtype is not None else a

    wq = stack("wq")                                   # (L, C, C)
    wkv = stack("wkv")                                 # (L, C, 2C): [:C]=K, [C:]=V
    wqkv = jnp.concatenate([wq, wkv], axis=-1).astype(weight_dtype)  # (L, C, 3C)

    return dict(
        ln1_w=stack("ln1_w"), ln1_b=stack("ln1_b"),
        wqkv=wqkv,
        wp=stack("wp", weight_dtype), bp=stack("bp"),
        ln2_w=stack("ln2_w"), ln2_b=stack("ln2_b"),
        w1=stack("w1", weight_dtype), b1=stack("b1"),
        w2=stack("w2", weight_dtype), b2=stack("b2"),
    )


def transformer_forward(x, layer_params, num_heads, weight_dtype=jnp.bfloat16):
    # enc_dec=False, y=None, mask=None -> plain self-attention stack, fused
    # into a single pallas_call: grid over batch (parallel), layers looped
    # inside the kernel with all weights resident in VMEM.
    B, N, C = x.shape
    L = len(layer_params)
    packed = pack_params(layer_params, weight_dtype)
    Hm = packed["w1"].shape[-1]

    def resident_spec(a):
        zeros = (0,) * a.ndim
        return pl.BlockSpec(a.shape, lambda b, _z=zeros: _z)  # constant block index
                                                              # -> fetched once, resident

    in_specs = ([pl.BlockSpec((None, N, C), lambda b: (b, 0, 0))] +
                [resident_spec(packed[k]) for k in PARAM_ORDER])
    out_spec = pl.BlockSpec((None, N, C), lambda b: (b, 0, 0))

    # ---- VMEM budget (important on v7x's 64 MiB): resident weights (the
    # pipeline may double-buffer them) + in/out activation blocks + carry.
    weight_bytes = sum(int(packed[k].size) * packed[k].dtype.itemsize
                       for k in PARAM_ORDER)
    act_bytes = 2 * 2 * N * C * x.dtype.itemsize          # double-buffered in + out blocks
    carry_bytes = N * C * 4                                # f32 fori_loop carry
    vmem_needed = 2 * weight_bytes + act_bytes + carry_bytes
    vmem_limit = int(min(100 * 2**20, max(16 * 2**20, 2 * vmem_needed)))

    # ---- advisory cost estimate for XLA scheduling of this short custom call
    flops = L * B * (2 * N * C * 3 * C          # fused QKV projection
                     + 4 * N * N * C            # scores + p@v over all heads
                     + 2 * N * C * C            # output projection
                     + 2 * 2 * N * C * Hm)      # MLP fc1 + fc2
    transcendentals = L * B * (num_heads * N * N      # exp
                               + num_heads * N        # reciprocal
                               + 2 * N)               # rsqrt (2 layernorms)
    bytes_accessed = 2 * B * N * C * x.dtype.itemsize + weight_bytes

    out = pl.pallas_call(
        functools.partial(fused_transformer_kernel,
                          num_layers=L, num_heads=num_heads),
        out_shape=jax.ShapeDtypeStruct((B, N, C), x.dtype),
        grid_spec=pltpu.PrefetchScalarGridSpec(
            num_scalar_prefetch=0,
            grid=(B,),                       # batch axis only; layers loop in-kernel
            in_specs=in_specs,
            out_specs=out_spec,
        ),
        compiler_params=pltpu.CompilerParams(
            dimension_semantics=("parallel",),   # lets v7x split batch across its 2 TCs
            vmem_limit_bytes=vmem_limit),
        cost_estimate=pl.CostEstimate(
            flops=flops, transcendentals=transcendentals,
            bytes_accessed=bytes_accessed),
    )(x, *[packed[k] for k in PARAM_ORDER])

    return out


# --------------------------- param construction -----------------------------
def init_params(key, num_layers, C, mlp_ratio=2.0):
    H = int(C * mlp_ratio)
    params = []
    for i in range(num_layers):
        ks = jax.random.split(jax.random.fold_in(key, i), 8)
        params.append(dict(
            ln1_w=jnp.ones((1, C), jnp.float32),
            ln1_b=jnp.zeros((1, C), jnp.float32),
            wq=0.05 * jax.random.normal(ks[0], (C, C), jnp.float32),
            wkv=0.05 * jax.random.normal(ks[1], (C, 2 * C), jnp.float32),
            wp=0.05 * jax.random.normal(ks[2], (C, C), jnp.float32),
            bp=0.05 * jax.random.normal(ks[3], (1, C), jnp.float32),
            ln2_w=jnp.ones((1, C), jnp.float32),
            ln2_b=jnp.zeros((1, C), jnp.float32),
            w1=0.05 * jax.random.normal(ks[4], (C, H), jnp.float32),
            b1=0.05 * jax.random.normal(ks[5], (1, H), jnp.float32),
            w2=0.05 * jax.random.normal(ks[6], (H, C), jnp.float32),
            b2=0.05 * jax.random.normal(ks[7], (1, C), jnp.float32),
        ))
    return params


# ----------------------------- pure-JAX reference ----------------------------
def ref_layer(x, p, num_heads):
    B, N, C = x.shape
    d = C // num_heads
    scale = float(d) ** -0.5

    def ln(v, w, b):
        mu = jnp.mean(v, axis=-1, keepdims=True)
        var = jnp.mean((v - mu) ** 2, axis=-1, keepdims=True)
        return (v - mu) / jnp.sqrt(var + LN_EPS) * w[0] + b[0]

    xn = ln(x, p["ln1_w"], p["ln1_b"])
    q = (xn @ p["wq"]).reshape(B, N, num_heads, d)
    kv = (xn @ p["wkv"]).reshape(B, N, 2, num_heads, d)
    k, v = kv[:, :, 0], kv[:, :, 1]
    att = jnp.einsum('bnhd,bmhd->bnmh', q, k) * scale
    att = jax.nn.softmax(att, axis=2)
    out = jnp.einsum('bnmh,bmhd->bnhd', att, v).reshape(B, N, C)
    out = out @ p["wp"] + p["bp"][0]
    x = x + out
    xn2 = ln(x, p["ln2_w"], p["ln2_b"])
    h1 = jnp.maximum(xn2 @ p["w1"] + p["b1"][0], 0.0)
    return x + (h1 @ p["w2"] + p["b2"][0])


def ref_forward(x, layer_params, num_heads):
    for p in layer_params:
        x = ref_layer(x, p, num_heads)
    return x


# ---------------------------------- main -------------------------------------
if __name__ == "__main__":
    # Transformer(dim_self=32, num_heads=4, num_layers=2, mlp_ratio=2.0, enc_dec=False)
    B, N, C = 2, 8, 32
    NUM_HEADS = 4
    NUM_LAYERS = 2

    key = jax.random.PRNGKey(0)
    kx, kp = jax.random.split(key)
    x = jax.random.normal(kx, (B, N, C), jnp.float32)
    params = init_params(kp, NUM_LAYERS, C, mlp_ratio=2.0)

    out = transformer_forward(x, params, NUM_HEADS)
    out = jax.block_until_ready(out)

    ref = jax.block_until_ready(ref_forward(x, params, NUM_HEADS))
    assert out.shape == (B, N, C)
    # tolerance accounts for bf16 weights/activations at the matmuls and for
    # pl.reciprocal(approx=True) in the softmax (f32 reference).
    assert jnp.allclose(out, ref, rtol=3e-2, atol=3e-2), "mismatch vs reference"

    print("KERNEL_OK")
</pallas_src>

<mosaic_0001>
module attributes {stable_mosaic.version = 11 : i64} {
  func.func @fused_transformer_kernel(%arg0: i32, %arg1: memref<1x8x32xf32, #tpu.memory_space<vmem>>, %arg2: memref<2x1x32xf32, #tpu.memory_space<vmem>>, %arg3: memref<2x1x32xf32, #tpu.memory_space<vmem>>, %arg4: memref<2x32x96xbf16, #tpu.memory_space<vmem>>, %arg5: memref<2x32x32xbf16, #tpu.memory_space<vmem>>, %arg6: memref<2x1x32xf32, #tpu.memory_space<vmem>>, %arg7: memref<2x1x32xf32, #tpu.memory_space<vmem>>, %arg8: memref<2x1x32xf32, #tpu.memory_space<vmem>>, %arg9: memref<2x32x64xbf16, #tpu.memory_space<vmem>>, %arg10: memref<2x1x64xf32, #tpu.memory_space<vmem>>, %arg11: memref<2x64x32xbf16, #tpu.memory_space<vmem>>, %arg12: memref<2x1x32xf32, #tpu.memory_space<vmem>>, %arg13: memref<1x8x32xf32, #tpu.memory_space<vmem>>) attributes {dimension_semantics = [#tpu.dimension_semantics<parallel>], iteration_bounds = array<i64: 2>, scalar_prefetch = 0 : i64, scratch_operands = 0 : i64, tpu.core_type = #tpu.core_type<tc>, window_params = [{transform_indices = @transform_0, window_bounds = array<i64: 1, 8, 32>}, {pipeline_mode = #tpu.pipeline_mode<synchronous>, transform_indices = @transform_1, window_bounds = array<i64: 2, 1, 32>}, {pipeline_mode = #tpu.pipeline_mode<synchronous>, transform_indices = @transform_2, window_bounds = array<i64: 2, 1, 32>}, {pipeline_mode = #tpu.pipeline_mode<synchronous>, transform_indices = @transform_3, window_bounds = array<i64: 2, 32, 96>}, {pipeline_mode = #tpu.pipeline_mode<synchronous>, transform_indices = @transform_4, window_bounds = array<i64: 2, 32, 32>}, {pipeline_mode = #tpu.pipeline_mode<synchronous>, transform_indices = @transform_5, window_bounds = array<i64: 2, 1, 32>}, {pipeline_mode = #tpu.pipeline_mode<synchronous>, transform_indices = @transform_6, window_bounds = array<i64: 2, 1, 32>}, {pipeline_mode = #tpu.pipeline_mode<synchronous>, transform_indices = @transform_7, window_bounds = array<i64: 2, 1, 32>}, {pipeline_mode = #tpu.pipeline_mode<synchronous>, transform_indices = @transform_8, window_bounds = array<i64: 2, 32, 64>}, {pipeline_mode = #tpu.pipeline_mode<synchronous>, transform_indices = @transform_9, window_bounds = array<i64: 2, 1, 64>}, {pipeline_mode = #tpu.pipeline_mode<synchronous>, transform_indices = @transform_10, window_bounds = array<i64: 2, 64, 32>}, {pipeline_mode = #tpu.pipeline_mode<synchronous>, transform_indices = @transform_11, window_bounds = array<i64: 2, 1, 32>}, {transform_indices = @transform_12, window_bounds = array<i64: 1, 8, 32>}]} {
    %c0 = arith.constant 0 : index
    %c0_0 = arith.constant 0 : index
    %c0_1 = arith.constant 0 : index
    %0 = vector.load %arg1[%c0, %c0_0, %c0_1] : memref<1x8x32xf32, #tpu.memory_space<vmem>>, vector<1x8x32xf32>
    %1 = vector.shape_cast %0 : vector<1x8x32xf32> to vector<8x32xf32>
    %c0_i32 = arith.constant 0 : i32
    %2 = arith.index_cast %c0_i32 : i32 to index
    %c0_2 = arith.constant 0 : index
    %c0_3 = arith.constant 0 : index
    %3 = vector.load %arg2[%2, %c0_2, %c0_3] : memref<2x1x32xf32, #tpu.memory_space<vmem>>, vector<1x1x32xf32>
    %4 = vector.shape_cast %3 : vector<1x1x32xf32> to vector<1x32xf32>
    %5 = arith.index_cast %c0_i32 : i32 to index
    %c0_4 = arith.constant 0 : index
    %c0_5 = arith.constant 0 : index
    %6 = vector.load %arg3[%5, %c0_4, %c0_5] : memref<2x1x32xf32, #tpu.memory_space<vmem>>, vector<1x1x32xf32>
    %7 = vector.shape_cast %6 : vector<1x1x32xf32> to vector<1x32xf32>
    %cst = arith.constant dense<0.000000e+00> : vector<8xf32>
    %8 = vector.multi_reduction <add>, %1, %cst [1] : vector<8x32xf32> to vector<8xf32>
    %9 = vector.shape_cast %8 : vector<8xf32> to vector<8x1xf32>
    %cst_6 = arith.constant 3.200000e+01 : f32
    %10 = vector.broadcast %cst_6 : f32 to vector<8x1xf32>
    %11 = arith.divf %9, %10 : vector<8x1xf32>
    %12 = vector.broadcast %11 : vector<8x1xf32> to vector<8x32xf32>
    %13 = arith.subf %1, %12 : vector<8x32xf32>
    %14 = arith.mulf %13, %13 : vector<8x32xf32>
    %cst_7 = arith.constant dense<0.000000e+00> : vector<8xf32>
    %15 = vector.multi_reduction <add>, %14, %cst_7 [1] : vector<8x32xf32> to vector<8xf32>
    %16 = vector.shape_cast %15 : vector<8xf32> to vector<8x1xf32>
    %cst_8 = arith.constant 3.200000e+01 : f32
    %17 = vector.broadcast %cst_8 : f32 to vector<8x1xf32>
    %18 = arith.divf %16, %17 : vector<8x1xf32>
    %19 = vector.broadcast %11 : vector<8x1xf32> to vector<8x32xf32>
    %20 = arith.subf %1, %19 : vector<8x32xf32>
    %cst_9 = arith.constant 9.99999974E-6 : f32
    %21 = vector.broadcast %cst_9 : f32 to vector<8x1xf32>
    %22 = arith.addf %18, %21 : vector<8x1xf32>
    %23 = math.rsqrt %22 : vector<8x1xf32>
    %24 = vector.broadcast %23 : vector<8x1xf32> to vector<8x32xf32>
    %25 = arith.mulf %20, %24 : vector<8x32xf32>
    %26 = vector.broadcast %4 : vector<1x32xf32> to vector<8x32xf32>
    %27 = arith.mulf %25, %26 : vector<8x32xf32>
    %28 = vector.broadcast %7 : vector<1x32xf32> to vector<8x32xf32>
    %29 = arith.addf %27, %28 : vector<8x32xf32>
    %30 = arith.truncf %29 : vector<8x32xf32> to vector<8x32xbf16>
    %31 = arith.index_cast %c0_i32 : i32 to index
    %c0_10 = arith.constant 0 : index
    %c0_11 = arith.constant 0 : index
    %32 = vector.load %arg4[%31, %c0_10, %c0_11] : memref<2x32x96xbf16, #tpu.memory_space<vmem>>, vector<1x32x96xbf16>
    %33 = vector.shape_cast %32 : vector<1x32x96xbf16> to vector<32x96xbf16>
    %cst_12 = arith.constant dense<0.000000e+00> : vector<8x96xf32>
    %34 = tpu.matmul %30, %33, %cst_12 {dimension_numbers = #tpu.dot_dimension_numbers<[1], [0], [0], [1], [0, 0, 1, 1], [], []>} : vector<8x32xbf16>, vector<32x96xbf16>, vector<8x96xf32> -> vector<8x96xf32>
    %35 = vector.extract_strided_slice %34 {offsets = [0, 0], sizes = [8, 8], strides = [1, 1]} : vector<8x96xf32> to vector<8x8xf32>
    %36 = vector.extract_strided_slice %34 {offsets = [0, 32], sizes = [8, 8], strides = [1, 1]} : vector<8x96xf32> to vector<8x8xf32>
    %37 = vector.extract_strided_slice %34 {offsets = [0, 64], sizes = [8, 8], strides = [1, 1]} : vector<8x96xf32> to vector<8x8xf32>
    %cst_13 = arith.constant dense<0.000000e+00> : vector<8x8xf32>
    %38 = tpu.matmul %35, %36, %cst_13 {dimension_numbers = #tpu.dot_dimension_numbers<[1], [1], [0], [0], [0, 0, 1, 0], [], []>} : vector<8x8xf32>, vector<8x8xf32>, vector<8x8xf32> -> vector<8x8xf32>
    %cst_14 = arith.constant 0.353553385 : f32
    %39 = vector.broadcast %cst_14 : f32 to vector<8x8xf32>
    %40 = arith.mulf %38, %39 : vector<8x8xf32>
    %cst_15 = arith.constant dense<0xFF800000> : vector<8xf32>
    %41 = vector.multi_reduction <maximumf>, %40, %cst_15 [1] : vector<8x8xf32> to vector<8xf32>
    %42 = vector.shape_cast %41 : vector<8xf32> to vector<8x1xf32>
    %43 = vector.broadcast %42 : vector<8x1xf32> to vector<8x8xf32>
    %44 = arith.subf %40, %43 : vector<8x8xf32>
    %45 = math.exp %44 : vector<8x8xf32>
    %cst_16 = arith.constant dense<0.000000e+00> : vector<8xf32>
    %46 = vector.multi_reduction <add>, %45, %cst_16 [1] : vector<8x8xf32> to vector<8xf32>
    %47 = vector.shape_cast %46 : vector<8xf32> to vector<8x1xf32>
    %48 = tpu.reciprocal %47 {approx = true} : vector<8x1xf32> -> vector<8x1xf32>
    %49 = vector.broadcast %48 : vector<8x1xf32> to vector<8x8xf32>
    %50 = arith.mulf %45, %49 : vector<8x8xf32>
    %cst_17 = arith.constant dense<0.000000e+00> : vector<8x8xf32>
    %51 = tpu.matmul %50, %37, %cst_17 {dimension_numbers = #tpu.dot_dimension_numbers<[1], [0], [0], [1], [0, 0, 1, 1], [], []>} : vector<8x8xf32>, vector<8x8xf32>, vector<8x8xf32> -> vector<8x8xf32>
    %52 = vector.extract_strided_slice %34 {offsets = [0, 8], sizes = [8, 8], strides = [1, 1]} : vector<8x96xf32> to vector<8x8xf32>
    %53 = vector.extract_strided_slice %34 {offsets = [0, 40], sizes = [8, 8], strides = [1, 1]} : vector<8x96xf32> to vector<8x8xf32>
    %54 = vector.extract_strided_slice %34 {offsets = [0, 72], sizes = [8, 8], strides = [1, 1]} : vector<8x96xf32> to vector<8x8xf32>
    %cst_18 = arith.constant dense<0.000000e+00> : vector<8x8xf32>
    %55 = tpu.matmul %52, %53, %cst_18 {dimension_numbers = #tpu.dot_dimension_numbers<[1], [1], [0], [0], [0, 0, 1, 0], [], []>} : vector<8x8xf32>, vector<8x8xf32>, vector<8x8xf32> -> vector<8x8xf32>
    %cst_19 = arith.constant 0.353553385 : f32
    %56 = vector.broadcast %cst_19 : f32 to vector<8x8xf32>
    %57 = arith.mulf %55, %56 : vector<8x8xf32>
    %cst_20 = arith.constant dense<0xFF800000> : vector<8xf32>
    %58 = vector.multi_reduction <maximumf>, %57, %cst_20 [1] : vector<8x8xf32> to vector<8xf32>
    %59 = vector.shape_cast %58 : vector<8xf32> to vector<8x1xf32>
    %60 = vector.broadcast %59 : vector<8x1xf32> to vector<8x8xf32>
    %61 = arith.subf %57, %60 : vector<8x8xf32>
    %62 = math.exp %61 : vector<8x8xf32>
    %cst_21 = arith.constant dense<0.000000e+00> : vector<8xf32>
    %63 = vector.multi_reduction <add>, %62, %cst_21 [1] : vector<8x8xf32> to vector<8xf32>
    %64 = vector.shape_cast %63 : vector<8xf32> to vector<8x1xf32>
    %65 = tpu.reciprocal %64 {approx = true} : vector<8x1xf32> -> vector<8x1xf32>
    %66 = vector.broadcast %65 : vector<8x1xf32> to vector<8x8xf32>
    %67 = arith.mulf %62, %66 : vector<8x8xf32>
    %cst_22 = arith.constant dense<0.000000e+00> : vector<8x8xf32>
    %68 = tpu.matmul %67, %54, %cst_22 {dimension_numbers = #tpu.dot_dimension_numbers<[1], [0], [0], [1], [0, 0, 1, 1], [], []>} : vector<8x8xf32>, vector<8x8xf32>, vector<8x8xf32> -> vector<8x8xf32>
    %69 = vector.extract_strided_slice %34 {offsets = [0, 16], sizes = [8, 8], strides = [1, 1]} : vector<8x96xf32> to vector<8x8xf32>
    %70 = vector.extract_strided_slice %34 {offsets = [0, 48], sizes = [8, 8], strides = [1, 1]} : vector<8x96xf32> to vector<8x8xf32>
    %71 = vector.extract_strided_slice %34 {offsets = [0, 80], sizes = [8, 8], strides = [1, 1]} : vector<8x96xf32> to vector<8x8xf32>
    %cst_23 = arith.constant dense<0.000000e+00> : vector<8x8xf32>
    %72 = tpu.matmul %69, %70, %cst_23 {dimension_numbers = #tpu.dot_dimension_numbers<[1], [1], [0], [0], [0, 0, 1, 0], [], []>} : vector<8x8xf32>, vector<8x8xf32>, vector<8x8xf32> -> vector<8x8xf32>
    %cst_24 = arith.constant 0.353553385 : f32
    %73 = vector.broadcast %cst_24 : f32 to vector<8x8xf32>
    %74 = arith.mulf %72, %73 : vector<8x8xf32>
    %cst_25 = arith.constant dense<0xFF800000> : vector<8xf32>
    %75 = vector.multi_reduction <maximumf>, %74, %cst_25 [1] : vector<8x8xf32> to vector<8xf32>
    %76 = vector.shape_cast %75 : vector<8xf32> to vector<8x1xf32>
    %77 = vector.broadcast %76 : vector<8x1xf32> to vector<8x8xf32>
    %78 = arith.subf %74, %77 : vector<8x8xf32>
    %79 = math.exp %78 : vector<8x8xf32>
    %cst_26 = arith.constant dense<0.000000e+00> : vector<8xf32>
    %80 = vector.multi_reduction <add>, %79, %cst_26 [1] : vector<8x8xf32> to vector<8xf32>
    %81 = vector.shape_cast %80 : vector<8xf32> to vector<8x1xf32>
    %82 = tpu.reciprocal %81 {approx = true} : vector<8x1xf32> -> vector<8x1xf32>
    %83 = vector.broadcast %82 : vector<8x1xf32> to vector<8x8xf32>
    %84 = arith.mulf %79, %83 : vector<8x8xf32>
    %cst_27 = arith.constant dense<0.000000e+00> : vector<8x8xf32>
    %85 = tpu.matmul %84, %71, %cst_27 {dimension_numbers = #tpu.dot_dimension_numbers<[1], [0], [0], [1], [0, 0, 1, 1], [], []>} : vector<8x8xf32>, vector<8x8xf32>, vector<8x8xf32> -> vector<8x8xf32>
    %86 = vector.extract_strided_slice %34 {offsets = [0, 24], sizes = [8, 8], strides = [1, 1]} : vector<8x96xf32> to vector<8x8xf32>
    %87 = vector.extract_strided_slice %34 {offsets = [0, 56], sizes = [8, 8], strides = [1, 1]} : vector<8x96xf32> to vector<8x8xf32>
    %88 = vector.extract_strided_slice %34 {offsets = [0, 88], sizes = [8, 8], strides = [1, 1]} : vector<8x96xf32> to vector<8x8xf32>
    %cst_28 = arith.constant dense<0.000000e+00> : vector<8x8xf32>
    %89 = tpu.matmul %86, %87, %cst_28 {dimension_numbers = #tpu.dot_dimension_numbers<[1], [1], [0], [0], [0, 0, 1, 0], [], []>} : vector<8x8xf32>, vector<8x8xf32>, vector<8x8xf32> -> vector<8x8xf32>
    %cst_29 = arith.constant 0.353553385 : f32
    %90 = vector.broadcast %cst_29 : f32 to vector<8x8xf32>
    %91 = arith.mulf %89, %90 : vector<8x8xf32>
    %cst_30 = arith.constant dense<0xFF800000> : vector<8xf32>
    %92 = vector.multi_reduction <maximumf>, %91, %cst_30 [1] : vector<8x8xf32> to vector<8xf32>
    %93 = vector.shape_cast %92 : vector<8xf32> to vector<8x1xf32>
    %94 = vector.broadcast %93 : vector<8x1xf32> to vector<8x8xf32>
    %95 = arith.subf %91, %94 : vector<8x8xf32>
    %96 = math.exp %95 : vector<8x8xf32>
    %cst_31 = arith.constant dense<0.000000e+00> : vector<8xf32>
    %97 = vector.multi_reduction <add>, %96, %cst_31 [1] : vector<8x8xf32> to vector<8xf32>
    %98 = vector.shape_cast %97 : vector<8xf32> to vector<8x1xf32>
    %99 = tpu.reciprocal %98 {approx = true} : vector<8x1xf32> -> vector<8x1xf32>
    %100 = vector.broadcast %99 : vector<8x1xf32> to vector<8x8xf32>
    %101 = arith.mulf %96, %100 : vector<8x8xf32>
    %cst_32 = arith.constant dense<0.000000e+00> : vector<8x8xf32>
    %102 = tpu.matmul %101, %88, %cst_32 {dimension_numbers = #tpu.dot_dimension_numbers<[1], [0], [0], [1], [0, 0, 1, 1], [], []>} : vector<8x8xf32>, vector<8x8xf32>, vector<8x8xf32> -> vector<8x8xf32>
    %103 = tpu.concatenate %51, %68, %85, %102 in 1 : vector<8x8xf32>, vector<8x8xf32>, vector<8x8xf32>, vector<8x8xf32> -> vector<8x32xf32>
    %104 = arith.truncf %103 : vector<8x32xf32> to vector<8x32xbf16>
    %105 = arith.index_cast %c0_i32 : i32 to index
    %c0_33 = arith.constant 0 : index
    %c0_34 = arith.constant 0 : index
    %106 = vector.load %arg5[%105, %c0_33, %c0_34] : memref<2x32x32xbf16, #tpu.memory_space<vmem>>, vector<1x32x32xbf16>
    %107 = vector.shape_cast %106 : vector<1x32x32xbf16> to vector<32x32xbf16>
    %cst_35 = arith.constant dense<0.000000e+00> : vector<8x32xf32>
    %108 = tpu.matmul %104, %107, %cst_35 {dimension_numbers = #tpu.dot_dimension_numbers<[1], [0], [0], [1], [0, 0, 1, 1], [], []>} : vector<8x32xbf16>, vector<32x32xbf16>, vector<8x32xf32> -> vector<8x32xf32>
    %109 = arith.index_cast %c0_i32 : i32 to index
    %c0_36 = arith.constant 0 : index
    %c0_37 = arith.constant 0 : index
    %110 = vector.load %arg6[%109, %c0_36, %c0_37] : memref<2x1x32xf32, #tpu.memory_space<vmem>>, vector<1x1x32xf32>
    %111 = vector.shape_cast %110 : vector<1x1x32xf32> to vector<1x32xf32>
    %112 = vector.broadcast %111 : vector<1x32xf32> to vector<8x32xf32>
    %113 = arith.addf %108, %112 : vector<8x32xf32>
    %114 = arith.addf %1, %113 : vector<8x32xf32>
    %115 = arith.index_cast %c0_i32 : i32 to index
    %c0_38 = arith.constant 0 : index
    %c0_39 = arith.constant 0 : index
    %116 = vector.load %arg7[%115, %c0_38, %c0_39] : memref<2x1x32xf32, #tpu.memory_space<vmem>>, vector<1x1x32xf32>
    %117 = vector.shape_cast %116 : vector<1x1x32xf32> to vector<1x32xf32>
    %118 = arith.index_cast %c0_i32 : i32 to index
    %c0_40 = arith.constant 0 : index
    %c0_41 = arith.constant 0 : index
    %119 = vector.load %arg8[%118, %c0_40, %c0_41] : memref<2x1x32xf32, #tpu.memory_space<vmem>>, vector<1x1x32xf32>
    %120 = vector.shape_cast %119 : vector<1x1x32xf32> to vector<1x32xf32>
    %cst_42 = arith.constant dense<0.000000e+00> : vector<8xf32>
    %121 = vector.multi_reduction <add>, %114, %cst_42 [1] : vector<8x32xf32> to vector<8xf32>
    %122 = vector.shape_cast %121 : vector<8xf32> to vector<8x1xf32>
    %cst_43 = arith.constant 3.200000e+01 : f32
    %123 = vector.broadcast %cst_43 : f32 to vector<8x1xf32>
    %124 = arith.divf %122, %123 : vector<8x1xf32>
    %125 = vector.broadcast %124 : vector<8x1xf32> to vector<8x32xf32>
    %126 = arith.subf %114, %125 : vector<8x32xf32>
    %127 = arith.mulf %126, %126 : vector<8x32xf32>
    %cst_44 = arith.constant dense<0.000000e+00> : vector<8xf32>
    %128 = vector.multi_reduction <add>, %127, %cst_44 [1] : vector<8x32xf32> to vector<8xf32>
    %129 = vector.shape_cast %128 : vector<8xf32> to vector<8x1xf32>
    %cst_45 = arith.constant 3.200000e+01 : f32
    %130 = vector.broadcast %cst_45 : f32 to vector<8x1xf32>
    %131 = arith.divf %129, %130 : vector<8x1xf32>
    %132 = vector.broadcast %124 : vector<8x1xf32> to vector<8x32xf32>
    %133 = arith.subf %114, %132 : vector<8x32xf32>
    %cst_46 = arith.constant 9.99999974E-6 : f32
    %134 = vector.broadcast %cst_46 : f32 to vector<8x1xf32>
    %135 = arith.addf %131, %134 : vector<8x1xf32>
    %136 = math.rsqrt %135 : vector<8x1xf32>
    %137 = vector.broadcast %136 : vector<8x1xf32> to vector<8x32xf32>
    %138 = arith.mulf %133, %137 : vector<8x32xf32>
    %139 = vector.broadcast %117 : vector<1x32xf32> to vector<8x32xf32>
    %140 = arith.mulf %138, %139 : vector<8x32xf32>
    %141 = vector.broadcast %120 : vector<1x32xf32> to vector<8x32xf32>
    %142 = arith.addf %140, %141 : vector<8x32xf32>
    %143 = arith.truncf %142 : vector<8x32xf32> to vector<8x32xbf16>
    %144 = arith.index_cast %c0_i32 : i32 to index
    %c0_47 = arith.constant 0 : index
    %c0_48 = arith.constant 0 : index
    %145 = vector.load %arg9[%144, %c0_47, %c0_48] : memref<2x32x64xbf16, #tpu.memory_space<vmem>>, vector<1x32x64xbf16>
    %146 = vector.shape_cast %145 : vector<1x32x64xbf16> to vector<32x64xbf16>
    %cst_49 = arith.constant dense<0.000000e+00> : vector<8x64xf32>
    %147 = tpu.matmul %143, %146, %cst_49 {dimension_numbers = #tpu.dot_dimension_numbers<[1], [0], [0], [1], [0, 0, 1, 1], [], []>} : vector<8x32xbf16>, vector<32x64xbf16>, vector<8x64xf32> -> vector<8x64xf32>
    %148 = arith.index_cast %c0_i32 : i32 to index
    %c0_50 = arith.constant 0 : index
    %c0_51 = arith.constant 0 : index
    %149 = vector.load %arg10[%148, %c0_50, %c0_51] : memref<2x1x64xf32, #tpu.memory_space<vmem>>, vector<1x1x64xf32>
    %150 = vector.shape_cast %149 : vector<1x1x64xf32> to vector<1x64xf32>
    %151 = vector.broadcast %150 : vector<1x64xf32> to vector<8x64xf32>
    %152 = arith.addf %147, %151 : vector<8x64xf32>
    %cst_52 = arith.constant 0.000000e+00 : f32
    %153 = vector.broadcast %cst_52 : f32 to vector<8x64xf32>
    %154 = arith.maximumf %152, %153 : vector<8x64xf32>
    %155 = arith.truncf %154 : vector<8x64xf32> to vector<8x64xbf16>
    %156 = arith.index_cast %c0_i32 : i32 to index
    %c0_53 = arith.constant 0 : index
    %c0_54 = arith.constant 0 : index
    %157 = vector.load %arg11[%156, %c0_53, %c0_54] : memref<2x64x32xbf16, #tpu.memory_space<vmem>>, vector<1x64x32xbf16>
    %158 = vector.shape_cast %157 : vector<1x64x32xbf16> to vector<64x32xbf16>
    %cst_55 = arith.constant dense<0.000000e+00> : vector<8x32xf32>
    %159 = tpu.matmul %155, %158, %cst_55 {dimension_numbers = #tpu.dot_dimension_numbers<[1], [0], [0], [1], [0, 0, 1, 1], [], []>} : vector<8x64xbf16>, vector<64x32xbf16>, vector<8x32xf32> -> vector<8x32xf32>
    %160 = arith.addf %114, %159 : vector<8x32xf32>
    %161 = arith.index_cast %c0_i32 : i32 to index
    %c0_56 = arith.constant 0 : index
    %c0_57 = arith.constant 0 : index
    %162 = vector.load %arg12[%161, %c0_56, %c0_57] : memref<2x1x32xf32, #tpu.memory_space<vmem>>, vector<1x1x32xf32>
    %163 = vector.shape_cast %162 : vector<1x1x32xf32> to vector<1x32xf32>
    %164 = vector.broadcast %163 : vector<1x32xf32> to vector<8x32xf32>
    %165 = arith.addf %160, %164 : vector<8x32xf32>
    %c1_i32 = arith.constant 1 : i32
    %166 = arith.index_cast %c1_i32 : i32 to index
    %c0_58 = arith.constant 0 : index
    %c0_59 = arith.constant 0 : index
    %167 = vector.load %arg2[%166, %c0_58, %c0_59] : memref<2x1x32xf32, #tpu.memory_space<vmem>>, vector<1x1x32xf32>
    %168 = vector.shape_cast %167 : vector<1x1x32xf32> to vector<1x32xf32>
    %169 = arith.index_cast %c1_i32 : i32 to index
    %c0_60 = arith.constant 0 : index
    %c0_61 = arith.constant 0 : index
    %170 = vector.load %arg3[%169, %c0_60, %c0_61] : memref<2x1x32xf32, #tpu.memory_space<vmem>>, vector<1x1x32xf32>
    %171 = vector.shape_cast %170 : vector<1x1x32xf32> to vector<1x32xf32>
    %cst_62 = arith.constant dense<0.000000e+00> : vector<8xf32>
    %172 = vector.multi_reduction <add>, %165, %cst_62 [1] : vector<8x32xf32> to vector<8xf32>
    %173 = vector.shape_cast %172 : vector<8xf32> to vector<8x1xf32>
    %cst_63 = arith.constant 3.200000e+01 : f32
    %174 = vector.broadcast %cst_63 : f32 to vector<8x1xf32>
    %175 = arith.divf %173, %174 : vector<8x1xf32>
    %176 = vector.broadcast %175 : vector<8x1xf32> to vector<8x32xf32>
    %177 = arith.subf %165, %176 : vector<8x32xf32>
    %178 = arith.mulf %177, %177 : vector<8x32xf32>
    %cst_64 = arith.constant dense<0.000000e+00> : vector<8xf32>
    %179 = vector.multi_reduction <add>, %178, %cst_64 [1] : vector<8x32xf32> to vector<8xf32>
    %180 = vector.shape_cast %179 : vector<8xf32> to vector<8x1xf32>
    %cst_65 = arith.constant 3.200000e+01 : f32
    %181 = vector.broadcast %cst_65 : f32 to vector<8x1xf32>
    %182 = arith.divf %180, %181 : vector<8x1xf32>
    %183 = vector.broadcast %175 : vector<8x1xf32> to vector<8x32xf32>
    %184 = arith.subf %165, %183 : vector<8x32xf32>
    %cst_66 = arith.constant 9.99999974E-6 : f32
    %185 = vector.broadcast %cst_66 : f32 to vector<8x1xf32>
    %186 = arith.addf %182, %185 : vector<8x1xf32>
    %187 = math.rsqrt %186 : vector<8x1xf32>
    %188 = vector.broadcast %187 : vector<8x1xf32> to vector<8x32xf32>
    %189 = arith.mulf %184, %188 : vector<8x32xf32>
    %190 = vector.broadcast %168 : vector<1x32xf32> to vector<8x32xf32>
    %191 = arith.mulf %189, %190 : vector<8x32xf32>
    %192 = vector.broadcast %171 : vector<1x32xf32> to vector<8x32xf32>
    %193 = arith.addf %191, %192 : vector<8x32xf32>
    %194 = arith.truncf %193 : vector<8x32xf32> to vector<8x32xbf16>
    %195 = arith.index_cast %c1_i32 : i32 to index
    %c0_67 = arith.constant 0 : index
    %c0_68 = arith.constant 0 : index
    %196 = vector.load %arg4[%195, %c0_67, %c0_68] : memref<2x32x96xbf16, #tpu.memory_space<vmem>>, vector<1x32x96xbf16>
    %197 = vector.shape_cast %196 : vector<1x32x96xbf16> to vector<32x96xbf16>
    %cst_69 = arith.constant dense<0.000000e+00> : vector<8x96xf32>
    %198 = tpu.matmul %194, %197, %cst_69 {dimension_numbers = #tpu.dot_dimension_numbers<[1], [0], [0], [1], [0, 0, 1, 1], [], []>} : vector<8x32xbf16>, vector<32x96xbf16>, vector<8x96xf32> -> vector<8x96xf32>
    %199 = vector.extract_strided_slice %198 {offsets = [0, 0], sizes = [8, 8], strides = [1, 1]} : vector<8x96xf32> to vector<8x8xf32>
    %200 = vector.extract_strided_slice %198 {offsets = [0, 32], sizes = [8, 8], strides = [1, 1]} : vector<8x96xf32> to vector<8x8xf32>
    %201 = vector.extract_strided_slice %198 {offsets = [0, 64], sizes = [8, 8], strides = [1, 1]} : vector<8x96xf32> to vector<8x8xf32>
    %cst_70 = arith.constant dense<0.000000e+00> : vector<8x8xf32>
    %202 = tpu.matmul %199, %200, %cst_70 {dimension_numbers = #tpu.dot_dimension_numbers<[1], [1], [0], [0], [0, 0, 1, 0], [], []>} : vector<8x8xf32>, vector<8x8xf32>, vector<8x8xf32> -> vector<8x8xf32>
    %cst_71 = arith.constant 0.353553385 : f32
    %203 = vector.broadcast %cst_71 : f32 to vector<8x8xf32>
    %204 = arith.mulf %202, %203 : vector<8x8xf32>
    %cst_72 = arith.constant dense<0xFF800000> : vector<8xf32>
    %205 = vector.multi_reduction <maximumf>, %204, %cst_72 [1] : vector<8x8xf32> to vector<8xf32>
    %206 = vector.shape_cast %205 : vector<8xf32> to vector<8x1xf32>
    %207 = vector.broadcast %206 : vector<8x1xf32> to vector<8x8xf32>
    %208 = arith.subf %204, %207 : vector<8x8xf32>
    %209 = math.exp %208 : vector<8x8xf32>
    %cst_73 = arith.constant dense<0.000000e+00> : vector<8xf32>
    %210 = vector.multi_reduction <add>, %209, %cst_73 [1] : vector<8x8xf32> to vector<8xf32>
    %211 = vector.shape_cast %210 : vector<8xf32> to vector<8x1xf32>
    %212 = tpu.reciprocal %211 {approx = true} : vector<8x1xf32> -> vector<8x1xf32>
    %213 = vector.broadcast %212 : vector<8x1xf32> to vector<8x8xf32>
    %214 = arith.mulf %209, %213 : vector<8x8xf32>
    %cst_74 = arith.constant dense<0.000000e+00> : vector<8x8xf32>
    %215 = tpu.matmul %214, %201, %cst_74 {dimension_numbers = #tpu.dot_dimension_numbers<[1], [0], [0], [1], [0, 0, 1, 1], [], []>} : vector<8x8xf32>, vector<8x8xf32>, vector<8x8xf32> -> vector<8x8xf32>
    %216 = vector.extract_strided_slice %198 {offsets = [0, 8], sizes = [8, 8], strides = [1, 1]} : vector<8x96xf32> to vector<8x8xf32>
    %217 = vector.extract_strided_slice %198 {offsets = [0, 40], sizes = [8, 8], strides = [1, 1]} : vector<8x96xf32> to vector<8x8xf32>
    %218 = vector.extract_strided_slice %198 {offsets = [0, 72], sizes = [8, 8], strides = [1, 1]} : vector<8x96xf32> to vector<8x8xf32>
    %cst_75 = arith.constant dense<0.000000e+00> : vector<8x8xf32>
    %219 = tpu.matmul %216, %217, %cst_75 {dimension_numbers = #tpu.dot_dimension_numbers<[1], [1], [0], [0], [0, 0, 1, 0], [], []>} : vector<8x8xf32>, vector<8x8xf32>, vector<8x8xf32> -> vector<8x8xf32>
    %cst_76 = arith.constant 0.353553385 : f32
    %220 = vector.broadcast %cst_76 : f32 to vector<8x8xf32>
    %221 = arith.mulf %219, %220 : vector<8x8xf32>
    %cst_77 = arith.constant dense<0xFF800000> : vector<8xf32>
    %222 = vector.multi_reduction <maximumf>, %221, %cst_77 [1] : vector<8x8xf32> to vector<8xf32>
    %223 = vector.shape_cast %222 : vector<8xf32> to vector<8x1xf32>
    %224 = vector.broadcast %223 : vector<8x1xf32> to vector<8x8xf32>
    %225 = arith.subf %221, %224 : vector<8x8xf32>
    %226 = math.exp %225 : vector<8x8xf32>
    %cst_78 = arith.constant dense<0.000000e+00> : vector<8xf32>
    %227 = vector.multi_reduction <add>, %226, %cst_78 [1] : vector<8x8xf32> to vector<8xf32>
    %228 = vector.shape_cast %227 : vector<8xf32> to vector<8x1xf32>
    %229 = tpu.reciprocal %228 {approx = true} : vector<8x1xf32> -> vector<8x1xf32>
    %230 = vector.broadcast %229 : vector<8x1xf32> to vector<8x8xf32>
    %231 = arith.mulf %226, %230 : vector<8x8xf32>
    %cst_79 = arith.constant dense<0.000000e+00> : vector<8x8xf32>
    %232 = tpu.matmul %231, %218, %cst_79 {dimension_numbers = #tpu.dot_dimension_numbers<[1], [0], [0], [1], [0, 0, 1, 1], [], []>} : vector<8x8xf32>, vector<8x8xf32>, vector<8x8xf32> -> vector<8x8xf32>
    %233 = vector.extract_strided_slice %198 {offsets = [0, 16], sizes = [8, 8], strides = [1, 1]} : vector<8x96xf32> to vector<8x8xf32>
    %234 = vector.extract_strided_slice %198 {offsets = [0, 48], sizes = [8, 8], strides = [1, 1]} : vector<8x96xf32> to vector<8x8xf32>
    %235 = vector.extract_strided_slice %198 {offsets = [0, 80], sizes = [8, 8], strides = [1, 1]} : vector<8x96xf32> to vector<8x8xf32>
    %cst_80 = arith.constant dense<0.000000e+00> : vector<8x8xf32>
    %236 = tpu.matmul %233, %234, %cst_80 {dimension_numbers = #tpu.dot_dimension_numbers<[1], [1], [0], [0], [0, 0, 1, 0], [], []>} : vector<8x8xf32>, vector<8x8xf32>, vector<8x8xf32> -> vector<8x8xf32>
    %cst_81 = arith.constant 0.353553385 : f32
    %237 = vector.broadcast %cst_81 : f32 to vector<8x8xf32>
    %238 = arith.mulf %236, %237 : vector<8x8xf32>
    %cst_82 = arith.constant dense<0xFF800000> : vector<8xf32>
    %239 = vector.multi_reduction <maximumf>, %238, %cst_82 [1] : vector<8x8xf32> to vector<8xf32>
    %240 = vector.shape_cast %239 : vector<8xf32> to vector<8x1xf32>
    %241 = vector.broadcast %240 : vector<8x1xf32> to vector<8x8xf32>
    %242 = arith.subf %238, %241 : vector<8x8xf32>
    %243 = math.exp %242 : vector<8x8xf32>
    %cst_83 = arith.constant dense<0.000000e+00> : vector<8xf32>
    %244 = vector.multi_reduction <add>, %243, %cst_83 [1] : vector<8x8xf32> to vector<8xf32>
    %245 = vector.shape_cast %244 : vector<8xf32> to vector<8x1xf32>
    %246 = tpu.reciprocal %245 {approx = true} : vector<8x1xf32> -> vector<8x1xf32>
    %247 = vector.broadcast %246 : vector<8x1xf32> to vector<8x8xf32>
    %248 = arith.mulf %243, %247 : vector<8x8xf32>
    %cst_84 = arith.constant dense<0.000000e+00> : vector<8x8xf32>
    %249 = tpu.matmul %248, %235, %cst_84 {dimension_numbers = #tpu.dot_dimension_numbers<[1], [0], [0], [1], [0, 0, 1, 1], [], []>} : vector<8x8xf32>, vector<8x8xf32>, vector<8x8xf32> -> vector<8x8xf32>
    %250 = vector.extract_strided_slice %198 {offsets = [0, 24], sizes = [8, 8], strides = [1, 1]} : vector<8x96xf32> to vector<8x8xf32>
    %251 = vector.extract_strided_slice %198 {offsets = [0, 56], sizes = [8, 8], strides = [1, 1]} : vector<8x96xf32> to vector<8x8xf32>
    %252 = vector.extract_strided_slice %198 {offsets = [0, 88], sizes = [8, 8], strides = [1, 1]} : vector<8x96xf32> to vector<8x8xf32>
    %cst_85 = arith.constant dense<0.000000e+00> : vector<8x8xf32>
    %253 = tpu.matmul %250, %251, %cst_85 {dimension_numbers = #tpu.dot_dimension_numbers<[1], [1], [0], [0], [0, 0, 1, 0], [], []>} : vector<8x8xf32>, vector<8x8xf32>, vector<8x8xf32> -> vector<8x8xf32>
    %cst_86 = arith.constant 0.353553385 : f32
    %254 = vector.broadcast %cst_86 : f32 to vector<8x8xf32>
    %255 = arith.mulf %253, %254 : vector<8x8xf32>
    %cst_87 = arith.constant dense<0xFF800000> : vector<8xf32>
    %256 = vector.multi_reduction <maximumf>, %255, %cst_87 [1] : vector<8x8xf32> to vector<8xf32>
    %257 = vector.shape_cast %256 : vector<8xf32> to vector<8x1xf32>
    %258 = vector.broadcast %257 : vector<8x1xf32> to vector<8x8xf32>
    %259 = arith.subf %255, %258 : vector<8x8xf32>
    %260 = math.exp %259 : vector<8x8xf32>
    %cst_88 = arith.constant dense<0.000000e+00> : vector<8xf32>
    %261 = vector.multi_reduction <add>, %260, %cst_88 [1] : vector<8x8xf32> to vector<8xf32>
    %262 = vector.shape_cast %261 : vector<8xf32> to vector<8x1xf32>
    %263 = tpu.reciprocal %262 {approx = true} : vector<8x1xf32> -> vector<8x1xf32>
    %264 = vector.broadcast %263 : vector<8x1xf32> to vector<8x8xf32>
    %265 = arith.mulf %260, %264 : vector<8x8xf32>
    %cst_89 = arith.constant dense<0.000000e+00> : vector<8x8xf32>
    %266 = tpu.matmul %265, %252, %cst_89 {dimension_numbers = #tpu.dot_dimension_numbers<[1], [0], [0], [1], [0, 0, 1, 1], [], []>} : vector<8x8xf32>, vector<8x8xf32>, vector<8x8xf32> -> vector<8x8xf32>
    %267 = tpu.concatenate %215, %232, %249, %266 in 1 : vector<8x8xf32>, vector<8x8xf32>, vector<8x8xf32>, vector<8x8xf32> -> vector<8x32xf32>
    %268 = arith.truncf %267 : vector<8x32xf32> to vector<8x32xbf16>
    %269 = arith.index_cast %c1_i32 : i32 to index
    %c0_90 = arith.constant 0 : index
    %c0_91 = arith.constant 0 : index
    %270 = vector.load %arg5[%269, %c0_90, %c0_91] : memref<2x32x32xbf16, #tpu.memory_space<vmem>>, vector<1x32x32xbf16>
    %271 = vector.shape_cast %270 : vector<1x32x32xbf16> to vector<32x32xbf16>
    %cst_92 = arith.constant dense<0.000000e+00> : vector<8x32xf32>
    %272 = tpu.matmul %268, %271, %cst_92 {dimension_numbers = #tpu.dot_dimension_numbers<[1], [0], [0], [1], [0, 0, 1, 1], [], []>} : vector<8x32xbf16>, vector<32x32xbf16>, vector<8x32xf32> -> vector<8x32xf32>
    %273 = arith.index_cast %c1_i32 : i32 to index
    %c0_93 = arith.constant 0 : index
    %c0_94 = arith.constant 0 : index
    %274 = vector.load %arg6[%273, %c0_93, %c0_94] : memref<2x1x32xf32, #tpu.memory_space<vmem>>, vector<1x1x32xf32>
    %275 = vector.shape_cast %274 : vector<1x1x32xf32> to vector<1x32xf32>
    %276 = vector.broadcast %275 : vector<1x32xf32> to vector<8x32xf32>
    %277 = arith.addf %272, %276 : vector<8x32xf32>
    %278 = arith.addf %165, %277 : vector<8x32xf32>
    %279 = arith.index_cast %c1_i32 : i32 to index
    %c0_95 = arith.constant 0 : index
    %c0_96 = arith.constant 0 : index
    %280 = vector.load %arg7[%279, %c0_95, %c0_96] : memref<2x1x32xf32, #tpu.memory_space<vmem>>, vector<1x1x32xf32>
    %281 = vector.shape_cast %280 : vector<1x1x32xf32> to vector<1x32xf32>
    %282 = arith.index_cast %c1_i32 : i32 to index
    %c0_97 = arith.constant 0 : index
    %c0_98 = arith.constant 0 : index
    %283 = vector.load %arg8[%282, %c0_97, %c0_98] : memref<2x1x32xf32, #tpu.memory_space<vmem>>, vector<1x1x32xf32>
    %284 = vector.shape_cast %283 : vector<1x1x32xf32> to vector<1x32xf32>
    %cst_99 = arith.constant dense<0.000000e+00> : vector<8xf32>
    %285 = vector.multi_reduction <add>, %278, %cst_99 [1] : vector<8x32xf32> to vector<8xf32>
    %286 = vector.shape_cast %285 : vector<8xf32> to vector<8x1xf32>
    %cst_100 = arith.constant 3.200000e+01 : f32
    %287 = vector.broadcast %cst_100 : f32 to vector<8x1xf32>
    %288 = arith.divf %286, %287 : vector<8x1xf32>
    %289 = vector.broadcast %288 : vector<8x1xf32> to vector<8x32xf32>
    %290 = arith.subf %278, %289 : vector<8x32xf32>
    %291 = arith.mulf %290, %290 : vector<8x32xf32>
    %cst_101 = arith.constant dense<0.000000e+00> : vector<8xf32>
    %292 = vector.multi_reduction <add>, %291, %cst_101 [1] : vector<8x32xf32> to vector<8xf32>
    %293 = vector.shape_cast %292 : vector<8xf32> to vector<8x1xf32>
    %cst_102 = arith.constant 3.200000e+01 : f32
    %294 = vector.broadcast %cst_102 : f32 to vector<8x1xf32>
    %295 = arith.divf %293, %294 : vector<8x1xf32>
    %296 = vector.broadcast %288 : vector<8x1xf32> to vector<8x32xf32>
    %297 = arith.subf %278, %296 : vector<8x32xf32>
    %cst_103 = arith.constant 9.99999974E-6 : f32
    %298 = vector.broadcast %cst_103 : f32 to vector<8x1xf32>
    %299 = arith.addf %295, %298 : vector<8x1xf32>
    %300 = math.rsqrt %299 : vector<8x1xf32>
    %301 = vector.broadcast %300 : vector<8x1xf32> to vector<8x32xf32>
    %302 = arith.mulf %297, %301 : vector<8x32xf32>
    %303 = vector.broadcast %281 : vector<1x32xf32> to vector<8x32xf32>
    %304 = arith.mulf %302, %303 : vector<8x32xf32>
    %305 = vector.broadcast %284 : vector<1x32xf32> to vector<8x32xf32>
    %306 = arith.addf %304, %305 : vector<8x32xf32>
    %307 = arith.truncf %306 : vector<8x32xf32> to vector<8x32xbf16>
    %308 = arith.index_cast %c1_i32 : i32 to index
    %c0_104 = arith.constant 0 : index
    %c0_105 = arith.constant 0 : index
    %309 = vector.load %arg9[%308, %c0_104, %c0_105] : memref<2x32x64xbf16, #tpu.memory_space<vmem>>, vector<1x32x64xbf16>
    %310 = vector.shape_cast %309 : vector<1x32x64xbf16> to vector<32x64xbf16>
    %cst_106 = arith.constant dense<0.000000e+00> : vector<8x64xf32>
    %311 = tpu.matmul %307, %310, %cst_106 {dimension_numbers = #tpu.dot_dimension_numbers<[1], [0], [0], [1], [0, 0, 1, 1], [], []>} : vector<8x32xbf16>, vector<32x64xbf16>, vector<8x64xf32> -> vector<8x64xf32>
    %312 = arith.index_cast %c1_i32 : i32 to index
    %c0_107 = arith.constant 0 : index
    %c0_108 = arith.constant 0 : index
    %313 = vector.load %arg10[%312, %c0_107, %c0_108] : memref<2x1x64xf32, #tpu.memory_space<vmem>>, vector<1x1x64xf32>
    %314 = vector.shape_cast %313 : vector<1x1x64xf32> to vector<1x64xf32>
    %315 = vector.broadcast %314 : vector<1x64xf32> to vector<8x64xf32>
    %316 = arith.addf %311, %315 : vector<8x64xf32>
    %cst_109 = arith.constant 0.000000e+00 : f32
    %317 = vector.broadcast %cst_109 : f32 to vector<8x64xf32>
    %318 = arith.maximumf %316, %317 : vector<8x64xf32>
    %319 = arith.truncf %318 : vector<8x64xf32> to vector<8x64xbf16>
    %320 = arith.index_cast %c1_i32 : i32 to index
    %c0_110 = arith.constant 0 : index
    %c0_111 = arith.constant 0 : index
    %321 = vector.load %arg11[%320, %c0_110, %c0_111] : memref<2x64x32xbf16, #tpu.memory_space<vmem>>, vector<1x64x32xbf16>
    %322 = vector.shape_cast %321 : vector<1x64x32xbf16> to vector<64x32xbf16>
    %cst_112 = arith.constant dense<0.000000e+00> : vector<8x32xf32>
    %323 = tpu.matmul %319, %322, %cst_112 {dimension_numbers = #tpu.dot_dimension_numbers<[1], [0], [0], [1], [0, 0, 1, 1], [], []>} : vector<8x64xbf16>, vector<64x32xbf16>, vector<8x32xf32> -> vector<8x32xf32>
    %324 = arith.addf %278, %323 : vector<8x32xf32>
    %325 = arith.index_cast %c1_i32 : i32 to index
    %c0_113 = arith.constant 0 : index
    %c0_114 = arith.constant 0 : index
    %326 = vector.load %arg12[%325, %c0_113, %c0_114] : memref<2x1x32xf32, #tpu.memory_space<vmem>>, vector<1x1x32xf32>
    %327 = vector.shape_cast %326 : vector<1x1x32xf32> to vector<1x32xf32>
    %328 = vector.broadcast %327 : vector<1x32xf32> to vector<8x32xf32>
    %329 = arith.addf %324, %328 : vector<8x32xf32>
    %c2_i32 = arith.constant 2 : i32
    %c0_115 = arith.constant 0 : index
    %c0_116 = arith.constant 0 : index
    %c0_117 = arith.constant 0 : index
    %330 = vector.load %arg13[%c0_115, %c0_116, %c0_117] : memref<1x8x32xf32, #tpu.memory_space<vmem>>, vector<1x8x32xf32>
    %331 = vector.shape_cast %330 : vector<1x8x32xf32> to vector<8x32xf32>
    %332 = vector.shape_cast %329 : vector<8x32xf32> to vector<1x8x32xf32>
    tpu.vector_store %arg13[%c0_115, %c0_116, %c0_117], %332 {strides = array<i32>} : memref<1x8x32xf32, #tpu.memory_space<vmem>>, vector<1x8x32xf32>,
    return
  }
  func.func @transform_0(%arg0: i32) -> (i32, i32, i32) {
    %c0_i32 = arith.constant 0 : i32
    %c0_i32_0 = arith.constant 0 : i32
    %c0_i32_1 = arith.constant 0 : i32
    return %arg0, %c0_i32, %c0_i32_0 : i32, i32, i32
  }
  func.func @transform_1(%arg0: i32) -> (i32, i32, i32) {
    %c0_i32 = arith.constant 0 : i32
    %c0_i32_0 = arith.constant 0 : i32
    %c0_i32_1 = arith.constant 0 : i32
    %c0_i32_2 = arith.constant 0 : i32
    return %c0_i32, %c0_i32_0, %c0_i32_1 : i32, i32, i32
  }
  func.func @transform_2(%arg0: i32) -> (i32, i32, i32) {
    %c0_i32 = arith.constant 0 : i32
    %c0_i32_0 = arith.constant 0 : i32
    %c0_i32_1 = arith.constant 0 : i32
    %c0_i32_2 = arith.constant 0 : i32
    return %c0_i32, %c0_i32_0, %c0_i32_1 : i32, i32, i32
  }
  func.func @transform_3(%arg0: i32) -> (i32, i32, i32) {
    %c0_i32 = arith.constant 0 : i32
    %c0_i32_0 = arith.constant 0 : i32
    %c0_i32_1 = arith.constant 0 : i32
    %c0_i32_2 = arith.constant 0 : i32
    return %c0_i32, %c0_i32_0, %c0_i32_1 : i32, i32, i32
  }
  func.func @transform_4(%arg0: i32) -> (i32, i32, i32) {
    %c0_i32 = arith.constant 0 : i32
    %c0_i32_0 = arith.constant 0 : i32
    %c0_i32_1 = arith.constant 0 : i32
    %c0_i32_2 = arith.constant 0 : i32
    return %c0_i32, %c0_i32_0, %c0_i32_1 : i32, i32, i32
  }
  func.func @transform_5(%arg0: i32) -> (i32, i32, i32) {
    %c0_i32 = arith.constant 0 : i32
    %c0_i32_0 = arith.constant 0 : i32
    %c0_i32_1 = arith.constant 0 : i32
    %c0_i32_2 = arith.constant 0 : i32
    return %c0_i32, %c0_i32_0, %c0_i32_1 : i32, i32, i32
  }
  func.func @transform_6(%arg0: i32) -> (i32, i32, i32) {
    %c0_i32 = arith.constant 0 : i32
    %c0_i32_0 = arith.constant 0 : i32
    %c0_i32_1 = arith.constant 0 : i32
    %c0_i32_2 = arith.constant 0 : i32
    return %c0_i32, %c0_i32_0, %c0_i32_1 : i32, i32, i32
  }
  func.func @transform_7(%arg0: i32) -> (i32, i32, i32) {
    %c0_i32 = arith.constant 0 : i32
    %c0_i32_0 = arith.constant 0 : i32
    %c0_i32_1 = arith.constant 0 : i32
    %c0_i32_2 = arith.constant 0 : i32
    return %c0_i32, %c0_i32_0, %c0_i32_1 : i32, i32, i32
  }
  func.func @transform_8(%arg0: i32) -> (i32, i32, i32) {
    %c0_i32 = arith.constant 0 : i32
    %c0_i32_0 = arith.constant 0 : i32
    %c0_i32_1 = arith.constant 0 : i32
    %c0_i32_2 = arith.constant 0 : i32
    return %c0_i32, %c0_i32_0, %c0_i32_1 : i32, i32, i32
  }
  func.func @transform_9(%arg0: i32) -> (i32, i32, i32) {
    %c0_i32 = arith.constant 0 : i32
    %c0_i32_0 = arith.constant 0 : i32
    %c0_i32_1 = arith.constant 0 : i32
    %c0_i32_2 = arith.constant 0 : i32
    return %c0_i32, %c0_i32_0, %c0_i32_1 : i32, i32, i32
  }
  func.func @transform_10(%arg0: i32) -> (i32, i32, i32) {
    %c0_i32 = arith.constant 0 : i32
    %c0_i32_0 = arith.constant 0 : i32
    %c0_i32_1 = arith.constant 0 : i32
    %c0_i32_2 = arith.constant 0 : i32
    return %c0_i32, %c0_i32_0, %c0_i32_1 : i32, i32, i32
  }
  func.func @transform_11(%arg0: i32) -> (i32, i32, i32) {
    %c0_i32 = arith.constant 0 : i32
    %c0_i32_0 = arith.constant 0 : i32
    %c0_i32_1 = arith.constant 0 : i32
    %c0_i32_2 = arith.constant 0 : i32
    return %c0_i32, %c0_i32_0, %c0_i32_1 : i32, i32, i32
  }
  func.func @transform_12(%arg0: i32) -> (i32, i32, i32) {
    %c0_i32 = arith.constant 0 : i32
    %c0_i32_0 = arith.constant 0 : i32
    %c0_i32_1 = arith.constant 0 : i32
    return %arg0, %c0_i32, %c0_i32_0 : i32, i32, i32
  }
}

</mosaic_0001>

<llo_original>
// kernel: tpu_custom_call.1
$region0: #{tpu_custom_call.1}
  #allocation0 [shape = 'u32[]', space=smem, size = 0x4, offset = 0x4, fixed_abs, tag = 'smem constant byte address 0x4 - core index']
  #allocation1 [shape = 'u32[144,128]{1,0:T(1,128)}', space=vmem, size = 0x12000, scoped, tag = 'internal scratch']
  %s0 = inlined_call_operand.hbm [shape: f32[2,8,32], index: 0, kind: input, shape index: {}]
  %s1 = inlined_call_operand.vmem [shape: f32[2,1,32], index: 1, kind: input, shape index: {}]
  %s2 = inlined_call_operand.vmem [shape: f32[2,1,32], index: 2, kind: input, shape index: {}]
  %s3 = inlined_call_operand.vmem [shape: bf16[2,32,96], index: 3, kind: input, shape index: {}]
  %s4 = inlined_call_operand.vmem [shape: bf16[2,32,32], index: 4, kind: input, shape index: {}]
  %s5 = inlined_call_operand.hbm [shape: f32[2,1,32], index: 5, kind: input, shape index: {}]
  %s6 = inlined_call_operand.hbm [shape: f32[2,1,32], index: 6, kind: input, shape index: {}]
  %s7 = inlined_call_operand.hbm [shape: f32[2,1,32], index: 7, kind: input, shape index: {}]
  %s8 = inlined_call_operand.vmem [shape: bf16[2,32,64], index: 8, kind: input, shape index: {}]
  %s9 = inlined_call_operand.hbm [shape: f32[2,1,64], index: 9, kind: input, shape index: {}]
  %s10 = inlined_call_operand.vmem [shape: bf16[2,64,32], index: 10, kind: input, shape index: {}]
  %s11 = inlined_call_operand.vmem [shape: f32[2,1,32], index: 11, kind: input, shape index: {}]
  %s12 = inlined_call_operand.hbm [shape: f32[2,8,32], index: 12, kind: output, shape index: {}]
  %s13 = sld [smem:[#allocation0]]
  $region101: #{tpu_custom_call.1} parent=0
    _
  %s15 = ssub.s32 1, %s13
  %s16 = scalar_select 0, %s15, %s13
  $region1: #{tpu_custom_call.1} parent=0
    #allocation2 [shape = 'u8[8192]{0}', space=vmem, size = 0x2000, scoped, tag = 'input window, operand 0']
    #allocation3 [shape = 's32[2]{0}', space=sflag, size = 0x8, scoped, tag = 'scoped memory for tpu_custom_call.1']
    #allocation4 [shape = 's32[2]{0}', space=sflag, size = 0x8, scoped, tag = 'scoped memory for tpu_custom_call.1']
    #allocation5 [shape = 'u8[1024]{0}', space=vmem, size = 0x400, scoped, tag = 'input window, operand 5, single buffered']
    #allocation6 [shape = 's32[1]{0}', space=sflag, size = 0x4, scoped, tag = 'scoped memory for tpu_custom_call.1']
    #allocation7 [shape = 'u8[1024]{0}', space=vmem, size = 0x400, scoped, tag = 'input window, operand 6, single buffered']
    #allocation8 [shape = 'u8[1024]{0}', space=vmem, size = 0x400, scoped, tag = 'input window, operand 7, single buffered']
    #allocation9 [shape = 's32[1]{0}', space=sflag, size = 0x4, scoped, tag = 'scoped memory for tpu_custom_call.1']
    #allocation10 [shape = 'u8[1024]{0}', space=vmem, size = 0x400, scoped, tag = 'input window, operand 9, single buffered']
    #allocation11 [shape = 'u8[8192]{0}', space=vmem, size = 0x2000, scoped, tag = 'output window, operand 0']
    %17 = vsyncpa [#allocation3], 0
    %s18 = scalar_lea.sflag [#allocation3], 1
    %19 = vsyncpa %s18, 0
    %20 = vsyncpa [#allocation6], 0
    %21 = vsyncpa [#allocation9], 0
    %22 = vsyncpa [#allocation4], 0
    %s23 = scalar_lea.sflag [#allocation4], 1
    %24 = vsyncpa %s23, 0
    loop: start=0, step=1, limit=4
    $region2: #{tpu_custom_call.1} parent=1 // loop_pre_header
      _
    $region3: #{tpu_custom_call.1} parent=1 // loop_header
      %s26 = sphi 0, %s30
      %p27 = scmp.ge.s32.totalorder %s26, 4
      %s36 = sphi 0, %s38
      %s39 = sphi 0, %s36
      %s40 = sphi 0, %s39
      %s56 = sphi 0, %s40
      %s60 = sphi 0, %s60
      %s62 = sphi 0, %s60
      %s63 = sphi 0, %s62
      %s77 = sphi 0, %s63
      %s81 = sphi 0, %s81
      %s83 = sphi 0, %s81
      %s84 = sphi 0, %s83
      %s98 = sphi 0, %s84
      %s102 = sphi 0, %s102
      %s104 = sphi 0, %s102
      %s105 = sphi 0, %s104
      %s119 = sphi 0, %s105
      %s123 = sphi 0, %s123
      %s125 = sphi 0, %s123
      %s126 = sphi 0, %s125
      %s140 = sphi 0, %s126
      %s144 = sphi 0, %s144
      %s146 = sphi 0, %s144
      %s147 = sphi 0, %s146
      %s161 = sphi 0, %s147
      %s165 = sphi 0, %s165
      %s167 = sphi 0, %s165
      %s168 = sphi 0, %s167
      %s182 = sphi 0, %s168
      %s186 = sphi 0, %s186
      %s188 = sphi 0, %s186
      %s189 = sphi 0, %s188
      %s203 = sphi 0, %s189
      %s207 = sphi 0, %s207
      %s209 = sphi 0, %s207
      %s210 = sphi 0, %s209
      %s224 = sphi 0, %s210
      %s228 = sphi 0, %s228
      %s230 = sphi 0, %s228
      %s231 = sphi 0, %s230
      %s245 = sphi 0, %s231
      %s249 = sphi 0, %s249
      %s251 = sphi 0, %s249
      %s252 = sphi 0, %s251
      %s266 = sphi 0, %s252
      %s270 = sphi 0, %s270
      %s272 = sphi 0, %s270
      %s273 = sphi 0, %s272
      %s287 = sphi 0, %s273
      %s293 = sphi 0, %s295
      %s296 = sphi 0, %s293
      %s297 = sphi 0, %s296
      %s313 = sphi 0, %s297
    $region4: #{tpu_custom_call.1} parent=1 // loop_header_branch
      %29 = sbr.rel (%p27) target = $region8
    $region5: #{tpu_custom_call.1} parent=1 // loop_body
      %s31 = ssub.s32 %s26, 1
      %s32 = ssub.s32 %s26, 2
      %s33 = sadd.s32 %s26, 1
      %s34 = ssub.s32 %s26, %s33
      %p35 = scmp.eq.s32.totalorder %s34, 0
      %s37 = sadd.s32 %s36, 1
      %s38 = scalar_select %p35, %s36, %s37
      %p41 = pneg %p35
      %p42 = scmp.eq.s32.totalorder %s26, 1
      %p43 = por %p41, %p42
      %p44 = scmp.ne.s32.totalorder %s36, %s39
      %p45 = scmp.eq.s32.totalorder %s26, 0
      %p46 = por %p44, %p45
      %p47 = scmp.ne.s32.totalorder %s36, %s39
      %p48 = scmp.eq.s32.totalorder %s31, 1
      %p49 = por %p47, %p48
      %p50 = scmp.ne.s32.totalorder %s39, %s40
      %p51 = scmp.eq.s32.totalorder %s31, 0
      %p52 = por %p50, %p51
      %p53 = scmp.ne.s32.totalorder %s39, %s40
      %p54 = scmp.eq.s32.totalorder %s32, 1
      %p55 = por %p53, %p54
      %p57 = scmp.ne.s32.totalorder %s40, %s56
      %p58 = scmp.eq.s32.totalorder %s32, 0
      %p59 = por %p57, %p58
      %s61 = sadd.s32 %s60, 1
      %p64 = scmp.eq.s32.totalorder %s26, 1
      %p65 = scmp.ne.s32.totalorder %s60, %s62
      %p66 = scmp.eq.s32.totalorder %s26, 0
      %p67 = por %p65, %p66
      %p68 = scmp.ne.s32.totalorder %s60, %s62
      %p69 = scmp.eq.s32.totalorder %s31, 1
      %p70 = por %p68, %p69
      %p71 = scmp.ne.s32.totalorder %s62, %s63
      %p72 = scmp.eq.s32.totalorder %s31, 0
      %p73 = por %p71, %p72
      %p74 = scmp.ne.s32.totalorder %s62, %s63
      %p75 = scmp.eq.s32.totalorder %s32, 1
      %p76 = por %p74, %p75
      %p78 = scmp.ne.s32.totalorder %s63, %s77
      %p79 = scmp.eq.s32.totalorder %s32, 0
      %p80 = por %p78, %p79
      %s82 = sadd.s32 %s81, 1
      %p85 = scmp.eq.s32.totalorder %s26, 1
      %p86 = scmp.ne.s32.totalorder %s81, %s83
      %p87 = scmp.eq.s32.totalorder %s26, 0
      %p88 = por %p86, %p87
      %p89 = scmp.ne.s32.totalorder %s81, %s83
      %p90 = scmp.eq.s32.totalorder %s31, 1
      %p91 = por %p89, %p90
      %p92 = scmp.ne.s32.totalorder %s83, %s84
      %p93 = scmp.eq.s32.totalorder %s31, 0
      %p94 = por %p92, %p93
      %p95 = scmp.ne.s32.totalorder %s83, %s84
      %p96 = scmp.eq.s32.totalorder %s32, 1
      %p97 = por %p95, %p96
      %p99 = scmp.ne.s32.totalorder %s84, %s98
      %p100 = scmp.eq.s32.totalorder %s32, 0
      %p101 = por %p99, %p100
      %s103 = sadd.s32 %s102, 1
      %p106 = scmp.eq.s32.totalorder %s26, 1
      %p107 = scmp.ne.s32.totalorder %s102, %s104
      %p108 = scmp.eq.s32.totalorder %s26, 0
      %p109 = por %p107, %p108
      %p110 = scmp.ne.s32.totalorder %s102, %s104
      %p111 = scmp.eq.s32.totalorder %s31, 1
      %p112 = por %p110, %p111
      %p113 = scmp.ne.s32.totalorder %s104, %s105
      %p114 = scmp.eq.s32.totalorder %s31, 0
      %p115 = por %p113, %p114
      %p116 = scmp.ne.s32.totalorder %s104, %s105
      %p117 = scmp.eq.s32.totalorder %s32, 1
      %p118 = por %p116, %p117
      %p120 = scmp.ne.s32.totalorder %s105, %s119
      %p121 = scmp.eq.s32.totalorder %s32, 0
      %p122 = por %p120, %p121
      %s124 = sadd.s32 %s123, 1
      %p127 = scmp.eq.s32.totalorder %s26, 1
      %p128 = scmp.ne.s32.totalorder %s123, %s125
      %p129 = scmp.eq.s32.totalorder %s26, 0
      %p130 = por %p128, %p129
      %p131 = scmp.ne.s32.totalorder %s123, %s125
      %p132 = scmp.eq.s32.totalorder %s31, 1
      %p133 = por %p131, %p132
      %p134 = scmp.ne.s32.totalorder %s125, %s126
      %p135 = scmp.eq.s32.totalorder %s31, 0
      %p136 = por %p134, %p135
      %p137 = scmp.ne.s32.totalorder %s125, %s126
      %p138 = scmp.eq.s32.totalorder %s32, 1
      %p139 = por %p137, %p138
      %p141 = scmp.ne.s32.totalorder %s126, %s140
      %p142 = scmp.eq.s32.totalorder %s32, 0
      %p143 = por %p141, %p142
      %s145 = sadd.s32 %s144, 1
      %p148 = scmp.eq.s32.totalorder %s26, 1
      %p149 = scmp.ne.s32.totalorder %s144, %s146
      %p150 = scmp.eq.s32.totalorder %s26, 0
      %p151 = por %p149, %p150
      %p152 = scmp.ne.s32.totalorder %s144, %s146
      %p153 = scmp.eq.s32.totalorder %s31, 1
      %p154 = por %p152, %p153
      %p155 = scmp.ne.s32.totalorder %s146, %s147
      %p156 = scmp.eq.s32.totalorder %s31, 0
      %p157 = por %p155, %p156
      %p158 = scmp.ne.s32.totalorder %s146, %s147
      %p159 = scmp.eq.s32.totalorder %s32, 1
      %p160 = por %p158, %p159
      %p162 = scmp.ne.s32.totalorder %s147, %s161
      %p163 = scmp.eq.s32.totalorder %s32, 0
      %p164 = por %p162, %p163
      %s166 = sadd.s32 %s165, 1
      %p169 = scmp.eq.s32.totalorder %s26, 1
      %p170 = scmp.ne.s32.totalorder %s165, %s167
      %p171 = scmp.eq.s32.totalorder %s26, 0
      %p172 = por %p170, %p171
      %p173 = scmp.ne.s32.totalorder %s165, %s167
      %p174 = scmp.eq.s32.totalorder %s31, 1
      %p175 = por %p173, %p174
      %p176 = scmp.ne.s32.totalorder %s167, %s168
      %p177 = scmp.eq.s32.totalorder %s31, 0
      %p178 = por %p176, %p177
      %p179 = scmp.ne.s32.totalorder %s167, %s168
      %p180 = scmp.eq.s32.totalorder %s32, 1
      %p181 = por %p179, %p180
      %p183 = scmp.ne.s32.totalorder %s168, %s182
      %p184 = scmp.eq.s32.totalorder %s32, 0
      %p185 = por %p183, %p184
      %s187 = sadd.s32 %s186, 1
      %p190 = scmp.eq.s32.totalorder %s26, 1
      %p191 = scmp.ne.s32.totalorder %s186, %s188
      %p192 = scmp.eq.s32.totalorder %s26, 0
      %p193 = por %p191, %p192
      %p194 = scmp.ne.s32.totalorder %s186, %s188
      %p195 = scmp.eq.s32.totalorder %s31, 1
      %p196 = por %p194, %p195
      %p197 = scmp.ne.s32.totalorder %s188, %s189
      %p198 = scmp.eq.s32.totalorder %s31, 0
      %p199 = por %p197, %p198
      %p200 = scmp.ne.s32.totalorder %s188, %s189
      %p201 = scmp.eq.s32.totalorder %s32, 1
      %p202 = por %p200, %p201
      %p204 = scmp.ne.s32.totalorder %s189, %s203
      %p205 = scmp.eq.s32.totalorder %s32, 0
      %p206 = por %p204, %p205
      %s208 = sadd.s32 %s207, 1
      %p211 = scmp.eq.s32.totalorder %s26, 1
      %p212 = scmp.ne.s32.totalorder %s207, %s209
      %p213 = scmp.eq.s32.totalorder %s26, 0
      %p214 = por %p212, %p213
      %p215 = scmp.ne.s32.totalorder %s207, %s209
      %p216 = scmp.eq.s32.totalorder %s31, 1
      %p217 = por %p215, %p216
      %p218 = scmp.ne.s32.totalorder %s209, %s210
      %p219 = scmp.eq.s32.totalorder %s31, 0
      %p220 = por %p218, %p219
      %p221 = scmp.ne.s32.totalorder %s209, %s210
      %p222 = scmp.eq.s32.totalorder %s32, 1
      %p223 = por %p221, %p222
      %p225 = scmp.ne.s32.totalorder %s210, %s224
      %p226 = scmp.eq.s32.totalorder %s32, 0
      %p227 = por %p225, %p226
      %s229 = sadd.s32 %s228, 1
      %p232 = scmp.eq.s32.totalorder %s26, 1
      %p233 = scmp.ne.s32.totalorder %s228, %s230
      %p234 = scmp.eq.s32.totalorder %s26, 0
      %p235 = por %p233, %p234
      %p236 = scmp.ne.s32.totalorder %s228, %s230
      %p237 = scmp.eq.s32.totalorder %s31, 1
      %p238 = por %p236, %p237
      %p239 = scmp.ne.s32.totalorder %s230, %s231
      %p240 = scmp.eq.s32.totalorder %s31, 0
      %p241 = por %p239, %p240
      %p242 = scmp.ne.s32.totalorder %s230, %s231
      %p243 = scmp.eq.s32.totalorder %s32, 1
      %p244 = por %p242, %p243
      %p246 = scmp.ne.s32.totalorder %s231, %s245
      %p247 = scmp.eq.s32.totalorder %s32, 0
      %p248 = por %p246, %p247
      %s250 = sadd.s32 %s249, 1
      %p253 = scmp.eq.s32.totalorder %s26, 1
      %p254 = scmp.ne.s32.totalorder %s249, %s251
      %p255 = scmp.eq.s32.totalorder %s26, 0
      %p256 = por %p254, %p255
      %p257 = scmp.ne.s32.totalorder %s249, %s251
      %p258 = scmp.eq.s32.totalorder %s31, 1
      %p259 = por %p257, %p258
      %p260 = scmp.ne.s32.totalorder %s251, %s252
      %p261 = scmp.eq.s32.totalorder %s31, 0
      %p262 = por %p260, %p261
      %p263 = scmp.ne.s32.totalorder %s251, %s252
      %p264 = scmp.eq.s32.totalorder %s32, 1
      %p265 = por %p263, %p264
      %p267 = scmp.ne.s32.totalorder %s252, %s266
      %p268 = scmp.eq.s32.totalorder %s32, 0
      %p269 = por %p267, %p268
      %s271 = sadd.s32 %s270, 1
      %p274 = scmp.eq.s32.totalorder %s26, 1
      %p275 = scmp.ne.s32.totalorder %s270, %s272
      %p276 = scmp.eq.s32.totalorder %s26, 0
      %p277 = por %p275, %p276
      %p278 = scmp.ne.s32.totalorder %s270, %s272
      %p279 = scmp.eq.s32.totalorder %s31, 1
      %p280 = por %p278, %p279
      %p281 = scmp.ne.s32.totalorder %s272, %s273
      %p282 = scmp.eq.s32.totalorder %s31, 0
      %p283 = por %p281, %p282
      %p284 = scmp.ne.s32.totalorder %s272, %s273
      %p285 = scmp.eq.s32.totalorder %s32, 1
      %p286 = por %p284, %p285
      %p288 = scmp.ne.s32.totalorder %s273, %s287
      %p289 = scmp.eq.s32.totalorder %s32, 0
      %p290 = por %p288, %p289
      %s291 = ssub.s32 %s26, %s33
      %p292 = scmp.eq.s32.totalorder %s291, 0
      %s294 = sadd.s32 %s293, 1
      %s295 = scalar_select %p292, %s293, %s294
      %p298 = pneg %p292
      %p299 = scmp.eq.s32.totalorder %s26, 1
      %p300 = por %p298, %p299
      %p301 = scmp.ne.s32.totalorder %s293, %s296
      %p302 = scmp.eq.s32.totalorder %s26, 0
      %p303 = por %p301, %p302
      %p304 = scmp.ne.s32.totalorder %s293, %s296
      %p305 = scmp.eq.s32.totalorder %s31, 1
      %p306 = por %p304, %p305
      %p307 = scmp.ne.s32.totalorder %s296, %s297
      %p308 = scmp.eq.s32.totalorder %s31, 0
      %p309 = por %p307, %p308
      %p310 = scmp.ne.s32.totalorder %s296, %s297
      %p311 = scmp.eq.s32.totalorder %s32, 1
      %p312 = por %p310, %p311
      %p314 = scmp.ne.s32.totalorder %s297, %s313
      %p315 = scmp.eq.s32.totalorder %s32, 0
      %p316 = por %p314, %p315
      %p317 = scmp.le.s32.totalorder 1, %s26
      %p318 = scmp.lt.s32.totalorder %s26, 3
      %p319 = pnand %p317, %p318
      %p320 = pneg %p319
      // Predicated region
      $region9: #{tpu_custom_call.1} parent=5 // pred_check
        _
      $region10: #{tpu_custom_call.1} parent=5 // pred_check_branch
        %322 = sbr.rel (%p319) target = $region12
      $region11: #{tpu_custom_call.1} parent=5 // pred_region
        %s323 = ssub.s32 %s26, 1
        // Predicated region
        $region13: #{tpu_custom_call.1} parent=11 // pred_check
          %p324 = pneg %p73
        $region14: #{tpu_custom_call.1} parent=11 // pred_check_branch
          %326 = sbr.rel (%p324) target = $region16
        $region15: #{tpu_custom_call.1} parent=11 // pred_region
          _
        $region16: #{tpu_custom_call.1} parent=11 // pred_fallthru
          _
        // Predicated region
        $region17: #{tpu_custom_call.1} parent=11 // pred_check
          %p327 = pneg %p94
        $region18: #{tpu_custom_call.1} parent=11 // pred_check_branch
          %329 = sbr.rel (%p327) target = $region20
        $region19: #{tpu_custom_call.1} parent=11 // pred_region
          _
        $region20: #{tpu_custom_call.1} parent=11 // pred_fallthru
          _
        // Predicated region
        $region21: #{tpu_custom_call.1} parent=11 // pred_check
          %p330 = pneg %p115
        $region22: #{tpu_custom_call.1} parent=11 // pred_check_branch
          %332 = sbr.rel (%p330) target = $region24
        $region23: #{tpu_custom_call.1} parent=11 // pred_region
          _
        $region24: #{tpu_custom_call.1} parent=11 // pred_fallthru
          _
        // Predicated region
        $region25: #{tpu_custom_call.1} parent=11 // pred_check
          %p333 = pneg %p136
        $region26: #{tpu_custom_call.1} parent=11 // pred_check_branch
          %335 = sbr.rel (%p333) target = $region28
        $region27: #{tpu_custom_call.1} parent=11 // pred_region
          _
        $region28: #{tpu_custom_call.1} parent=11 // pred_fallthru
          _
        // Predicated region
        $region29: #{tpu_custom_call.1} parent=11 // pred_check
          %p336 = pneg %p157
        $region30: #{tpu_custom_call.1} parent=11 // pred_check_branch
          %338 = sbr.rel (%p336) target = $region32
        $region31: #{tpu_custom_call.1} parent=11 // pred_region
          %s340 = ssub.s32 32, 32
          %341 = vsyncadd [#allocation6], %s340
          %s342 = sshll.u32 [#allocation5], 4
          %s343 = int_to_ptr.vmem [resolvable:$true] %s342
          %348 = dma.hbm_to_vmem [thread:$0]  %s5, 32, %s343, [#allocation6], 16, 16, 1
        $region32: #{tpu_custom_call.1} parent=11 // pred_fallthru
          _
        // Predicated region
        $region33: #{tpu_custom_call.1} parent=11 // pred_check
          %p349 = pneg %p178
        $region34: #{tpu_custom_call.1} parent=11 // pred_check_branch
          %351 = sbr.rel (%p349) target = $region36
        $region35: #{tpu_custom_call.1} parent=11 // pred_region
          %s353 = ssub.s32 32, 32
          %354 = vsyncadd [#allocation6], %s353
          %s355 = sshll.u32 [#allocation7], 4
          %s356 = int_to_ptr.vmem [resolvable:$true] %s355
          %361 = dma.hbm_to_vmem [thread:$0]  %s6, 32, %s356, [#allocation6], 16, 16, 1
        $region36: #{tpu_custom_call.1} parent=11 // pred_fallthru
          _
        // Predicated region
        $region37: #{tpu_custom_call.1} parent=11 // pred_check
          %p362 = pneg %p199
        $region38: #{tpu_custom_call.1} parent=11 // pred_check_branch
          %364 = sbr.rel (%p362) target = $region40
        $region39: #{tpu_custom_call.1} parent=11 // pred_region
          %s366 = ssub.s32 32, 32
          %367 = vsyncadd [#allocation9], %s366
          %s368 = sshll.u32 [#allocation8], 4
          %s369 = int_to_ptr.vmem [resolvable:$true] %s368
          %374 = dma.hbm_to_vmem [thread:$0]  %s7, 32, %s369, [#allocation9], 16, 16, 1
        $region40: #{tpu_custom_call.1} parent=11 // pred_fallthru
          _
        // Predicated region
        $region41: #{tpu_custom_call.1} parent=11 // pred_check
          %p375 = pneg %p220
        $region42: #{tpu_custom_call.1} parent=11 // pred_check_branch
          %377 = sbr.rel (%p375) target = $region44
        $region43: #{tpu_custom_call.1} parent=11 // pred_region
          _
        $region44: #{tpu_custom_call.1} parent=11 // pred_fallthru
          _
        // Predicated region
        $region45: #{tpu_custom_call.1} parent=11 // pred_check
          %p378 = pneg %p241
        $region46: #{tpu_custom_call.1} parent=11 // pred_check_branch
          %380 = sbr.rel (%p378) target = $region48
        $region47: #{tpu_custom_call.1} parent=11 // pred_region
          %s382 = ssub.s32 32, 32
          %383 = vsyncadd [#allocation9], %s382
          %s384 = sshll.u32 [#allocation10], 4
          %s385 = int_to_ptr.vmem [resolvable:$true] %s384
          %390 = dma.hbm_to_vmem [thread:$0]  %s9, 32, %s385, [#allocation9], 16, 16, 1
        $region48: #{tpu_custom_call.1} parent=11 // pred_fallthru
          _
        // Predicated region
        $region49: #{tpu_custom_call.1} parent=11 // pred_check
          %p391 = pneg %p262
        $region50: #{tpu_custom_call.1} parent=11 // pred_check_branch
          %393 = sbr.rel (%p391) target = $region52
        $region51: #{tpu_custom_call.1} parent=11 // pred_region
          _
        $region52: #{tpu_custom_call.1} parent=11 // pred_fallthru
          _
        // Predicated region
        $region53: #{tpu_custom_call.1} parent=11 // pred_check
          %p394 = pneg %p283
        $region54: #{tpu_custom_call.1} parent=11 // pred_check_branch
          %396 = sbr.rel (%p394) target = $region56
        $region55: #{tpu_custom_call.1} parent=11 // pred_region
          _
        $region56: #{tpu_custom_call.1} parent=11 // pred_fallthru
          _
      $region12: #{tpu_custom_call.1} parent=5 // pred_fallthru
        _
      %p397 = scmp.lt.s32.totalorder %s26, 2
      // Predicated region
      $region57: #{tpu_custom_call.1} parent=5 // pred_check
        %p398 = pneg %p397
      $region58: #{tpu_custom_call.1} parent=5 // pred_check_branch
        %400 = sbr.rel (%p398) target = $region60
      $region59: #{tpu_custom_call.1} parent=5 // pred_region
        // Predicated region
        $region61: #{tpu_custom_call.1} parent=59 // pred_check
          %p401 = pneg %p46
        $region62: #{tpu_custom_call.1} parent=59 // pred_check_branch
          %403 = sbr.rel (%p401) target = $region64
        $region63: #{tpu_custom_call.1} parent=59 // pred_region
          %s404 = sand.u32 %s36, 1
          %s405 = scalar_lea.sflag [#allocation3], %s404
          %s406 = sand.u32 %s36, 1
          %s407 = smul.addr %s406, 8
          %s408 = scalar_lea.vmem [#allocation2], %s407
          %s410 = ssub.s32 128, 128
          %411 = vsyncadd %s405, %s410
          %s412 = smul.addr %s26, 128
          %s413 = scalar_lea.hbm %s0, %s412
          %s415 = sshll.u32 %s408, 4
          %s416 = int_to_ptr.vmem [resolvable:$true] %s415
          %418 = dma.hbm_to_vmem [thread:$0]  %s413, 128, %s416, %s405
        $region64: #{tpu_custom_call.1} parent=59 // pred_fallthru
          _
      $region60: #{tpu_custom_call.1} parent=5 // pred_fallthru
        _
      %p419 = scmp.le.s32.totalorder 1, %s26
      %p420 = scmp.lt.s32.totalorder %s26, 3
      %p421 = pnand %p419, %p420
      %p422 = pneg %p421
      // Predicated region
      $region65: #{tpu_custom_call.1} parent=5 // pred_check
        _
      $region66: #{tpu_custom_call.1} parent=5 // pred_check_branch
        %424 = sbr.rel (%p421) target = $region68
      $region67: #{tpu_custom_call.1} parent=5 // pred_region
        %s425 = ssub.s32 %s26, 1
        %s426 = sand.u32 %s39, 1
        %s427 = scalar_lea.sflag [#allocation3], %s426
        %s428 = sand.u32 %s39, 1
        %s429 = smul.addr %s428, 8
        %s430 = scalar_lea.vmem [#allocation2], %s429
        // Predicated region
        $region69: #{tpu_custom_call.1} parent=67 // pred_check
          %p431 = pneg %p52
        $region70: #{tpu_custom_call.1} parent=67 // pred_check_branch
          %433 = sbr.rel (%p431) target = $region72
        $region71: #{tpu_custom_call.1} parent=67 // pred_region
          %434 = dma.done %s427, 128
        $region72: #{tpu_custom_call.1} parent=67 // pred_fallthru
          _
        // Predicated region
        $region73: #{tpu_custom_call.1} parent=67 // pred_check
          %p435 = pneg %p157
        $region74: #{tpu_custom_call.1} parent=67 // pred_check_branch
          %437 = sbr.rel (%p435) target = $region76
        $region75: #{tpu_custom_call.1} parent=67 // pred_region
          %438 = dma.done [#allocation6], 32
        $region76: #{tpu_custom_call.1} parent=67 // pred_fallthru
          _
        // Predicated region
        $region77: #{tpu_custom_call.1} parent=67 // pred_check
          %p439 = pneg %p178
        $region78: #{tpu_custom_call.1} parent=67 // pred_check_branch
          %441 = sbr.rel (%p439) target = $region80
        $region79: #{tpu_custom_call.1} parent=67 // pred_region
          %442 = dma.done [#allocation6], 32
        $region80: #{tpu_custom_call.1} parent=67 // pred_fallthru
          _
        // Predicated region
        $region81: #{tpu_custom_call.1} parent=67 // pred_check
          %p443 = pneg %p199
        $region82: #{tpu_custom_call.1} parent=67 // pred_check_branch
          %445 = sbr.rel (%p443) target = $region84
        $region83: #{tpu_custom_call.1} parent=67 // pred_region
          %446 = dma.done [#allocation9], 32
        $region84: #{tpu_custom_call.1} parent=67 // pred_fallthru
          _
        // Predicated region
        $region85: #{tpu_custom_call.1} parent=67 // pred_check
          %p447 = pneg %p241
        $region86: #{tpu_custom_call.1} parent=67 // pred_check_branch
          %449 = sbr.rel (%p447) target = $region88
        $region87: #{tpu_custom_call.1} parent=67 // pred_region
          %450 = dma.done [#allocation9], 32
        $region88: #{tpu_custom_call.1} parent=67 // pred_fallthru
          _
        %s451 = sand.u32 %s39, 1
        %s452 = scalar_lea.sflag [#allocation3], %s451
        %s453 = sand.u32 %s39, 1
        %s454 = smul.addr %s453, 8
        %s455 = scalar_lea.vmem [#allocation2], %s454
        %p456 = pneg %p52
        %p457 = pneg %p49
        %p458 = pneg %p73
        %p459 = pneg %p70
        %p460 = pneg %p94
        %p461 = pneg %p91
        %p462 = pneg %p115
        %p463 = pneg %p112
        %p464 = pneg %p136
        %p465 = pneg %p133
        %p466 = pneg %p157
        %p467 = pneg %p154
        %p468 = pneg %p178
        %p469 = pneg %p175
        %p470 = pneg %p199
        %p471 = pneg %p196
        %p472 = pneg %p220
        %p473 = pneg %p217
        %p474 = pneg %p241
        %p475 = pneg %p238
        %p476 = pneg %p262
        %p477 = pneg %p259
        %p478 = pneg %p283
        %p479 = pneg %p280
        %p480 = pneg %p309
        %p481 = pneg %p306
        %s482 = sand.u32 %s296, 1
        %s483 = scalar_lea.sflag [#allocation4], %s482
        %s484 = sand.u32 %s296, 1
        %s485 = smul.addr %s484, 8
        %s486 = scalar_lea.vmem [#allocation11], %s485
        %v488 = vld [vmem:[%s430] sm:$0xff]
        %v489 = vld [vmem:[%s1] sm:$0x1]
        %v490 = vld [vmem:[%s2] sm:$0x1]
        %vm491 = vcmask 261120
        %v492 = vsel %vm491, %v488, 0.0
        %493 = vadd.xlane.f32.xlu0 %v492
        %v494 = vpop.xlane.xlu0 %493
        %v495 = vrcp.pop 32.0
        %v496 = vmul.f32 %v494, %v495
        %v497 = vsub.f32 %v488, %v496
        %v498 = vmul.f32 %v497, %v497
        %v499 = vsel %vm491, %v498, 0.0
        %500 = vadd.xlane.f32.xlu0 %v499
        %v501 = vpop.xlane.xlu0 %500
        %v502 = vmul.f32 %v501, %v495
        %v503 = vadd.f32 %v502, 1e-05
        %v504 = vrsqrt.pop %v503
        %v505 = vmul.f32 %v497, %v504
        %v507 = vlaneseq
        %v508 = vshrl.u32 %v507, 7
        %v509 = vsub.s32 0, %v508
        %v510 = vrot.slane %v489, %v509
        %v512 = vmul.f32 %v505, %v510
        %v514 = vlaneseq
        %v515 = vshrl.u32 %v514, 7
        %v516 = vsub.s32 0, %v515
        %v517 = vrot.slane %v490, %v516
        %v519 = vadd.f32 %v512, %v517
        %v520 = vpack.c.bf16 %v519, %v519
        %v521 = vld [vmem:[%s3] sm:$0xf]
        %v522 = vld [vmem:[%s3 + $0x4] sm:$0xf]
        %v523 = vld [vmem:[%s3 + $0x8] sm:$0xf]
        %v524 = vld [vmem:[%s3 + $0xc] sm:$0xf]
        %v529 = vunpack.c.l.b16 %v521
        %v530 = vunpack.c.l.b16 %v522
        %v531 = vunpack.c.l.b16 %v523
        %v532 = vunpack.c.l.b16 %v524
        %v533 = vpack.c.b16 %v530, %v529
        %v534 = vpack.c.b16 %v532, %v531
        %v538 = vsel %vm491, %v520, 0
        %540 = vmatprep.subr.bf16.mxu0 0
        %541 = vmatpush1.bf16.msra.mxu0 %v533
        %542 = vmatprep.subr.bf16.mxu0 0
        %543 = vmatpush1.bf16.msra.mxu0 %v534
        %544 = vmatprep.subr.bf16.mxu0 0
        %545 = vmatpush1.bf16.msra.mxu0 0
        %546 = vmatprep.subr.bf16.mxu0 0
        %547 = vmatpush1.bf16.msra.mxu0 0
        %548 = vmatprep.subr.bf16.mxu0 0
        %549 = vmatpush1.bf16.msra.mxu0 0
        %550 = vmatprep.subr.bf16.mxu0 0
        %551 = vmatpush1.bf16.msra.mxu0 0
        %552 = vmatprep.subr.bf16.mxu0 0
        %553 = vmatpush1.bf16.msra.mxu0 0
        %554 = vmatprep.subr.bf16.mxu0 0
        %555 = vmatpush1.bf16.msra.mxu0 0
        %556 = vmatprep.subr.bf16.mxu0 0
        %557 = vmatpush1.bf16.msra.mxu0 0
        %558 = vmatprep.subr.bf16.mxu0 0
        %559 = vmatpush1.bf16.msra.mxu0 0
        %560 = vmatprep.subr.bf16.mxu0 0
        %561 = vmatpush1.bf16.msra.mxu0 0
        %562 = vmatprep.subr.bf16.mxu0 0
        %563 = vmatpush1.bf16.msra.mxu0 0
        %564 = vmatprep.subr.bf16.mxu0 0
        %565 = vmatpush1.bf16.msra.mxu0 0
        %566 = vmatprep.subr.bf16.mxu0 0
        %567 = vmatpush1.bf16.msra.mxu0 0
        %568 = vmatprep.subr.bf16.mxu0 0
        %569 = vmatpush1.bf16.msra.mxu0 0
        %570 = vmatprep.subr.bf16.mxu0 0
        %571 = vmatpush1.bf16.msra.mxu0 0
        %572 = vmatprep.mubr.bf16.mxu0 0
        %573 = vmatmul.mubr.bf16.gmra.mrb[0].mxu0 %v538
        %v574 = vpop.f32.mrb[0].mxu0
        %v575 = vadd.f32 0.0, %v574
        %v576 = vpop.f32.mrb[0].mxu0
        %v577 = vpop.f32.mrb[0].mxu0
        %v578 = vpop.f32.mrb[0].mxu0
        %579 = vdwg.mxu0
        %581 = vrot.lane.b32.xlu0 %v575, 96
        %v582 = vpop.permute.xlu0 %581
        %vm583 = vcmask 64512
        %v584 = vsel %vm583, %v575, 0
        %v586 = vsel %vm583, %v582, 0
        %588 = vmatprep.subr.mxu0 0.0
        %589 = vmatpush1.xpose.msra.mxu0 %v586
        %590 = vmatprep.subr.mxu0 0.0
        %591 = vmatpush1.xpose.msra.mxu0 0.0
        %592 = vmatprep.subr.mxu0 0.0
        %593 = vmatpush1.xpose.msra.mxu0 0.0
        %594 = vmatprep.subr.mxu0 0.0
        %595 = vmatpush1.xpose.msra.mxu0 0.0
        %596 = vmatprep.subr.mxu0 0.0
        %597 = vmatpush1.xpose.msra.mxu0 0.0
        %598 = vmatprep.subr.mxu0 0.0
        %599 = vmatpush1.xpose.msra.mxu0 0.0
        %600 = vmatprep.subr.mxu0 0.0
        %601 = vmatpush1.xpose.msra.mxu0 0.0
        %602 = vmatprep.subr.mxu0 0.0
        %603 = vmatpush1.xpose.msra.mxu0 0.0
        %604 = vmatprep.subr.mxu0 0.0
        %605 = vmatpush1.xpose.msra.mxu0 0.0
        %606 = vmatprep.subr.mxu0 0.0
        %607 = vmatpush1.xpose.msra.mxu0 0.0
        %608 = vmatprep.subr.mxu0 0.0
        %609 = vmatpush1.xpose.msra.mxu0 0.0
        %610 = vmatprep.subr.mxu0 0.0
        %611 = vmatpush1.xpose.msra.mxu0 0.0
        %612 = vmatprep.subr.mxu0 0.0
        %613 = vmatpush1.xpose.msra.mxu0 0.0
        %614 = vmatprep.subr.mxu0 0.0
        %615 = vmatpush1.xpose.msra.mxu0 0.0
        %616 = vmatprep.subr.mxu0 0.0
        %617 = vmatpush1.xpose.msra.mxu0 0.0
        %618 = vmatprep.subr.mxu0 0.0
        %619 = vmatpush1.xpose.msra.mxu0 0.0
        %620 = vmatprep.subr.mxu0 0.0
        %621 = vmatpush1.xpose.msra.mxu0 0.0
        %622 = vmatprep.subr.mxu0 0.0
        %623 = vmatpush1.xpose.msra.mxu0 0.0
        %624 = vmatprep.subr.mxu0 0.0
        %625 = vmatpush1.xpose.msra.mxu0 0.0
        %626 = vmatprep.subr.mxu0 0.0
        %627 = vmatpush1.xpose.msra.mxu0 0.0
        %628 = vmatprep.subr.mxu0 0.0
        %629 = vmatpush1.xpose.msra.mxu0 0.0
        %630 = vmatprep.subr.mxu0 0.0
        %631 = vmatpush1.xpose.msra.mxu0 0.0
        %632 = vmatprep.subr.mxu0 0.0
        %633 = vmatpush1.xpose.msra.mxu0 0.0
        %634 = vmatprep.subr.mxu0 0.0
        %635 = vmatpush1.xpose.msra.mxu0 0.0
        %636 = vmatprep.subr.mxu0 0.0
        %637 = vmatpush1.xpose.msra.mxu0 0.0
        %638 = vmatprep.subr.mxu0 0.0
        %639 = vmatpush1.xpose.msra.mxu0 0.0
        %640 = vmatprep.subr.mxu0 0.0
        %641 = vmatpush1.xpose.msra.mxu0 0.0
        %642 = vmatprep.subr.mxu0 0.0
        %643 = vmatpush1.xpose.msra.mxu0 0.0
        %644 = vmatprep.subr.mxu0 0.0
        %645 = vmatpush1.xpose.msra.mxu0 0.0
        %646 = vmatprep.subr.mxu0 0.0
        %647 = vmatpush1.xpose.msra.mxu0 0.0
        %648 = vmatprep.subr.mxu0 0.0
        %649 = vmatpush1.xpose.msra.mxu0 0.0
        %650 = vmatprep.subr.mxu0 0.0
        %651 = vmatpush1.xpose.msra.mxu0 0.0
        %652 = vmatprep.mubr.f32.mxu0 0.0
        %653 = vmatmul.mubr.f32.gmra.mrb[0].mxu0 %v584
        %v654 = vpop.f32.mrb[0].mxu0
        %v655 = vadd.f32 0.0, %v654
        %v656 = vpop.f32.mrb[0].mxu0
        %657 = vdwg.mxu0
        %v658 = vmul.f32 %v655, 0.35355338
        %v659 = vsel %vm583, %v658, -inf
        %660 = vmax.xlane.f32.xlu0 %v659
        %v661 = vpop.xlane.xlu0 %660
        %v662 = vsub.f32 %v658, %v661
        %v663 = vmul.f32 %v662, 1.442695
        %v664 = vpow.pop %v663
        %v665 = vsel %vm583, %v664, 0.0
        %666 = vadd.xlane.f32.xlu0 %v665
        %v667 = vpop.xlane.xlu0 %666
        %v668 = vrcp.pop %v667
        %v669 = vmul.f32 %v664, %v668
        %670 = vrot.lane.b32.xlu0 %v575, 64
        %v671 = vpop.permute.xlu0 %670
        %v674 = vsel %vm583, %v669, 0
        %676 = vmatprep.subr.mxu0 0.0
        %677 = vmatpush1.msra.mxu0 %v671
        %678 = vmatprep.subr.mxu0 0.0
        %679 = vmatpush1.msra.mxu0 0.0
        %680 = vmatprep.subr.mxu0 0.0
        %681 = vmatpush1.msra.mxu0 0.0
        %682 = vmatprep.subr.mxu0 0.0
        %683 = vmatpush1.msra.mxu0 0.0
        %684 = vmatprep.subr.mxu0 0.0
        %685 = vmatpush1.msra.mxu0 0.0
        %686 = vmatprep.subr.mxu0 0.0
        %687 = vmatpush1.msra.mxu0 0.0
        %688 = vmatprep.subr.mxu0 0.0
        %689 = vmatpush1.msra.mxu0 0.0
        %690 = vmatprep.subr.mxu0 0.0
        %691 = vmatpush1.msra.mxu0 0.0
        %692 = vmatprep.subr.mxu0 0.0
        %693 = vmatpush1.msra.mxu0 0.0
        %694 = vmatprep.subr.mxu0 0.0
        %695 = vmatpush1.msra.mxu0 0.0
        %696 = vmatprep.subr.mxu0 0.0
        %697 = vmatpush1.msra.mxu0 0.0
        %698 = vmatprep.subr.mxu0 0.0
        %699 = vmatpush1.msra.mxu0 0.0
        %700 = vmatprep.subr.mxu0 0.0
        %701 = vmatpush1.msra.mxu0 0.0
        %702 = vmatprep.subr.mxu0 0.0
        %703 = vmatpush1.msra.mxu0 0.0
        %704 = vmatprep.subr.mxu0 0.0
        %705 = vmatpush1.msra.mxu0 0.0
        %706 = vmatprep.subr.mxu0 0.0
        %707 = vmatpush1.msra.mxu0 0.0
        %708 = vmatprep.subr.mxu0 0.0
        %709 = vmatpush1.msra.mxu0 0.0
        %710 = vmatprep.subr.mxu0 0.0
        %711 = vmatpush1.msra.mxu0 0.0
        %712 = vmatprep.subr.mxu0 0.0
        %713 = vmatpush1.msra.mxu0 0.0
        %714 = vmatprep.subr.mxu0 0.0
        %715 = vmatpush1.msra.mxu0 0.0
        %716 = vmatprep.subr.mxu0 0.0
        %717 = vmatpush1.msra.mxu0 0.0
        %718 = vmatprep.subr.mxu0 0.0
        %719 = vmatpush1.msra.mxu0 0.0
        %720 = vmatprep.subr.mxu0 0.0
        %721 = vmatpush1.msra.mxu0 0.0
        %722 = vmatprep.subr.mxu0 0.0
        %723 = vmatpush1.msra.mxu0 0.0
        %724 = vmatprep.subr.mxu0 0.0
        %725 = vmatpush1.msra.mxu0 0.0
        %726 = vmatprep.subr.mxu0 0.0
        %727 = vmatpush1.msra.mxu0 0.0
        %728 = vmatprep.subr.mxu0 0.0
        %729 = vmatpush1.msra.mxu0 0.0
        %730 = vmatprep.subr.mxu0 0.0
        %731 = vmatpush1.msra.mxu0 0.0
        %732 = vmatprep.subr.mxu0 0.0
        %733 = vmatpush1.msra.mxu0 0.0
        %734 = vmatprep.subr.mxu0 0.0
        %735 = vmatpush1.msra.mxu0 0.0
        %736 = vmatprep.subr.mxu0 0.0
        %737 = vmatpush1.msra.mxu0 0.0
        %738 = vmatprep.subr.mxu0 0.0
        %739 = vmatpush1.msra.mxu0 0.0
        %740 = vmatprep.mubr.f32.mxu0 0.0
        %741 = vmatmul.mubr.f32.gmra.mrb[0].mxu0 %v674
        %v742 = vpop.f32.mrb[0].mxu0
        %v743 = vadd.f32 0.0, %v742
        %v744 = vpop.f32.mrb[0].mxu0
        %745 = vdwg.mxu0
        %746 = vrot.lane.b32.xlu0 %v575, 120
        %v747 = vpop.permute.xlu0 %746
        %748 = vrot.lane.b32.xlu0 %v575, 88
        %v749 = vpop.permute.xlu0 %748
        %v750 = vsel %vm583, %v747, 0
        %v752 = vsel %vm583, %v749, 0
        %754 = vmatprep.subr.mxu0 0.0
        %755 = vmatpush1.xpose.msra.mxu0 %v752
        %756 = vmatprep.subr.mxu0 0.0
        %757 = vmatpush1.xpose.msra.mxu0 0.0
        %758 = vmatprep.subr.mxu0 0.0
        %759 = vmatpush1.xpose.msra.mxu0 0.0
        %760 = vmatprep.subr.mxu0 0.0
        %761 = vmatpush1.xpose.msra.mxu0 0.0
        %762 = vmatprep.subr.mxu0 0.0
        %763 = vmatpush1.xpose.msra.mxu0 0.0
        %764 = vmatprep.subr.mxu0 0.0
        %765 = vmatpush1.xpose.msra.mxu0 0.0
        %766 = vmatprep.subr.mxu0 0.0
        %767 = vmatpush1.xpose.msra.mxu0 0.0
        %768 = vmatprep.subr.mxu0 0.0
        %769 = vmatpush1.xpose.msra.mxu0 0.0
        %770 = vmatprep.subr.mxu0 0.0
        %771 = vmatpush1.xpose.msra.mxu0 0.0
        %772 = vmatprep.subr.mxu0 0.0
        %773 = vmatpush1.xpose.msra.mxu0 0.0
        %774 = vmatprep.subr.mxu0 0.0
        %775 = vmatpush1.xpose.msra.mxu0 0.0
        %776 = vmatprep.subr.mxu0 0.0
        %777 = vmatpush1.xpose.msra.mxu0 0.0
        %778 = vmatprep.subr.mxu0 0.0
        %779 = vmatpush1.xpose.msra.mxu0 0.0
        %780 = vmatprep.subr.mxu0 0.0
        %781 = vmatpush1.xpose.msra.mxu0 0.0
        %782 = vmatprep.subr.mxu0 0.0
        %783 = vmatpush1.xpose.msra.mxu0 0.0
        %784 = vmatprep.subr.mxu0 0.0
        %785 = vmatpush1.xpose.msra.mxu0 0.0
        %786 = vmatprep.subr.mxu0 0.0
        %787 = vmatpush1.xpose.msra.mxu0 0.0
        %788 = vmatprep.subr.mxu0 0.0
        %789 = vmatpush1.xpose.msra.mxu0 0.0
        %790 = vmatprep.subr.mxu0 0.0
        %791 = vmatpush1.xpose.msra.mxu0 0.0
        %792 = vmatprep.subr.mxu0 0.0
        %793 = vmatpush1.xpose.msra.mxu0 0.0
        %794 = vmatprep.subr.mxu0 0.0
        %795 = vmatpush1.xpose.msra.mxu0 0.0
        %796 = vmatprep.subr.mxu0 0.0
        %797 = vmatpush1.xpose.msra.mxu0 0.0
        %798 = vmatprep.subr.mxu0 0.0
        %799 = vmatpush1.xpose.msra.mxu0 0.0
        %800 = vmatprep.subr.mxu0 0.0
        %801 = vmatpush1.xpose.msra.mxu0 0.0
        %802 = vmatprep.subr.mxu0 0.0
        %803 = vmatpush1.xpose.msra.mxu0 0.0
        %804 = vmatprep.subr.mxu0 0.0
        %805 = vmatpush1.xpose.msra.mxu0 0.0
        %806 = vmatprep.subr.mxu0 0.0
        %807 = vmatpush1.xpose.msra.mxu0 0.0
        %808 = vmatprep.subr.mxu0 0.0
        %809 = vmatpush1.xpose.msra.mxu0 0.0
        %810 = vmatprep.subr.mxu0 0.0
        %811 = vmatpush1.xpose.msra.mxu0 0.0
        %812 = vmatprep.subr.mxu0 0.0
        %813 = vmatpush1.xpose.msra.mxu0 0.0
        %814 = vmatprep.subr.mxu0 0.0
        %815 = vmatpush1.xpose.msra.mxu0 0.0
        %816 = vmatprep.subr.mxu0 0.0
        %817 = vmatpush1.xpose.msra.mxu0 0.0
        %818 = vmatprep.mubr.f32.mxu0 0.0
        %819 = vmatmul.mubr.f32.gmra.mrb[0].mxu0 %v750
        %v820 = vpop.f32.mrb[0].mxu0
        %v821 = vadd.f32 0.0, %v820
        %v822 = vpop.f32.mrb[0].mxu0
        %823 = vdwg.mxu0
        %v824 = vmul.f32 %v821, 0.35355338
        %v825 = vsel %vm583, %v824, -inf
        %826 = vmax.xlane.f32.xlu0 %v825
        %v827 = vpop.xlane.xlu0 %826
        %v828 = vsub.f32 %v824, %v827
        %v829 = vmul.f32 %v828, 1.442695
        %v830 = vpow.pop %v829
        %v831 = vsel %vm583, %v830, 0.0
        %832 = vadd.xlane.f32.xlu0 %v831
        %v833 = vpop.xlane.xlu0 %832
        %v834 = vrcp.pop %v833
        %v835 = vmul.f32 %v830, %v834
        %836 = vrot.lane.b32.xlu0 %v575, 56
        %v837 = vpop.permute.xlu0 %836
        %v840 = vsel %vm583, %v835, 0
        %842 = vmatprep.subr.mxu0 0.0
        %843 = vmatpush1.msra.mxu0 %v837
        %844 = vmatprep.subr.mxu0 0.0
        %845 = vmatpush1.msra.mxu0 0.0
        %846 = vmatprep.subr.mxu0 0.0
        %847 = vmatpush1.msra.mxu0 0.0
        %848 = vmatprep.subr.mxu0 0.0
        %849 = vmatpush1.msra.mxu0 0.0
        %850 = vmatprep.subr.mxu0 0.0
        %851 = vmatpush1.msra.mxu0 0.0
        %852 = vmatprep.subr.mxu0 0.0
        %853 = vmatpush1.msra.mxu0 0.0
        %854 = vmatprep.subr.mxu0 0.0
        %855 = vmatpush1.msra.mxu0 0.0
        %856 = vmatprep.subr.mxu0 0.0
        %857 = vmatpush1.msra.mxu0 0.0
        %858 = vmatprep.subr.mxu0 0.0
        %859 = vmatpush1.msra.mxu0 0.0
        %860 = vmatprep.subr.mxu0 0.0
        %861 = vmatpush1.msra.mxu0 0.0
        %862 = vmatprep.subr.mxu0 0.0
        %863 = vmatpush1.msra.mxu0 0.0
        %864 = vmatprep.subr.mxu0 0.0
        %865 = vmatpush1.msra.mxu0 0.0
        %866 = vmatprep.subr.mxu0 0.0
        %867 = vmatpush1.msra.mxu0 0.0
        %868 = vmatprep.subr.mxu0 0.0
        %869 = vmatpush1.msra.mxu0 0.0
        %870 = vmatprep.subr.mxu0 0.0
        %871 = vmatpush1.msra.mxu0 0.0
        %872 = vmatprep.subr.mxu0 0.0
        %873 = vmatpush1.msra.mxu0 0.0
        %874 = vmatprep.subr.mxu0 0.0
        %875 = vmatpush1.msra.mxu0 0.0
        %876 = vmatprep.subr.mxu0 0.0
        %877 = vmatpush1.msra.mxu0 0.0
        %878 = vmatprep.subr.mxu0 0.0
        %879 = vmatpush1.msra.mxu0 0.0
        %880 = vmatprep.subr.mxu0 0.0
        %881 = vmatpush1.msra.mxu0 0.0
        %882 = vmatprep.subr.mxu0 0.0
        %883 = vmatpush1.msra.mxu0 0.0
        %884 = vmatprep.subr.mxu0 0.0
        %885 = vmatpush1.msra.mxu0 0.0
        %886 = vmatprep.subr.mxu0 0.0
        %887 = vmatpush1.msra.mxu0 0.0
        %888 = vmatprep.subr.mxu0 0.0
        %889 = vmatpush1.msra.mxu0 0.0
        %890 = vmatprep.subr.mxu0 0.0
        %891 = vmatpush1.msra.mxu0 0.0
        %892 = vmatprep.subr.mxu0 0.0
        %893 = vmatpush1.msra.mxu0 0.0
        %894 = vmatprep.subr.mxu0 0.0
        %895 = vmatpush1.msra.mxu0 0.0
        %896 = vmatprep.subr.mxu0 0.0
        %897 = vmatpush1.msra.mxu0 0.0
        %898 = vmatprep.subr.mxu0 0.0
        %899 = vmatpush1.msra.mxu0 0.0
        %900 = vmatprep.subr.mxu0 0.0
        %901 = vmatpush1.msra.mxu0 0.0
        %902 = vmatprep.subr.mxu0 0.0
        %903 = vmatpush1.msra.mxu0 0.0
        %904 = vmatprep.subr.mxu0 0.0
        %905 = vmatpush1.msra.mxu0 0.0
        %906 = vmatprep.mubr.f32.mxu0 0.0
        %907 = vmatmul.mubr.f32.gmra.mrb[0].mxu0 %v840
        %v908 = vpop.f32.mrb[0].mxu0
        %v909 = vadd.f32 0.0, %v908
        %v910 = vpop.f32.mrb[0].mxu0
        %911 = vdwg.mxu0
        %912 = vrot.lane.b32.xlu0 %v575, 112
        %v913 = vpop.permute.xlu0 %912
        %914 = vrot.lane.b32.xlu0 %v575, 80
        %v915 = vpop.permute.xlu0 %914
        %v916 = vsel %vm583, %v913, 0
        %v918 = vsel %vm583, %v915, 0
        %920 = vmatprep.subr.mxu0 0.0
        %921 = vmatpush1.xpose.msra.mxu0 %v918
        %922 = vmatprep.subr.mxu0 0.0
        %923 = vmatpush1.xpose.msra.mxu0 0.0
        %924 = vmatprep.subr.mxu0 0.0
        %925 = vmatpush1.xpose.msra.mxu0 0.0
        %926 = vmatprep.subr.mxu0 0.0
        %927 = vmatpush1.xpose.msra.mxu0 0.0
        %928 = vmatprep.subr.mxu0 0.0
        %929 = vmatpush1.xpose.msra.mxu0 0.0
        %930 = vmatprep.subr.mxu0 0.0
        %931 = vmatpush1.xpose.msra.mxu0 0.0
        %932 = vmatprep.subr.mxu0 0.0
        %933 = vmatpush1.xpose.msra.mxu0 0.0
        %934 = vmatprep.subr.mxu0 0.0
        %935 = vmatpush1.xpose.msra.mxu0 0.0
        %936 = vmatprep.subr.mxu0 0.0
        %937 = vmatpush1.xpose.msra.mxu0 0.0
        %938 = vmatprep.subr.mxu0 0.0
        %939 = vmatpush1.xpose.msra.mxu0 0.0
        %940 = vmatprep.subr.mxu0 0.0
        %941 = vmatpush1.xpose.msra.mxu0 0.0
        %942 = vmatprep.subr.mxu0 0.0
        %943 = vmatpush1.xpose.msra.mxu0 0.0
        %944 = vmatprep.subr.mxu0 0.0
        %945 = vmatpush1.xpose.msra.mxu0 0.0
        %946 = vmatprep.subr.mxu0 0.0
        %947 = vmatpush1.xpose.msra.mxu0 0.0
        %948 = vmatprep.subr.mxu0 0.0
        %949 = vmatpush1.xpose.msra.mxu0 0.0
        %950 = vmatprep.subr.mxu0 0.0
        %951 = vmatpush1.xpose.msra.mxu0 0.0
        %952 = vmatprep.subr.mxu0 0.0
        %953 = vmatpush1.xpose.msra.mxu0 0.0
        %954 = vmatprep.subr.mxu0 0.0
        %955 = vmatpush1.xpose.msra.mxu0 0.0
        %956 = vmatprep.subr.mxu0 0.0
        %957 = vmatpush1.xpose.msra.mxu0 0.0
        %958 = vmatprep.subr.mxu0 0.0
        %959 = vmatpush1.xpose.msra.mxu0 0.0
        %960 = vmatprep.subr.mxu0 0.0
        %961 = vmatpush1.xpose.msra.mxu0 0.0
        %962 = vmatprep.subr.mxu0 0.0
        %963 = vmatpush1.xpose.msra.mxu0 0.0
        %964 = vmatprep.subr.mxu0 0.0
        %965 = vmatpush1.xpose.msra.mxu0 0.0
        %966 = vmatprep.subr.mxu0 0.0
        %967 = vmatpush1.xpose.msra.mxu0 0.0
        %968 = vmatprep.subr.mxu0 0.0
        %969 = vmatpush1.xpose.msra.mxu0 0.0
        %970 = vmatprep.subr.mxu0 0.0
        %971 = vmatpush1.xpose.msra.mxu0 0.0
        %972 = vmatprep.subr.mxu0 0.0
        %973 = vmatpush1.xpose.msra.mxu0 0.0
        %974 = vmatprep.subr.mxu0 0.0
        %975 = vmatpush1.xpose.msra.mxu0 0.0
        %976 = vmatprep.subr.mxu0 0.0
        %977 = vmatpush1.xpose.msra.mxu0 0.0
        %978 = vmatprep.subr.mxu0 0.0
        %979 = vmatpush1.xpose.msra.mxu0 0.0
        %980 = vmatprep.subr.mxu0 0.0
        %981 = vmatpush1.xpose.msra.mxu0 0.0
        %982 = vmatprep.subr.mxu0 0.0
        %983 = vmatpush1.xpose.msra.mxu0 0.0
        %984 = vmatprep.mubr.f32.mxu0 0.0
        %985 = vmatmul.mubr.f32.gmra.mrb[0].mxu0 %v916
        %v986 = vpop.f32.mrb[0].mxu0
        %v987 = vadd.f32 0.0, %v986
        %v988 = vpop.f32.mrb[0].mxu0
        %989 = vdwg.mxu0
        %v990 = vmul.f32 %v987, 0.35355338
        %v991 = vsel %vm583, %v990, -inf
        %992 = vmax.xlane.f32.xlu0 %v991
        %v993 = vpop.xlane.xlu0 %992
        %v994 = vsub.f32 %v990, %v993
        %v995 = vmul.f32 %v994, 1.442695
        %v996 = vpow.pop %v995
        %v997 = vsel %vm583, %v996, 0.0
        %998 = vadd.xlane.f32.xlu0 %v997
        %v999 = vpop.xlane.xlu0 %998
        %v1000 = vrcp.pop %v999
        %v1001 = vmul.f32 %v996, %v1000
        %1002 = vrot.lane.b32.xlu0 %v575, 48
        %v1003 = vpop.permute.xlu0 %1002
        %v1006 = vsel %vm583, %v1001, 0
        %1008 = vmatprep.subr.mxu0 0.0
        %1009 = vmatpush1.msra.mxu0 %v1003
        %1010 = vmatprep.subr.mxu0 0.0
        %1011 = vmatpush1.msra.mxu0 0.0
        %1012 = vmatprep.subr.mxu0 0.0
        %1013 = vmatpush1.msra.mxu0 0.0
        %1014 = vmatprep.subr.mxu0 0.0
        %1015 = vmatpush1.msra.mxu0 0.0
        %1016 = vmatprep.subr.mxu0 0.0
        %1017 = vmatpush1.msra.mxu0 0.0
        %1018 = vmatprep.subr.mxu0 0.0
        %1019 = vmatpush1.msra.mxu0 0.0
        %1020 = vmatprep.subr.mxu0 0.0
        %1021 = vmatpush1.msra.mxu0 0.0
        %1022 = vmatprep.subr.mxu0 0.0
        %1023 = vmatpush1.msra.mxu0 0.0
        %1024 = vmatprep.subr.mxu0 0.0
        %1025 = vmatpush1.msra.mxu0 0.0
        %1026 = vmatprep.subr.mxu0 0.0
        %1027 = vmatpush1.msra.mxu0 0.0
        %1028 = vmatprep.subr.mxu0 0.0
        %1029 = vmatpush1.msra.mxu0 0.0
        %1030 = vmatprep.subr.mxu0 0.0
        %1031 = vmatpush1.msra.mxu0 0.0
        %1032 = vmatprep.subr.mxu0 0.0
        %1033 = vmatpush1.msra.mxu0 0.0
        %1034 = vmatprep.subr.mxu0 0.0
        %1035 = vmatpush1.msra.mxu0 0.0
        %1036 = vmatprep.subr.mxu0 0.0
        %1037 = vmatpush1.msra.mxu0 0.0
        %1038 = vmatprep.subr.mxu0 0.0
        %1039 = vmatpush1.msra.mxu0 0.0
        %1040 = vmatprep.subr.mxu0 0.0
        %1041 = vmatpush1.msra.mxu0 0.0
        %1042 = vmatprep.subr.mxu0 0.0
        %1043 = vmatpush1.msra.mxu0 0.0
        %1044 = vmatprep.subr.mxu0 0.0
        %1045 = vmatpush1.msra.mxu0 0.0
        %1046 = vmatprep.subr.mxu0 0.0
        %1047 = vmatpush1.msra.mxu0 0.0
        %1048 = vmatprep.subr.mxu0 0.0
        %1049 = vmatpush1.msra.mxu0 0.0
        %1050 = vmatprep.subr.mxu0 0.0
        %1051 = vmatpush1.msra.mxu0 0.0
        %1052 = vmatprep.subr.mxu0 0.0
        %1053 = vmatpush1.msra.mxu0 0.0
        %1054 = vmatprep.subr.mxu0 0.0
        %1055 = vmatpush1.msra.mxu0 0.0
        %1056 = vmatprep.subr.mxu0 0.0
        %1057 = vmatpush1.msra.mxu0 0.0
        %1058 = vmatprep.subr.mxu0 0.0
        %1059 = vmatpush1.msra.mxu0 0.0
        %1060 = vmatprep.subr.mxu0 0.0
        %1061 = vmatpush1.msra.mxu0 0.0
        %1062 = vmatprep.subr.mxu0 0.0
        %1063 = vmatpush1.msra.mxu0 0.0
        %1064 = vmatprep.subr.mxu0 0.0
        %1065 = vmatpush1.msra.mxu0 0.0
        %1066 = vmatprep.subr.mxu0 0.0
        %1067 = vmatpush1.msra.mxu0 0.0
        %1068 = vmatprep.subr.mxu0 0.0
        %1069 = vmatpush1.msra.mxu0 0.0
        %1070 = vmatprep.subr.mxu0 0.0
        %1071 = vmatpush1.msra.mxu0 0.0
        %1072 = vmatprep.mubr.f32.mxu0 0.0
        %1073 = vmatmul.mubr.f32.gmra.mrb[0].mxu0 %v1006
        %v1074 = vpop.f32.mrb[0].mxu0
        %v1075 = vadd.f32 0.0, %v1074
        %v1076 = vpop.f32.mrb[0].mxu0
        %1077 = vdwg.mxu0
        %1078 = vrot.lane.b32.xlu0 %v575, 104
        %v1079 = vpop.permute.xlu0 %1078
        %1080 = vrot.lane.b32.xlu0 %v575, 72
        %v1081 = vpop.permute.xlu0 %1080
        %v1082 = vsel %vm583, %v1079, 0
        %v1084 = vsel %vm583, %v1081, 0
        %1086 = vmatprep.subr.mxu0 0.0
        %1087 = vmatpush1.xpose.msra.mxu0 %v1084
        %1088 = vmatprep.subr.mxu0 0.0
        %1089 = vmatpush1.xpose.msra.mxu0 0.0
        %1090 = vmatprep.subr.mxu0 0.0
        %1091 = vmatpush1.xpose.msra.mxu0 0.0
        %1092 = vmatprep.subr.mxu0 0.0
        %1093 = vmatpush1.xpose.msra.mxu0 0.0
        %1094 = vmatprep.subr.mxu0 0.0
        %1095 = vmatpush1.xpose.msra.mxu0 0.0
        %1096 = vmatprep.subr.mxu0 0.0
        %1097 = vmatpush1.xpose.msra.mxu0 0.0
        %1098 = vmatprep.subr.mxu0 0.0
        %1099 = vmatpush1.xpose.msra.mxu0 0.0
        %1100 = vmatprep.subr.mxu0 0.0
        %1101 = vmatpush1.xpose.msra.mxu0 0.0
        %1102 = vmatprep.subr.mxu0 0.0
        %1103 = vmatpush1.xpose.msra.mxu0 0.0
        %1104 = vmatprep.subr.mxu0 0.0
        %1105 = vmatpush1.xpose.msra.mxu0 0.0
        %1106 = vmatprep.subr.mxu0 0.0
        %1107 = vmatpush1.xpose.msra.mxu0 0.0
        %1108 = vmatprep.subr.mxu0 0.0
        %1109 = vmatpush1.xpose.msra.mxu0 0.0
        %1110 = vmatprep.subr.mxu0 0.0
        %1111 = vmatpush1.xpose.msra.mxu0 0.0
        %1112 = vmatprep.subr.mxu0 0.0
        %1113 = vmatpush1.xpose.msra.mxu0 0.0
        %1114 = vmatprep.subr.mxu0 0.0
        %1115 = vmatpush1.xpose.msra.mxu0 0.0
        %1116 = vmatprep.subr.mxu0 0.0
        %1117 = vmatpush1.xpose.msra.mxu0 0.0
        %1118 = vmatprep.subr.mxu0 0.0
        %1119 = vmatpush1.xpose.msra.mxu0 0.0
        %1120 = vmatprep.subr.mxu0 0.0
        %1121 = vmatpush1.xpose.msra.mxu0 0.0
        %1122 = vmatprep.subr.mxu0 0.0
        %1123 = vmatpush1.xpose.msra.mxu0 0.0
        %1124 = vmatprep.subr.mxu0 0.0
        %1125 = vmatpush1.xpose.msra.mxu0 0.0
        %1126 = vmatprep.subr.mxu0 0.0
        %1127 = vmatpush1.xpose.msra.mxu0 0.0
        %1128 = vmatprep.subr.mxu0 0.0
        %1129 = vmatpush1.xpose.msra.mxu0 0.0
        %1130 = vmatprep.subr.mxu0 0.0
        %1131 = vmatpush1.xpose.msra.mxu0 0.0
        %1132 = vmatprep.subr.mxu0 0.0
        %1133 = vmatpush1.xpose.msra.mxu0 0.0
        %1134 = vmatprep.subr.mxu0 0.0
        %1135 = vmatpush1.xpose.msra.mxu0 0.0
        %1136 = vmatprep.subr.mxu0 0.0
        %1137 = vmatpush1.xpose.msra.mxu0 0.0
        %1138 = vmatprep.subr.mxu0 0.0
        %1139 = vmatpush1.xpose.msra.mxu0 0.0
        %1140 = vmatprep.subr.mxu0 0.0
        %1141 = vmatpush1.xpose.msra.mxu0 0.0
        %1142 = vmatprep.subr.mxu0 0.0
        %1143 = vmatpush1.xpose.msra.mxu0 0.0
        %1144 = vmatprep.subr.mxu0 0.0
        %1145 = vmatpush1.xpose.msra.mxu0 0.0
        %1146 = vmatprep.subr.mxu0 0.0
        %1147 = vmatpush1.xpose.msra.mxu0 0.0
        %1148 = vmatprep.subr.mxu0 0.0
        %1149 = vmatpush1.xpose.msra.mxu0 0.0
        %1150 = vmatprep.mubr.f32.mxu0 0.0
        %1151 = vmatmul.mubr.f32.gmra.mrb[0].mxu0 %v1082
        %v1152 = vpop.f32.mrb[0].mxu0
        %v1153 = vadd.f32 0.0, %v1152
        %v1154 = vpop.f32.mrb[0].mxu0
        %1155 = vdwg.mxu0
        %v1156 = vmul.f32 %v1153, 0.35355338
        %v1157 = vsel %vm583, %v1156, -inf
        %1158 = vmax.xlane.f32.xlu0 %v1157
        %v1159 = vpop.xlane.xlu0 %1158
        %v1160 = vsub.f32 %v1156, %v1159
        %v1161 = vmul.f32 %v1160, 1.442695
        %v1162 = vpow.pop %v1161
        %v1163 = vsel %vm583, %v1162, 0.0
        %1164 = vadd.xlane.f32.xlu0 %v1163
        %v1165 = vpop.xlane.xlu0 %1164
        %v1166 = vrcp.pop %v1165
        %v1167 = vmul.f32 %v1162, %v1166
        %1168 = vrot.lane.b32.xlu0 %v575, 40
        %v1169 = vpop.permute.xlu0 %1168
        %v1172 = vsel %vm583, %v1167, 0
        %1174 = vmatprep.subr.mxu0 0.0
        %1175 = vmatpush1.msra.mxu0 %v1169
        %1176 = vmatprep.subr.mxu0 0.0
        %1177 = vmatpush1.msra.mxu0 0.0
        %1178 = vmatprep.subr.mxu0 0.0
        %1179 = vmatpush1.msra.mxu0 0.0
        %1180 = vmatprep.subr.mxu0 0.0
        %1181 = vmatpush1.msra.mxu0 0.0
        %1182 = vmatprep.subr.mxu0 0.0
        %1183 = vmatpush1.msra.mxu0 0.0
        %1184 = vmatprep.subr.mxu0 0.0
        %1185 = vmatpush1.msra.mxu0 0.0
        %1186 = vmatprep.subr.mxu0 0.0
        %1187 = vmatpush1.msra.mxu0 0.0
        %1188 = vmatprep.subr.mxu0 0.0
        %1189 = vmatpush1.msra.mxu0 0.0
        %1190 = vmatprep.subr.mxu0 0.0
        %1191 = vmatpush1.msra.mxu0 0.0
        %1192 = vmatprep.subr.mxu0 0.0
        %1193 = vmatpush1.msra.mxu0 0.0
        %1194 = vmatprep.subr.mxu0 0.0
        %1195 = vmatpush1.msra.mxu0 0.0
        %1196 = vmatprep.subr.mxu0 0.0
        %1197 = vmatpush1.msra.mxu0 0.0
        %1198 = vmatprep.subr.mxu0 0.0
        %1199 = vmatpush1.msra.mxu0 0.0
        %1200 = vmatprep.subr.mxu0 0.0
        %1201 = vmatpush1.msra.mxu0 0.0
        %1202 = vmatprep.subr.mxu0 0.0
        %1203 = vmatpush1.msra.mxu0 0.0
        %1204 = vmatprep.subr.mxu0 0.0
        %1205 = vmatpush1.msra.mxu0 0.0
        %1206 = vmatprep.subr.mxu0 0.0
        %1207 = vmatpush1.msra.mxu0 0.0
        %1208 = vmatprep.subr.mxu0 0.0
        %1209 = vmatpush1.msra.mxu0 0.0
        %1210 = vmatprep.subr.mxu0 0.0
        %1211 = vmatpush1.msra.mxu0 0.0
        %1212 = vmatprep.subr.mxu0 0.0
        %1213 = vmatpush1.msra.mxu0 0.0
        %1214 = vmatprep.subr.mxu0 0.0
        %1215 = vmatpush1.msra.mxu0 0.0
        %1216 = vmatprep.subr.mxu0 0.0
        %1217 = vmatpush1.msra.mxu0 0.0
        %1218 = vmatprep.subr.mxu0 0.0
        %1219 = vmatpush1.msra.mxu0 0.0
        %1220 = vmatprep.subr.mxu0 0.0
        %1221 = vmatpush1.msra.mxu0 0.0
        %1222 = vmatprep.subr.mxu0 0.0
        %1223 = vmatpush1.msra.mxu0 0.0
        %1224 = vmatprep.subr.mxu0 0.0
        %1225 = vmatpush1.msra.mxu0 0.0
        %1226 = vmatprep.subr.mxu0 0.0
        %1227 = vmatpush1.msra.mxu0 0.0
        %1228 = vmatprep.subr.mxu0 0.0
        %1229 = vmatpush1.msra.mxu0 0.0
        %1230 = vmatprep.subr.mxu0 0.0
        %1231 = vmatpush1.msra.mxu0 0.0
        %1232 = vmatprep.subr.mxu0 0.0
        %1233 = vmatpush1.msra.mxu0 0.0
        %1234 = vmatprep.subr.mxu0 0.0
        %1235 = vmatpush1.msra.mxu0 0.0
        %1236 = vmatprep.subr.mxu0 0.0
        %1237 = vmatpush1.msra.mxu0 0.0
        %1238 = vmatprep.mubr.f32.mxu0 0.0
        %1239 = vmatmul.mubr.f32.gmra.mrb[0].mxu0 %v1172
        %v1240 = vpop.f32.mrb[0].mxu0
        %v1241 = vadd.f32 0.0, %v1240
        %v1242 = vpop.f32.mrb[0].mxu0
        %1243 = vdwg.mxu0
        %1245 = vrot.lane.b32.xlu0 %v909, 8
        %v1246 = vpop.permute.xlu0 %1245
        %1249 = vrot.lane.b32.xlu0 %v1075, 16
        %v1250 = vpop.permute.xlu0 %1249
        %1253 = vrot.lane.b32.xlu0 %v1241, 24
        %v1254 = vpop.permute.xlu0 %1253
        %v1256 = vsel %vm583, %v743, %v1246
        %vm1257 = vcmask 130048
        %v1258 = vsel %vm1257, %v1256, %v1250
        %vm1259 = vcmask 195584
        %v1260 = vsel %vm1259, %v1258, %v1254
        %v1261 = vpack.c.bf16 %v1260, %v1260
        %v1262 = vld [vmem:[%s4] sm:$0xf]
        %v1263 = vld [vmem:[%s4 + $0x4] sm:$0xf]
        %v1264 = vld [vmem:[%s4 + $0x8] sm:$0xf]
        %v1265 = vld [vmem:[%s4 + $0xc] sm:$0xf]
        %v1266 = vld [vmem:[#allocation5] sm:$0x1]
        %v1268 = vlaneseq
        %v1269 = vshrl.u32 %v1268, 7
        %v1270 = vsub.s32 0, %v1269
        %v1271 = vrot.slane %v1266, %v1270
        %v1277 = vunpack.c.l.b16 %v1262
        %v1278 = vunpack.c.l.b16 %v1263
        %v1279 = vunpack.c.l.b16 %v1264
        %v1280 = vunpack.c.l.b16 %v1265
        %v1281 = vpack.c.b16 %v1278, %v1277
        %v1282 = vpack.c.b16 %v1280, %v1279
        %v1286 = vsel %vm491, %v1261, 0
        %1288 = vmatprep.subr.bf16.mxu0 0
        %1289 = vmatpush1.bf16.msra.mxu0 %v1281
        %1290 = vmatprep.subr.bf16.mxu0 0
        %1291 = vmatpush1.bf16.msra.mxu0 %v1282
        %1292 = vmatprep.subr.bf16.mxu0 0
        %1293 = vmatpush1.bf16.msra.mxu0 0
        %1294 = vmatprep.subr.bf16.mxu0 0
        %1295 = vmatpush1.bf16.msra.mxu0 0
        %1296 = vmatprep.subr.bf16.mxu0 0
        %1297 = vmatpush1.bf16.msra.mxu0 0
        %1298 = vmatprep.subr.bf16.mxu0 0
        %1299 = vmatpush1.bf16.msra.mxu0 0
        %1300 = vmatprep.subr.bf16.mxu0 0
        %1301 = vmatpush1.bf16.msra.mxu0 0
        %1302 = vmatprep.subr.bf16.mxu0 0
        %1303 = vmatpush1.bf16.msra.mxu0 0
        %1304 = vmatprep.subr.bf16.mxu0 0
        %1305 = vmatpush1.bf16.msra.mxu0 0
        %1306 = vmatprep.subr.bf16.mxu0 0
        %1307 = vmatpush1.bf16.msra.mxu0 0
        %1308 = vmatprep.subr.bf16.mxu0 0
        %1309 = vmatpush1.bf16.msra.mxu0 0
        %1310 = vmatprep.subr.bf16.mxu0 0
        %1311 = vmatpush1.bf16.msra.mxu0 0
        %1312 = vmatprep.subr.bf16.mxu0 0
        %1313 = vmatpush1.bf16.msra.mxu0 0
        %1314 = vmatprep.subr.bf16.mxu0 0
        %1315 = vmatpush1.bf16.msra.mxu0 0
        %1316 = vmatprep.subr.bf16.mxu0 0
        %1317 = vmatpush1.bf16.msra.mxu0 0
        %1318 = vmatprep.subr.bf16.mxu0 0
        %1319 = vmatpush1.bf16.msra.mxu0 0
        %1320 = vmatprep.mubr.bf16.mxu0 0
        %1321 = vmatmul.mubr.bf16.gmra.mrb[0].mxu0 %v1286
        %v1322 = vpop.f32.mrb[0].mxu0
        %v1323 = vadd.f32 %v1271, %v1322
        %v1324 = vpop.f32.mrb[0].mxu0
        %v1325 = vpop.f32.mrb[0].mxu0
        %v1326 = vpop.f32.mrb[0].mxu0
        %1327 = vdwg.mxu0
        %v1328 = vadd.f32 %v488, %v1323
        %v1329 = vld [vmem:[#allocation7] sm:$0x1]
        %v1330 = vld [vmem:[#allocation8] sm:$0x1]
        %v1331 = vsel %vm491, %v1328, 0.0
        %1332 = vadd.xlane.f32.xlu0 %v1331
        %v1333 = vpop.xlane.xlu0 %1332
        %v1334 = vmul.f32 %v1333, %v495
        %v1335 = vsub.f32 %v1328, %v1334
        %v1336 = vmul.f32 %v1335, %v1335
        %v1337 = vsel %vm491, %v1336, 0.0
        %1338 = vadd.xlane.f32.xlu0 %v1337
        %v1339 = vpop.xlane.xlu0 %1338
        %v1340 = vmul.f32 %v1339, %v495
        %v1341 = vadd.f32 %v1340, 1e-05
        %v1342 = vrsqrt.pop %v1341
        %v1343 = vmul.f32 %v1335, %v1342
        %v1345 = vlaneseq
        %v1346 = vshrl.u32 %v1345, 7
        %v1347 = vsub.s32 0, %v1346
        %v1348 = vrot.slane %v1329, %v1347
        %v1350 = vmul.f32 %v1343, %v1348
        %v1352 = vlaneseq
        %v1353 = vshrl.u32 %v1352, 7
        %v1354 = vsub.s32 0, %v1353
        %v1355 = vrot.slane %v1330, %v1354
        %v1357 = vadd.f32 %v1350, %v1355
        %v1358 = vpack.c.bf16 %v1357, %v1357
        %v1359 = vld [vmem:[%s8] sm:$0xf]
        %v1360 = vld [vmem:[%s8 + $0x4] sm:$0xf]
        %v1361 = vld [vmem:[%s8 + $0x8] sm:$0xf]
        %v1362 = vld [vmem:[%s8 + $0xc] sm:$0xf]
        %v1363 = vld [vmem:[#allocation10] sm:$0x1]
        %v1365 = vlaneseq
        %v1366 = vshrl.u32 %v1365, 7
        %v1367 = vsub.s32 0, %v1366
        %v1368 = vrot.slane %v1363, %v1367
        %v1374 = vunpack.c.l.b16 %v1359
        %v1375 = vunpack.c.l.b16 %v1360
        %v1376 = vunpack.c.l.b16 %v1361
        %v1377 = vunpack.c.l.b16 %v1362
        %v1378 = vpack.c.b16 %v1375, %v1374
        %v1379 = vpack.c.b16 %v1377, %v1376
        %v1383 = vsel %vm491, %v1358, 0
        %1385 = vmatprep.subr.bf16.mxu0 0
        %1386 = vmatpush1.bf16.msra.mxu0 %v1378
        %1387 = vmatprep.subr.bf16.mxu0 0
        %1388 = vmatpush1.bf16.msra.mxu0 %v1379
        %1389 = vmatprep.subr.bf16.mxu0 0
        %1390 = vmatpush1.bf16.msra.mxu0 0
        %1391 = vmatprep.subr.bf16.mxu0 0
        %1392 = vmatpush1.bf16.msra.mxu0 0
        %1393 = vmatprep.subr.bf16.mxu0 0
        %1394 = vmatpush1.bf16.msra.mxu0 0
        %1395 = vmatprep.subr.bf16.mxu0 0
        %1396 = vmatpush1.bf16.msra.mxu0 0
        %1397 = vmatprep.subr.bf16.mxu0 0
        %1398 = vmatpush1.bf16.msra.mxu0 0
        %1399 = vmatprep.subr.bf16.mxu0 0
        %1400 = vmatpush1.bf16.msra.mxu0 0
        %1401 = vmatprep.subr.bf16.mxu0 0
        %1402 = vmatpush1.bf16.msra.mxu0 0
        %1403 = vmatprep.subr.bf16.mxu0 0
        %1404 = vmatpush1.bf16.msra.mxu0 0
        %1405 = vmatprep.subr.bf16.mxu0 0
        %1406 = vmatpush1.bf16.msra.mxu0 0
        %1407 = vmatprep.subr.bf16.mxu0 0
        %1408 = vmatpush1.bf16.msra.mxu0 0
        %1409 = vmatprep.subr.bf16.mxu0 0
        %1410 = vmatpush1.bf16.msra.mxu0 0
        %1411 = vmatprep.subr.bf16.mxu0 0
        %1412 = vmatpush1.bf16.msra.mxu0 0
        %1413 = vmatprep.subr.bf16.mxu0 0
        %1414 = vmatpush1.bf16.msra.mxu0 0
        %1415 = vmatprep.subr.bf16.mxu0 0
        %1416 = vmatpush1.bf16.msra.mxu0 0
        %1417 = vmatprep.mubr.bf16.mxu0 0
        %1418 = vmatmul.mubr.bf16.gmra.mrb[0].mxu0 %v1383
        %v1419 = vpop.f32.mrb[0].mxu0
        %v1420 = vadd.f32 %v1368, %v1419
        %v1421 = vpop.f32.mrb[0].mxu0
        %v1422 = vpop.f32.mrb[0].mxu0
        %v1423 = vpop.f32.mrb[0].mxu0
        %1424 = vdwg.mxu0
        %v1425 = vmax.f32 %v1420, 0.0
        %v1426 = vpack.c.bf16 %v1425, %v1425
        %v1427 = vld [vmem:[%s10] sm:$0xf]
        %v1428 = vld [vmem:[%s10 + $0x4] sm:$0xf]
        %v1429 = vld [vmem:[%s10 + $0x8] sm:$0xf]
        %v1430 = vld [vmem:[%s10 + $0xc] sm:$0xf]
        %v1431 = vld [vmem:[%s10 + $0x10] sm:$0xf]
        %v1432 = vld [vmem:[%s10 + $0x14] sm:$0xf]
        %v1433 = vld [vmem:[%s10 + $0x18] sm:$0xf]
        %v1434 = vld [vmem:[%s10 + $0x1c] sm:$0xf]
        %v1443 = vunpack.c.l.b16 %v1427
        %v1444 = vunpack.c.l.b16 %v1428
        %v1445 = vunpack.c.l.b16 %v1429
        %v1446 = vunpack.c.l.b16 %v1430
        %v1447 = vunpack.c.l.b16 %v1431
        %v1448 = vunpack.c.l.b16 %v1432
        %v1449 = vunpack.c.l.b16 %v1433
        %v1450 = vunpack.c.l.b16 %v1434
        %v1451 = vpack.c.b16 %v1444, %v1443
        %v1452 = vpack.c.b16 %v1446, %v1445
        %v1453 = vpack.c.b16 %v1448, %v1447
        %v1454 = vpack.c.b16 %v1450, %v1449
        %vm1459 = vcmask 523264
        %v1461 = vsel %vm1459, %v1426, 0
        %1463 = vmatprep.subr.bf16.mxu0 0
        %1464 = vmatpush1.bf16.msra.mxu0 %v1451
        %1465 = vmatprep.subr.bf16.mxu0 0
        %1466 = vmatpush1.bf16.msra.mxu0 %v1452
        %1467 = vmatprep.subr.bf16.mxu0 0
        %1468 = vmatpush1.bf16.msra.mxu0 %v1453
        %1469 = vmatprep.subr.bf16.mxu0 0
        %1470 = vmatpush1.bf16.msra.mxu0 %v1454
        %1471 = vmatprep.subr.bf16.mxu0 0
        %1472 = vmatpush1.bf16.msra.mxu0 0
        %1473 = vmatprep.subr.bf16.mxu0 0
        %1474 = vmatpush1.bf16.msra.mxu0 0
        %1475 = vmatprep.subr.bf16.mxu0 0
        %1476 = vmatpush1.bf16.msra.mxu0 0
        %1477 = vmatprep.subr.bf16.mxu0 0
        %1478 = vmatpush1.bf16.msra.mxu0 0
        %1479 = vmatprep.subr.bf16.mxu0 0
        %1480 = vmatpush1.bf16.msra.mxu0 0
        %1481 = vmatprep.subr.bf16.mxu0 0
        %1482 = vmatpush1.bf16.msra.mxu0 0
        %1483 = vmatprep.subr.bf16.mxu0 0
        %1484 = vmatpush1.bf16.msra.mxu0 0
        %1485 = vmatprep.subr.bf16.mxu0 0
        %1486 = vmatpush1.bf16.msra.mxu0 0
        %1487 = vmatprep.subr.bf16.mxu0 0
        %1488 = vmatpush1.bf16.msra.mxu0 0
        %1489 = vmatprep.subr.bf16.mxu0 0
        %1490 = vmatpush1.bf16.msra.mxu0 0
        %1491 = vmatprep.subr.bf16.mxu0 0
        %1492 = vmatpush1.bf16.msra.mxu0 0
        %1493 = vmatprep.subr.bf16.mxu0 0
        %1494 = vmatpush1.bf16.msra.mxu0 0
        %1495 = vmatprep.mubr.bf16.mxu0 0
        %1496 = vmatmul.mubr.bf16.gmra.mrb[0].mxu0 %v1461
        %v1497 = vpop.f32.mrb[0].mxu0
        %v1498 = vadd.f32 0.0, %v1497
        %v1499 = vpop.f32.mrb[0].mxu0
        %v1500 = vpop.f32.mrb[0].mxu0
        %v1501 = vpop.f32.mrb[0].mxu0
        %1502 = vdwg.mxu0
        %v1503 = vadd.f32 %v1328, %v1498
        %v1504 = vld [vmem:[%s11] sm:$0x1]
        %v1506 = vlaneseq
        %v1507 = vshrl.u32 %v1506, 7
        %v1508 = vsub.s32 0, %v1507
        %v1509 = vrot.slane %v1504, %v1508
        %v1511 = vadd.f32 %v1503, %v1509
        %s1512 = scalar_lea.vmem %s1, 1
        %v1513 = vld [vmem:[%s1512] sm:$0x1]
        %s1514 = scalar_lea.vmem %s2, 1
        %v1515 = vld [vmem:[%s1514] sm:$0x1]
        %v1516 = vsel %vm491, %v1511, 0.0
        %1517 = vadd.xlane.f32.xlu0 %v1516
        %v1518 = vpop.xlane.xlu0 %1517
        %v1519 = vmul.f32 %v1518, %v495
        %v1520 = vsub.f32 %v1511, %v1519
        %v1521 = vmul.f32 %v1520, %v1520
        %v1522 = vsel %vm491, %v1521, 0.0
        %1523 = vadd.xlane.f32.xlu0 %v1522
        %v1524 = vpop.xlane.xlu0 %1523
        %v1525 = vmul.f32 %v1524, %v495
        %v1526 = vadd.f32 %v1525, 1e-05
        %v1527 = vrsqrt.pop %v1526
        %v1528 = vmul.f32 %v1520, %v1527
        %v1530 = vlaneseq
        %v1531 = vshrl.u32 %v1530, 7
        %v1532 = vsub.s32 0, %v1531
        %v1533 = vrot.slane %v1513, %v1532
        %v1535 = vmul.f32 %v1528, %v1533
        %v1537 = vlaneseq
        %v1538 = vshrl.u32 %v1537, 7
        %v1539 = vsub.s32 0, %v1538
        %v1540 = vrot.slane %v1515, %v1539
        %v1542 = vadd.f32 %v1535, %v1540
        %v1543 = vpack.c.bf16 %v1542, %v1542
        %s1544 = scalar_lea.vmem %s3, 16
        %v1545 = vld [vmem:[%s1544] sm:$0xf]
        %v1546 = vld [vmem:[%s1544 + $0x4] sm:$0xf]
        %v1547 = vld [vmem:[%s1544 + $0x8] sm:$0xf]
        %v1548 = vld [vmem:[%s1544 + $0xc] sm:$0xf]
        %v1553 = vunpack.c.l.b16 %v1545
        %v1554 = vunpack.c.l.b16 %v1546
        %v1555 = vunpack.c.l.b16 %v1547
        %v1556 = vunpack.c.l.b16 %v1548
        %v1557 = vpack.c.b16 %v1554, %v1553
        %v1558 = vpack.c.b16 %v1556, %v1555
        %v1562 = vsel %vm491, %v1543, 0
        %1564 = vmatprep.subr.bf16.mxu0 0
        %1565 = vmatpush1.bf16.msra.mxu0 %v1557
        %1566 = vmatprep.subr.bf16.mxu0 0
        %1567 = vmatpush1.bf16.msra.mxu0 %v1558
        %1568 = vmatprep.subr.bf16.mxu0 0
        %1569 = vmatpush1.bf16.msra.mxu0 0
        %1570 = vmatprep.subr.bf16.mxu0 0
        %1571 = vmatpush1.bf16.msra.mxu0 0
        %1572 = vmatprep.subr.bf16.mxu0 0
        %1573 = vmatpush1.bf16.msra.mxu0 0
        %1574 = vmatprep.subr.bf16.mxu0 0
        %1575 = vmatpush1.bf16.msra.mxu0 0
        %1576 = vmatprep.subr.bf16.mxu0 0
        %1577 = vmatpush1.bf16.msra.mxu0 0
        %1578 = vmatprep.subr.bf16.mxu0 0
        %1579 = vmatpush1.bf16.msra.mxu0 0
        %1580 = vmatprep.subr.bf16.mxu0 0
        %1581 = vmatpush1.bf16.msra.mxu0 0
        %1582 = vmatprep.subr.bf16.mxu0 0
        %1583 = vmatpush1.bf16.msra.mxu0 0
        %1584 = vmatprep.subr.bf16.mxu0 0
        %1585 = vmatpush1.bf16.msra.mxu0 0
        %1586 = vmatprep.subr.bf16.mxu0 0
        %1587 = vmatpush1.bf16.msra.mxu0 0
        %1588 = vmatprep.subr.bf16.mxu0 0
        %1589 = vmatpush1.bf16.msra.mxu0 0
        %1590 = vmatprep.subr.bf16.mxu0 0
        %1591 = vmatpush1.bf16.msra.mxu0 0
        %1592 = vmatprep.subr.bf16.mxu0 0
        %1593 = vmatpush1.bf16.msra.mxu0 0
        %1594 = vmatprep.subr.bf16.mxu0 0
        %1595 = vmatpush1.bf16.msra.mxu0 0
        %1596 = vmatprep.mubr.bf16.mxu0 0
        %1597 = vmatmul.mubr.bf16.gmra.mrb[0].mxu0 %v1562
        %v1598 = vpop.f32.mrb[0].mxu0
        %v1599 = vadd.f32 0.0, %v1598
        %v1600 = vpop.f32.mrb[0].mxu0
        %v1601 = vpop.f32.mrb[0].mxu0
        %v1602 = vpop.f32.mrb[0].mxu0
        %1603 = vdwg.mxu0
        %1605 = vrot.lane.b32.xlu0 %v1599, 96
        %v1606 = vpop.permute.xlu0 %1605
        %v1607 = vsel %vm583, %v1599, 0
        %v1609 = vsel %vm583, %v1606, 0
        %1611 = vmatprep.subr.mxu0 0.0
        %1612 = vmatpush1.xpose.msra.mxu0 %v1609
        %1613 = vmatprep.subr.mxu0 0.0
        %1614 = vmatpush1.xpose.msra.mxu0 0.0
        %1615 = vmatprep.subr.mxu0 0.0
        %1616 = vmatpush1.xpose.msra.mxu0 0.0
        %1617 = vmatprep.subr.mxu0 0.0
        %1618 = vmatpush1.xpose.msra.mxu0 0.0
        %1619 = vmatprep.subr.mxu0 0.0
        %1620 = vmatpush1.xpose.msra.mxu0 0.0
        %1621 = vmatprep.subr.mxu0 0.0
        %1622 = vmatpush1.xpose.msra.mxu0 0.0
        %1623 = vmatprep.subr.mxu0 0.0
        %1624 = vmatpush1.xpose.msra.mxu0 0.0
        %1625 = vmatprep.subr.mxu0 0.0
        %1626 = vmatpush1.xpose.msra.mxu0 0.0
        %1627 = vmatprep.subr.mxu0 0.0
        %1628 = vmatpush1.xpose.msra.mxu0 0.0
        %1629 = vmatprep.subr.mxu0 0.0
        %1630 = vmatpush1.xpose.msra.mxu0 0.0
        %1631 = vmatprep.subr.mxu0 0.0
        %1632 = vmatpush1.xpose.msra.mxu0 0.0
        %1633 = vmatprep.subr.mxu0 0.0
        %1634 = vmatpush1.xpose.msra.mxu0 0.0
        %1635 = vmatprep.subr.mxu0 0.0
        %1636 = vmatpush1.xpose.msra.mxu0 0.0
        %1637 = vmatprep.subr.mxu0 0.0
        %1638 = vmatpush1.xpose.msra.mxu0 0.0
        %1639 = vmatprep.subr.mxu0 0.0
        %1640 = vmatpush1.xpose.msra.mxu0 0.0
        %1641 = vmatprep.subr.mxu0 0.0
        %1642 = vmatpush1.xpose.msra.mxu0 0.0
        %1643 = vmatprep.subr.mxu0 0.0
        %1644 = vmatpush1.xpose.msra.mxu0 0.0
        %1645 = vmatprep.subr.mxu0 0.0
        %1646 = vmatpush1.xpose.msra.mxu0 0.0
        %1647 = vmatprep.subr.mxu0 0.0
        %1648 = vmatpush1.xpose.msra.mxu0 0.0
        %1649 = vmatprep.subr.mxu0 0.0
        %1650 = vmatpush1.xpose.msra.mxu0 0.0
        %1651 = vmatprep.subr.mxu0 0.0
        %1652 = vmatpush1.xpose.msra.mxu0 0.0
        %1653 = vmatprep.subr.mxu0 0.0
        %1654 = vmatpush1.xpose.msra.mxu0 0.0
        %1655 = vmatprep.subr.mxu0 0.0
        %1656 = vmatpush1.xpose.msra.mxu0 0.0
        %1657 = vmatprep.subr.mxu0 0.0
        %1658 = vmatpush1.xpose.msra.mxu0 0.0
        %1659 = vmatprep.subr.mxu0 0.0
        %1660 = vmatpush1.xpose.msra.mxu0 0.0
        %1661 = vmatprep.subr.mxu0 0.0
        %1662 = vmatpush1.xpose.msra.mxu0 0.0
        %1663 = vmatprep.subr.mxu0 0.0
        %1664 = vmatpush1.xpose.msra.mxu0 0.0
        %1665 = vmatprep.subr.mxu0 0.0
        %1666 = vmatpush1.xpose.msra.mxu0 0.0
        %1667 = vmatprep.subr.mxu0 0.0
        %1668 = vmatpush1.xpose.msra.mxu0 0.0
        %1669 = vmatprep.subr.mxu0 0.0
        %1670 = vmatpush1.xpose.msra.mxu0 0.0
        %1671 = vmatprep.subr.mxu0 0.0
        %1672 = vmatpush1.xpose.msra.mxu0 0.0
        %1673 = vmatprep.subr.mxu0 0.0
        %1674 = vmatpush1.xpose.msra.mxu0 0.0
        %1675 = vmatprep.mubr.f32.mxu0 0.0
        %1676 = vmatmul.mubr.f32.gmra.mrb[0].mxu0 %v1607
        %v1677 = vpop.f32.mrb[0].mxu0
        %v1678 = vadd.f32 0.0, %v1677
        %v1679 = vpop.f32.mrb[0].mxu0
        %1680 = vdwg.mxu0
        %v1681 = vmul.f32 %v1678, 0.35355338
        %v1682 = vsel %vm583, %v1681, -inf
        %1683 = vmax.xlane.f32.xlu0 %v1682
        %v1684 = vpop.xlane.xlu0 %1683
        %v1685 = vsub.f32 %v1681, %v1684
        %v1686 = vmul.f32 %v1685, 1.442695
        %v1687 = vpow.pop %v1686
        %v1688 = vsel %vm583, %v1687, 0.0
        %1689 = vadd.xlane.f32.xlu0 %v1688
        %v1690 = vpop.xlane.xlu0 %1689
        %v1691 = vrcp.pop %v1690
        %v1692 = vmul.f32 %v1687, %v1691
        %1693 = vrot.lane.b32.xlu0 %v1599, 64
        %v1694 = vpop.permute.xlu0 %1693
        %v1697 = vsel %vm583, %v1692, 0
        %1699 = vmatprep.subr.mxu0 0.0
        %1700 = vmatpush1.msra.mxu0 %v1694
        %1701 = vmatprep.subr.mxu0 0.0
        %1702 = vmatpush1.msra.mxu0 0.0
        %1703 = vmatprep.subr.mxu0 0.0
        %1704 = vmatpush1.msra.mxu0 0.0
        %1705 = vmatprep.subr.mxu0 0.0
        %1706 = vmatpush1.msra.mxu0 0.0
        %1707 = vmatprep.subr.mxu0 0.0
        %1708 = vmatpush1.msra.mxu0 0.0
        %1709 = vmatprep.subr.mxu0 0.0
        %1710 = vmatpush1.msra.mxu0 0.0
        %1711 = vmatprep.subr.mxu0 0.0
        %1712 = vmatpush1.msra.mxu0 0.0
        %1713 = vmatprep.subr.mxu0 0.0
        %1714 = vmatpush1.msra.mxu0 0.0
        %1715 = vmatprep.subr.mxu0 0.0
        %1716 = vmatpush1.msra.mxu0 0.0
        %1717 = vmatprep.subr.mxu0 0.0
        %1718 = vmatpush1.msra.mxu0 0.0
        %1719 = vmatprep.subr.mxu0 0.0
        %1720 = vmatpush1.msra.mxu0 0.0
        %1721 = vmatprep.subr.mxu0 0.0
        %1722 = vmatpush1.msra.mxu0 0.0
        %1723 = vmatprep.subr.mxu0 0.0
        %1724 = vmatpush1.msra.mxu0 0.0
        %1725 = vmatprep.subr.mxu0 0.0
        %1726 = vmatpush1.msra.mxu0 0.0
        %1727 = vmatprep.subr.mxu0 0.0
        %1728 = vmatpush1.msra.mxu0 0.0
        %1729 = vmatprep.subr.mxu0 0.0
        %1730 = vmatpush1.msra.mxu0 0.0
        %1731 = vmatprep.subr.mxu0 0.0
        %1732 = vmatpush1.msra.mxu0 0.0
        %1733 = vmatprep.subr.mxu0 0.0
        %1734 = vmatpush1.msra.mxu0 0.0
        %1735 = vmatprep.subr.mxu0 0.0
        %1736 = vmatpush1.msra.mxu0 0.0
        %1737 = vmatprep.subr.mxu0 0.0
        %1738 = vmatpush1.msra.mxu0 0.0
        %1739 = vmatprep.subr.mxu0 0.0
        %1740 = vmatpush1.msra.mxu0 0.0
        %1741 = vmatprep.subr.mxu0 0.0
        %1742 = vmatpush1.msra.mxu0 0.0
        %1743 = vmatprep.subr.mxu0 0.0
        %1744 = vmatpush1.msra.mxu0 0.0
        %1745 = vmatprep.subr.mxu0 0.0
        %1746 = vmatpush1.msra.mxu0 0.0
        %1747 = vmatprep.subr.mxu0 0.0
        %1748 = vmatpush1.msra.mxu0 0.0
        %1749 = vmatprep.subr.mxu0 0.0
        %1750 = vmatpush1.msra.mxu0 0.0
        %1751 = vmatprep.subr.mxu0 0.0
        %1752 = vmatpush1.msra.mxu0 0.0
        %1753 = vmatprep.subr.mxu0 0.0
        %1754 = vmatpush1.msra.mxu0 0.0
        %1755 = vmatprep.subr.mxu0 0.0
        %1756 = vmatpush1.msra.mxu0 0.0
        %1757 = vmatprep.subr.mxu0 0.0
        %1758 = vmatpush1.msra.mxu0 0.0
        %1759 = vmatprep.subr.mxu0 0.0
        %1760 = vmatpush1.msra.mxu0 0.0
        %1761 = vmatprep.subr.mxu0 0.0
        %1762 = vmatpush1.msra.mxu0 0.0
        %1763 = vmatprep.mubr.f32.mxu0 0.0
        %1764 = vmatmul.mubr.f32.gmra.mrb[0].mxu0 %v1697
        %v1765 = vpop.f32.mrb[0].mxu0
        %v1766 = vadd.f32 0.0, %v1765
        %v1767 = vpop.f32.mrb[0].mxu0
        %1768 = vdwg.mxu0
        %1769 = vrot.lane.b32.xlu0 %v1599, 120
        %v1770 = vpop.permute.xlu0 %1769
        %1771 = vrot.lane.b32.xlu0 %v1599, 88
        %v1772 = vpop.permute.xlu0 %1771
        %v1773 = vsel %vm583, %v1770, 0
        %v1775 = vsel %vm583, %v1772, 0
        %1777 = vmatprep.subr.mxu0 0.0
        %1778 = vmatpush1.xpose.msra.mxu0 %v1775
        %1779 = vmatprep.subr.mxu0 0.0
        %1780 = vmatpush1.xpose.msra.mxu0 0.0
        %1781 = vmatprep.subr.mxu0 0.0
        %1782 = vmatpush1.xpose.msra.mxu0 0.0
        %1783 = vmatprep.subr.mxu0 0.0
        %1784 = vmatpush1.xpose.msra.mxu0 0.0
        %1785 = vmatprep.subr.mxu0 0.0
        %1786 = vmatpush1.xpose.msra.mxu0 0.0
        %1787 = vmatprep.subr.mxu0 0.0
        %1788 = vmatpush1.xpose.msra.mxu0 0.0
        %1789 = vmatprep.subr.mxu0 0.0
        %1790 = vmatpush1.xpose.msra.mxu0 0.0
        %1791 = vmatprep.subr.mxu0 0.0
        %1792 = vmatpush1.xpose.msra.mxu0 0.0
        %1793 = vmatprep.subr.mxu0 0.0
        %1794 = vmatpush1.xpose.msra.mxu0 0.0
        %1795 = vmatprep.subr.mxu0 0.0
        %1796 = vmatpush1.xpose.msra.mxu0 0.0
        %1797 = vmatprep.subr.mxu0 0.0
        %1798 = vmatpush1.xpose.msra.mxu0 0.0
        %1799 = vmatprep.subr.mxu0 0.0
        %1800 = vmatpush1.xpose.msra.mxu0 0.0
        %1801 = vmatprep.subr.mxu0 0.0
        %1802 = vmatpush1.xpose.msra.mxu0 0.0
        %1803 = vmatprep.subr.mxu0 0.0
        %1804 = vmatpush1.xpose.msra.mxu0 0.0
        %1805 = vmatprep.subr.mxu0 0.0
        %1806 = vmatpush1.xpose.msra.mxu0 0.0
        %1807 = vmatprep.subr.mxu0 0.0
        %1808 = vmatpush1.xpose.msra.mxu0 0.0
        %1809 = vmatprep.subr.mxu0 0.0
        %1810 = vmatpush1.xpose.msra.mxu0 0.0
        %1811 = vmatprep.subr.mxu0 0.0
        %1812 = vmatpush1.xpose.msra.mxu0 0.0
        %1813 = vmatprep.subr.mxu0 0.0
        %1814 = vmatpush1.xpose.msra.mxu0 0.0
        %1815 = vmatprep.subr.mxu0 0.0
        %1816 = vmatpush1.xpose.msra.mxu0 0.0
        %1817 = vmatprep.subr.mxu0 0.0
        %1818 = vmatpush1.xpose.msra.mxu0 0.0
        %1819 = vmatprep.subr.mxu0 0.0
        %1820 = vmatpush1.xpose.msra.mxu0 0.0
        %1821 = vmatprep.subr.mxu0 0.0
        %1822 = vmatpush1.xpose.msra.mxu0 0.0
        %1823 = vmatprep.subr.mxu0 0.0
        %1824 = vmatpush1.xpose.msra.mxu0 0.0
        %1825 = vmatprep.subr.mxu0 0.0
        %1826 = vmatpush1.xpose.msra.mxu0 0.0
        %1827 = vmatprep.subr.mxu0 0.0
        %1828 = vmatpush1.xpose.msra.mxu0 0.0
        %1829 = vmatprep.subr.mxu0 0.0
        %1830 = vmatpush1.xpose.msra.mxu0 0.0
        %1831 = vmatprep.subr.mxu0 0.0
        %1832 = vmatpush1.xpose.msra.mxu0 0.0
        %1833 = vmatprep.subr.mxu0 0.0
        %1834 = vmatpush1.xpose.msra.mxu0 0.0
        %1835 = vmatprep.subr.mxu0 0.0
        %1836 = vmatpush1.xpose.msra.mxu0 0.0
        %1837 = vmatprep.subr.mxu0 0.0
        %1838 = vmatpush1.xpose.msra.mxu0 0.0
        %1839 = vmatprep.subr.mxu0 0.0
        %1840 = vmatpush1.xpose.msra.mxu0 0.0
        %1841 = vmatprep.mubr.f32.mxu0 0.0
        %1842 = vmatmul.mubr.f32.gmra.mrb[0].mxu0 %v1773
        %v1843 = vpop.f32.mrb[0].mxu0
        %v1844 = vadd.f32 0.0, %v1843
        %v1845 = vpop.f32.mrb[0].mxu0
        %1846 = vdwg.mxu0
        %v1847 = vmul.f32 %v1844, 0.35355338
        %v1848 = vsel %vm583, %v1847, -inf
        %1849 = vmax.xlane.f32.xlu0 %v1848
        %v1850 = vpop.xlane.xlu0 %1849
        %v1851 = vsub.f32 %v1847, %v1850
        %v1852 = vmul.f32 %v1851, 1.442695
        %v1853 = vpow.pop %v1852
        %v1854 = vsel %vm583, %v1853, 0.0
        %1855 = vadd.xlane.f32.xlu0 %v1854
        %v1856 = vpop.xlane.xlu0 %1855
        %v1857 = vrcp.pop %v1856
        %v1858 = vmul.f32 %v1853, %v1857
        %1859 = vrot.lane.b32.xlu0 %v1599, 56
        %v1860 = vpop.permute.xlu0 %1859
        %v1863 = vsel %vm583, %v1858, 0
        %1865 = vmatprep.subr.mxu0 0.0
        %1866 = vmatpush1.msra.mxu0 %v1860
        %1867 = vmatprep.subr.mxu0 0.0
        %1868 = vmatpush1.msra.mxu0 0.0
        %1869 = vmatprep.subr.mxu0 0.0
        %1870 = vmatpush1.msra.mxu0 0.0
        %1871 = vmatprep.subr.mxu0 0.0
        %1872 = vmatpush1.msra.mxu0 0.0
        %1873 = vmatprep.subr.mxu0 0.0
        %1874 = vmatpush1.msra.mxu0 0.0
        %1875 = vmatprep.subr.mxu0 0.0
        %1876 = vmatpush1.msra.mxu0 0.0
        %1877 = vmatprep.subr.mxu0 0.0
        %1878 = vmatpush1.msra.mxu0 0.0
        %1879 = vmatprep.subr.mxu0 0.0
        %1880 = vmatpush1.msra.mxu0 0.0
        %1881 = vmatprep.subr.mxu0 0.0
        %1882 = vmatpush1.msra.mxu0 0.0
        %1883 = vmatprep.subr.mxu0 0.0
        %1884 = vmatpush1.msra.mxu0 0.0
        %1885 = vmatprep.subr.mxu0 0.0
        %1886 = vmatpush1.msra.mxu0 0.0
        %1887 = vmatprep.subr.mxu0 0.0
        %1888 = vmatpush1.msra.mxu0 0.0
        %1889 = vmatprep.subr.mxu0 0.0
        %1890 = vmatpush1.msra.mxu0 0.0
        %1891 = vmatprep.subr.mxu0 0.0
        %1892 = vmatpush1.msra.mxu0 0.0
        %1893 = vmatprep.subr.mxu0 0.0
        %1894 = vmatpush1.msra.mxu0 0.0
        %1895 = vmatprep.subr.mxu0 0.0
        %1896 = vmatpush1.msra.mxu0 0.0
        %1897 = vmatprep.subr.mxu0 0.0
        %1898 = vmatpush1.msra.mxu0 0.0
        %1899 = vmatprep.subr.mxu0 0.0
        %1900 = vmatpush1.msra.mxu0 0.0
        %1901 = vmatprep.subr.mxu0 0.0
        %1902 = vmatpush1.msra.mxu0 0.0
        %1903 = vmatprep.subr.mxu0 0.0
        %1904 = vmatpush1.msra.mxu0 0.0
        %1905 = vmatprep.subr.mxu0 0.0
        %1906 = vmatpush1.msra.mxu0 0.0
        %1907 = vmatprep.subr.mxu0 0.0
        %1908 = vmatpush1.msra.mxu0 0.0
        %1909 = vmatprep.subr.mxu0 0.0
        %1910 = vmatpush1.msra.mxu0 0.0
        %1911 = vmatprep.subr.mxu0 0.0
        %1912 = vmatpush1.msra.mxu0 0.0
        %1913 = vmatprep.subr.mxu0 0.0
        %1914 = vmatpush1.msra.mxu0 0.0
        %1915 = vmatprep.subr.mxu0 0.0
        %1916 = vmatpush1.msra.mxu0 0.0
        %1917 = vmatprep.subr.mxu0 0.0
        %1918 = vmatpush1.msra.mxu0 0.0
        %1919 = vmatprep.subr.mxu0 0.0
        %1920 = vmatpush1.msra.mxu0 0.0
        %1921 = vmatprep.subr.mxu0 0.0
        %1922 = vmatpush1.msra.mxu0 0.0
        %1923 = vmatprep.subr.mxu0 0.0
        %1924 = vmatpush1.msra.mxu0 0.0
        %1925 = vmatprep.subr.mxu0 0.0
        %1926 = vmatpush1.msra.mxu0 0.0
        %1927 = vmatprep.subr.mxu0 0.0
        %1928 = vmatpush1.msra.mxu0 0.0
        %1929 = vmatprep.mubr.f32.mxu0 0.0
        %1930 = vmatmul.mubr.f32.gmra.mrb[0].mxu0 %v1863
        %v1931 = vpop.f32.mrb[0].mxu0
        %v1932 = vadd.f32 0.0, %v1931
        %v1933 = vpop.f32.mrb[0].mxu0
        %1934 = vdwg.mxu0
        %1935 = vrot.lane.b32.xlu0 %v1599, 112
        %v1936 = vpop.permute.xlu0 %1935
        %1937 = vrot.lane.b32.xlu0 %v1599, 80
        %v1938 = vpop.permute.xlu0 %1937
        %v1939 = vsel %vm583, %v1936, 0
        %v1941 = vsel %vm583, %v1938, 0
        %1943 = vmatprep.subr.mxu0 0.0
        %1944 = vmatpush1.xpose.msra.mxu0 %v1941
        %1945 = vmatprep.subr.mxu0 0.0
        %1946 = vmatpush1.xpose.msra.mxu0 0.0
        %1947 = vmatprep.subr.mxu0 0.0
        %1948 = vmatpush1.xpose.msra.mxu0 0.0
        %1949 = vmatprep.subr.mxu0 0.0
        %1950 = vmatpush1.xpose.msra.mxu0 0.0
        %1951 = vmatprep.subr.mxu0 0.0
        %1952 = vmatpush1.xpose.msra.mxu0 0.0
        %1953 = vmatprep.subr.mxu0 0.0
        %1954 = vmatpush1.xpose.msra.mxu0 0.0
        %1955 = vmatprep.subr.mxu0 0.0
        %1956 = vmatpush1.xpose.msra.mxu0 0.0
        %1957 = vmatprep.subr.mxu0 0.0
        %1958 = vmatpush1.xpose.msra.mxu0 0.0
        %1959 = vmatprep.subr.mxu0 0.0
        %1960 = vmatpush1.xpose.msra.mxu0 0.0
        %1961 = vmatprep.subr.mxu0 0.0
        %1962 = vmatpush1.xpose.msra.mxu0 0.0
        %1963 = vmatprep.subr.mxu0 0.0
        %1964 = vmatpush1.xpose.msra.mxu0 0.0
        %1965 = vmatprep.subr.mxu0 0.0
        %1966 = vmatpush1.xpose.msra.mxu0 0.0
        %1967 = vmatprep.subr.mxu0 0.0
        %1968 = vmatpush1.xpose.msra.mxu0 0.0
        %1969 = vmatprep.subr.mxu0 0.0
        %1970 = vmatpush1.xpose.msra.mxu0 0.0
        %1971 = vmatprep.subr.mxu0 0.0
        %1972 = vmatpush1.xpose.msra.mxu0 0.0
        %1973 = vmatprep.subr.mxu0 0.0
        %1974 = vmatpush1.xpose.msra.mxu0 0.0
        %1975 = vmatprep.subr.mxu0 0.0
        %1976 = vmatpush1.xpose.msra.mxu0 0.0
        %1977 = vmatprep.subr.mxu0 0.0
        %1978 = vmatpush1.xpose.msra.mxu0 0.0
        %1979 = vmatprep.subr.mxu0 0.0
        %1980 = vmatpush1.xpose.msra.mxu0 0.0
        %1981 = vmatprep.subr.mxu0 0.0
        %1982 = vmatpush1.xpose.msra.mxu0 0.0
        %1983 = vmatprep.subr.mxu0 0.0
        %1984 = vmatpush1.xpose.msra.mxu0 0.0
        %1985 = vmatprep.subr.mxu0 0.0
        %1986 = vmatpush1.xpose.msra.mxu0 0.0
        %1987 = vmatprep.subr.mxu0 0.0
        %1988 = vmatpush1.xpose.msra.mxu0 0.0
        %1989 = vmatprep.subr.mxu0 0.0
        %1990 = vmatpush1.xpose.msra.mxu0 0.0
        %1991 = vmatprep.subr.mxu0 0.0
        %1992 = vmatpush1.xpose.msra.mxu0 0.0
        %1993 = vmatprep.subr.mxu0 0.0
        %1994 = vmatpush1.xpose.msra.mxu0 0.0
        %1995 = vmatprep.subr.mxu0 0.0
        %1996 = vmatpush1.xpose.msra.mxu0 0.0
        %1997 = vmatprep.subr.mxu0 0.0
        %1998 = vmatpush1.xpose.msra.mxu0 0.0
        %1999 = vmatprep.subr.mxu0 0.0
        %2000 = vmatpush1.xpose.msra.mxu0 0.0
        %2001 = vmatprep.subr.mxu0 0.0
        %2002 = vmatpush1.xpose.msra.mxu0 0.0
        %2003 = vmatprep.subr.mxu0 0.0
        %2004 = vmatpush1.xpose.msra.mxu0 0.0
        %2005 = vmatprep.subr.mxu0 0.0
        %2006 = vmatpush1.xpose.msra.mxu0 0.0
        %2007 = vmatprep.mubr.f32.mxu0 0.0
        %2008 = vmatmul.mubr.f32.gmra.mrb[0].mxu0 %v1939
        %v2009 = vpop.f32.mrb[0].mxu0
        %v2010 = vadd.f32 0.0, %v2009
        %v2011 = vpop.f32.mrb[0].mxu0
        %2012 = vdwg.mxu0
        %v2013 = vmul.f32 %v2010, 0.35355338
        %v2014 = vsel %vm583, %v2013, -inf
        %2015 = vmax.xlane.f32.xlu0 %v2014
        %v2016 = vpop.xlane.xlu0 %2015
        %v2017 = vsub.f32 %v2013, %v2016
        %v2018 = vmul.f32 %v2017, 1.442695
        %v2019 = vpow.pop %v2018
        %v2020 = vsel %vm583, %v2019, 0.0
        %2021 = vadd.xlane.f32.xlu0 %v2020
        %v2022 = vpop.xlane.xlu0 %2021
        %v2023 = vrcp.pop %v2022
        %v2024 = vmul.f32 %v2019, %v2023
        %2025 = vrot.lane.b32.xlu0 %v1599, 48
        %v2026 = vpop.permute.xlu0 %2025
        %v2029 = vsel %vm583, %v2024, 0
        %2031 = vmatprep.subr.mxu0 0.0
        %2032 = vmatpush1.msra.mxu0 %v2026
        %2033 = vmatprep.subr.mxu0 0.0
        %2034 = vmatpush1.msra.mxu0 0.0
        %2035 = vmatprep.subr.mxu0 0.0
        %2036 = vmatpush1.msra.mxu0 0.0
        %2037 = vmatprep.subr.mxu0 0.0
        %2038 = vmatpush1.msra.mxu0 0.0
        %2039 = vmatprep.subr.mxu0 0.0
        %2040 = vmatpush1.msra.mxu0 0.0
        %2041 = vmatprep.subr.mxu0 0.0
        %2042 = vmatpush1.msra.mxu0 0.0
        %2043 = vmatprep.subr.mxu0 0.0
        %2044 = vmatpush1.msra.mxu0 0.0
        %2045 = vmatprep.subr.mxu0 0.0
        %2046 = vmatpush1.msra.mxu0 0.0
        %2047 = vmatprep.subr.mxu0 0.0
        %2048 = vmatpush1.msra.mxu0 0.0
        %2049 = vmatprep.subr.mxu0 0.0
        %2050 = vmatpush1.msra.mxu0 0.0
        %2051 = vmatprep.subr.mxu0 0.0
        %2052 = vmatpush1.msra.mxu0 0.0
        %2053 = vmatprep.subr.mxu0 0.0
        %2054 = vmatpush1.msra.mxu0 0.0
        %2055 = vmatprep.subr.mxu0 0.0
        %2056 = vmatpush1.msra.mxu0 0.0
        %2057 = vmatprep.subr.mxu0 0.0
        %2058 = vmatpush1.msra.mxu0 0.0
        %2059 = vmatprep.subr.mxu0 0.0
        %2060 = vmatpush1.msra.mxu0 0.0
        %2061 = vmatprep.subr.mxu0 0.0
        %2062 = vmatpush1.msra.mxu0 0.0
        %2063 = vmatprep.subr.mxu0 0.0
        %2064 = vmatpush1.msra.mxu0 0.0
        %2065 = vmatprep.subr.mxu0 0.0
        %2066 = vmatpush1.msra.mxu0 0.0
        %2067 = vmatprep.subr.mxu0 0.0
        %2068 = vmatpush1.msra.mxu0 0.0
        %2069 = vmatprep.subr.mxu0 0.0
        %2070 = vmatpush1.msra.mxu0 0.0
        %2071 = vmatprep.subr.mxu0 0.0
        %2072 = vmatpush1.msra.mxu0 0.0
        %2073 = vmatprep.subr.mxu0 0.0
        %2074 = vmatpush1.msra.mxu0 0.0
        %2075 = vmatprep.subr.mxu0 0.0
        %2076 = vmatpush1.msra.mxu0 0.0
        %2077 = vmatprep.subr.mxu0 0.0
        %2078 = vmatpush1.msra.mxu0 0.0
        %2079 = vmatprep.subr.mxu0 0.0
        %2080 = vmatpush1.msra.mxu0 0.0
        %2081 = vmatprep.subr.mxu0 0.0
        %2082 = vmatpush1.msra.mxu0 0.0
        %2083 = vmatprep.subr.mxu0 0.0
        %2084 = vmatpush1.msra.mxu0 0.0
        %2085 = vmatprep.subr.mxu0 0.0
        %2086 = vmatpush1.msra.mxu0 0.0
        %2087 = vmatprep.subr.mxu0 0.0
        %2088 = vmatpush1.msra.mxu0 0.0
        %2089 = vmatprep.subr.mxu0 0.0
        %2090 = vmatpush1.msra.mxu0 0.0
        %2091 = vmatprep.subr.mxu0 0.0
        %2092 = vmatpush1.msra.mxu0 0.0
        %2093 = vmatprep.subr.mxu0 0.0
        %2094 = vmatpush1.msra.mxu0 0.0
        %2095 = vmatprep.mubr.f32.mxu0 0.0
        %2096 = vmatmul.mubr.f32.gmra.mrb[0].mxu0 %v2029
        %v2097 = vpop.f32.mrb[0].mxu0
        %v2098 = vadd.f32 0.0, %v2097
        %v2099 = vpop.f32.mrb[0].mxu0
        %2100 = vdwg.mxu0
        %2101 = vrot.lane.b32.xlu0 %v1599, 104
        %v2102 = vpop.permute.xlu0 %2101
        %2103 = vrot.lane.b32.xlu0 %v1599, 72
        %v2104 = vpop.permute.xlu0 %2103
        %v2105 = vsel %vm583, %v2102, 0
        %v2107 = vsel %vm583, %v2104, 0
        %2109 = vmatprep.subr.mxu0 0.0
        %2110 = vmatpush1.xpose.msra.mxu0 %v2107
        %2111 = vmatprep.subr.mxu0 0.0
        %2112 = vmatpush1.xpose.msra.mxu0 0.0
        %2113 = vmatprep.subr.mxu0 0.0
        %2114 = vmatpush1.xpose.msra.mxu0 0.0
        %2115 = vmatprep.subr.mxu0 0.0
        %2116 = vmatpush1.xpose.msra.mxu0 0.0
        %2117 = vmatprep.subr.mxu0 0.0
        %2118 = vmatpush1.xpose.msra.mxu0 0.0
        %2119 = vmatprep.subr.mxu0 0.0
        %2120 = vmatpush1.xpose.msra.mxu0 0.0
        %2121 = vmatprep.subr.mxu0 0.0
        %2122 = vmatpush1.xpose.msra.mxu0 0.0
        %2123 = vmatprep.subr.mxu0 0.0
        %2124 = vmatpush1.xpose.msra.mxu0 0.0
        %2125 = vmatprep.subr.mxu0 0.0
        %2126 = vmatpush1.xpose.msra.mxu0 0.0
        %2127 = vmatprep.subr.mxu0 0.0
        %2128 = vmatpush1.xpose.msra.mxu0 0.0
        %2129 = vmatprep.subr.mxu0 0.0
        %2130 = vmatpush1.xpose.msra.mxu0 0.0
        %2131 = vmatprep.subr.mxu0 0.0
        %2132 = vmatpush1.xpose.msra.mxu0 0.0
        %2133 = vmatprep.subr.mxu0 0.0
        %2134 = vmatpush1.xpose.msra.mxu0 0.0
        %2135 = vmatprep.subr.mxu0 0.0
        %2136 = vmatpush1.xpose.msra.mxu0 0.0
        %2137 = vmatprep.subr.mxu0 0.0
        %2138 = vmatpush1.xpose.msra.mxu0 0.0
        %2139 = vmatprep.subr.mxu0 0.0
        %2140 = vmatpush1.xpose.msra.mxu0 0.0
        %2141 = vmatprep.subr.mxu0 0.0
        %2142 = vmatpush1.xpose.msra.mxu0 0.0
        %2143 = vmatprep.subr.mxu0 0.0
        %2144 = vmatpush1.xpose.msra.mxu0 0.0
        %2145 = vmatprep.subr.mxu0 0.0
        %2146 = vmatpush1.xpose.msra.mxu0 0.0
        %2147 = vmatprep.subr.mxu0 0.0
        %2148 = vmatpush1.xpose.msra.mxu0 0.0
        %2149 = vmatprep.subr.mxu0 0.0
        %2150 = vmatpush1.xpose.msra.mxu0 0.0
        %2151 = vmatprep.subr.mxu0 0.0
        %2152 = vmatpush1.xpose.msra.mxu0 0.0
        %2153 = vmatprep.subr.mxu0 0.0
        %2154 = vmatpush1.xpose.msra.mxu0 0.0
        %2155 = vmatprep.subr.mxu0 0.0
        %2156 = vmatpush1.xpose.msra.mxu0 0.0
        %2157 = vmatprep.subr.mxu0 0.0
        %2158 = vmatpush1.xpose.msra.mxu0 0.0
        %2159 = vmatprep.subr.mxu0 0.0
        %2160 = vmatpush1.xpose.msra.mxu0 0.0
        %2161 = vmatprep.subr.mxu0 0.0
        %2162 = vmatpush1.xpose.msra.mxu0 0.0
        %2163 = vmatprep.subr.mxu0 0.0
        %2164 = vmatpush1.xpose.msra.mxu0 0.0
        %2165 = vmatprep.subr.mxu0 0.0
        %2166 = vmatpush1.xpose.msra.mxu0 0.0
        %2167 = vmatprep.subr.mxu0 0.0
        %2168 = vmatpush1.xpose.msra.mxu0 0.0
        %2169 = vmatprep.subr.mxu0 0.0
        %2170 = vmatpush1.xpose.msra.mxu0 0.0
        %2171 = vmatprep.subr.mxu0 0.0
        %2172 = vmatpush1.xpose.msra.mxu0 0.0
        %2173 = vmatprep.mubr.f32.mxu0 0.0
        %2174 = vmatmul.mubr.f32.gmra.mrb[0].mxu0 %v2105
        %v2175 = vpop.f32.mrb[0].mxu0
        %v2176 = vadd.f32 0.0, %v2175
        %v2177 = vpop.f32.mrb[0].mxu0
        %2178 = vdwg.mxu0
        %v2179 = vmul.f32 %v2176, 0.35355338
        %v2180 = vsel %vm583, %v2179, -inf
        %2181 = vmax.xlane.f32.xlu0 %v2180
        %v2182 = vpop.xlane.xlu0 %2181
        %v2183 = vsub.f32 %v2179, %v2182
        %v2184 = vmul.f32 %v2183, 1.442695
        %v2185 = vpow.pop %v2184
        %v2186 = vsel %vm583, %v2185, 0.0
        %2187 = vadd.xlane.f32.xlu0 %v2186
        %v2188 = vpop.xlane.xlu0 %2187
        %v2189 = vrcp.pop %v2188
        %v2190 = vmul.f32 %v2185, %v2189
        %2191 = vrot.lane.b32.xlu0 %v1599, 40
        %v2192 = vpop.permute.xlu0 %2191
        %v2195 = vsel %vm583, %v2190, 0
        %2197 = vmatprep.subr.mxu0 0.0
        %2198 = vmatpush1.msra.mxu0 %v2192
        %2199 = vmatprep.subr.mxu0 0.0
        %2200 = vmatpush1.msra.mxu0 0.0
        %2201 = vmatprep.subr.mxu0 0.0
        %2202 = vmatpush1.msra.mxu0 0.0
        %2203 = vmatprep.subr.mxu0 0.0
        %2204 = vmatpush1.msra.mxu0 0.0
        %2205 = vmatprep.subr.mxu0 0.0
        %2206 = vmatpush1.msra.mxu0 0.0
        %2207 = vmatprep.subr.mxu0 0.0
        %2208 = vmatpush1.msra.mxu0 0.0
        %2209 = vmatprep.subr.mxu0 0.0
        %2210 = vmatpush1.msra.mxu0 0.0
        %2211 = vmatprep.subr.mxu0 0.0
        %2212 = vmatpush1.msra.mxu0 0.0
        %2213 = vmatprep.subr.mxu0 0.0
        %2214 = vmatpush1.msra.mxu0 0.0
        %2215 = vmatprep.subr.mxu0 0.0
        %2216 = vmatpush1.msra.mxu0 0.0
        %2217 = vmatprep.subr.mxu0 0.0
        %2218 = vmatpush1.msra.mxu0 0.0
        %2219 = vmatprep.subr.mxu0 0.0
        %2220 = vmatpush1.msra.mxu0 0.0
        %2221 = vmatprep.subr.mxu0 0.0
        %2222 = vmatpush1.msra.mxu0 0.0
        %2223 = vmatprep.subr.mxu0 0.0
        %2224 = vmatpush1.msra.mxu0 0.0
        %2225 = vmatprep.subr.mxu0 0.0
        %2226 = vmatpush1.msra.mxu0 0.0
        %2227 = vmatprep.subr.mxu0 0.0
        %2228 = vmatpush1.msra.mxu0 0.0
        %2229 = vmatprep.subr.mxu0 0.0
        %2230 = vmatpush1.msra.mxu0 0.0
        %2231 = vmatprep.subr.mxu0 0.0
        %2232 = vmatpush1.msra.mxu0 0.0
        %2233 = vmatprep.subr.mxu0 0.0
        %2234 = vmatpush1.msra.mxu0 0.0
        %2235 = vmatprep.subr.mxu0 0.0
        %2236 = vmatpush1.msra.mxu0 0.0
        %2237 = vmatprep.subr.mxu0 0.0
        %2238 = vmatpush1.msra.mxu0 0.0
        %2239 = vmatprep.subr.mxu0 0.0
        %2240 = vmatpush1.msra.mxu0 0.0
        %2241 = vmatprep.subr.mxu0 0.0
        %2242 = vmatpush1.msra.mxu0 0.0
        %2243 = vmatprep.subr.mxu0 0.0
        %2244 = vmatpush1.msra.mxu0 0.0
        %2245 = vmatprep.subr.mxu0 0.0
        %2246 = vmatpush1.msra.mxu0 0.0
        %2247 = vmatprep.subr.mxu0 0.0
        %2248 = vmatpush1.msra.mxu0 0.0
        %2249 = vmatprep.subr.mxu0 0.0
        %2250 = vmatpush1.msra.mxu0 0.0
        %2251 = vmatprep.subr.mxu0 0.0
        %2252 = vmatpush1.msra.mxu0 0.0
        %2253 = vmatprep.subr.mxu0 0.0
        %2254 = vmatpush1.msra.mxu0 0.0
        %2255 = vmatprep.subr.mxu0 0.0
        %2256 = vmatpush1.msra.mxu0 0.0
        %2257 = vmatprep.subr.mxu0 0.0
        %2258 = vmatpush1.msra.mxu0 0.0
        %2259 = vmatprep.subr.mxu0 0.0
        %2260 = vmatpush1.msra.mxu0 0.0
        %2261 = vmatprep.mubr.f32.mxu0 0.0
        %2262 = vmatmul.mubr.f32.gmra.mrb[0].mxu0 %v2195
        %v2263 = vpop.f32.mrb[0].mxu0
        %v2264 = vadd.f32 0.0, %v2263
        %v2265 = vpop.f32.mrb[0].mxu0
        %2266 = vdwg.mxu0
        %2268 = vrot.lane.b32.xlu0 %v1932, 8
        %v2269 = vpop.permute.xlu0 %2268
        %2272 = vrot.lane.b32.xlu0 %v2098, 16
        %v2273 = vpop.permute.xlu0 %2272
        %2276 = vrot.lane.b32.xlu0 %v2264, 24
        %v2277 = vpop.permute.xlu0 %2276
        %v2279 = vsel %vm583, %v1766, %v2269
        %v2280 = vsel %vm1257, %v2279, %v2273
        %v2281 = vsel %vm1259, %v2280, %v2277
        %v2282 = vpack.c.bf16 %v2281, %v2281
        %s2283 = scalar_lea.vmem %s4, 16
        %v2284 = vld [vmem:[%s2283] sm:$0xf]
        %v2285 = vld [vmem:[%s2283 + $0x4] sm:$0xf]
        %v2286 = vld [vmem:[%s2283 + $0x8] sm:$0xf]
        %v2287 = vld [vmem:[%s2283 + $0xc] sm:$0xf]
        %s2288 = scalar_lea.vmem [#allocation5], 1
        %v2289 = vld [vmem:[%s2288] sm:$0x1]
        %v2291 = vlaneseq
        %v2292 = vshrl.u32 %v2291, 7
        %v2293 = vsub.s32 0, %v2292
        %v2294 = vrot.slane %v2289, %v2293
        %v2300 = vunpack.c.l.b16 %v2284
        %v2301 = vunpack.c.l.b16 %v2285
        %v2302 = vunpack.c.l.b16 %v2286
        %v2303 = vunpack.c.l.b16 %v2287
        %v2304 = vpack.c.b16 %v2301, %v2300
        %v2305 = vpack.c.b16 %v2303, %v2302
        %v2309 = vsel %vm491, %v2282, 0
        %2311 = vmatprep.subr.bf16.mxu0 0
        %2312 = vmatpush1.bf16.msra.mxu0 %v2304
        %2313 = vmatprep.subr.bf16.mxu0 0
        %2314 = vmatpush1.bf16.msra.mxu0 %v2305
        %2315 = vmatprep.subr.bf16.mxu0 0
        %2316 = vmatpush1.bf16.msra.mxu0 0
        %2317 = vmatprep.subr.bf16.mxu0 0
        %2318 = vmatpush1.bf16.msra.mxu0 0
        %2319 = vmatprep.subr.bf16.mxu0 0
        %2320 = vmatpush1.bf16.msra.mxu0 0
        %2321 = vmatprep.subr.bf16.mxu0 0
        %2322 = vmatpush1.bf16.msra.mxu0 0
        %2323 = vmatprep.subr.bf16.mxu0 0
        %2324 = vmatpush1.bf16.msra.mxu0 0
        %2325 = vmatprep.subr.bf16.mxu0 0
        %2326 = vmatpush1.bf16.msra.mxu0 0
        %2327 = vmatprep.subr.bf16.mxu0 0
        %2328 = vmatpush1.bf16.msra.mxu0 0
        %2329 = vmatprep.subr.bf16.mxu0 0
        %2330 = vmatpush1.bf16.msra.mxu0 0
        %2331 = vmatprep.subr.bf16.mxu0 0
        %2332 = vmatpush1.bf16.msra.mxu0 0
        %2333 = vmatprep.subr.bf16.mxu0 0
        %2334 = vmatpush1.bf16.msra.mxu0 0
        %2335 = vmatprep.subr.bf16.mxu0 0
        %2336 = vmatpush1.bf16.msra.mxu0 0
        %2337 = vmatprep.subr.bf16.mxu0 0
        %2338 = vmatpush1.bf16.msra.mxu0 0
        %2339 = vmatprep.subr.bf16.mxu0 0
        %2340 = vmatpush1.bf16.msra.mxu0 0
        %2341 = vmatprep.subr.bf16.mxu0 0
        %2342 = vmatpush1.bf16.msra.mxu0 0
        %2343 = vmatprep.mubr.bf16.mxu0 0
        %2344 = vmatmul.mubr.bf16.gmra.mrb[0].mxu0 %v2309
        %v2345 = vpop.f32.mrb[0].mxu0
        %v2346 = vadd.f32 %v2294, %v2345
        %v2347 = vpop.f32.mrb[0].mxu0
        %v2348 = vpop.f32.mrb[0].mxu0
        %v2349 = vpop.f32.mrb[0].mxu0
        %2350 = vdwg.mxu0
        %v2351 = vadd.f32 %v1511, %v2346
        %s2352 = scalar_lea.vmem [#allocation7], 1
        %v2353 = vld [vmem:[%s2352] sm:$0x1]
        %s2354 = scalar_lea.vmem [#allocation8], 1
        %v2355 = vld [vmem:[%s2354] sm:$0x1]
        %v2356 = vsel %vm491, %v2351, 0.0
        %2357 = vadd.xlane.f32.xlu0 %v2356
        %v2358 = vpop.xlane.xlu0 %2357
        %v2359 = vmul.f32 %v2358, %v495
        %v2360 = vsub.f32 %v2351, %v2359
        %v2361 = vmul.f32 %v2360, %v2360
        %v2362 = vsel %vm491, %v2361, 0.0
        %2363 = vadd.xlane.f32.xlu0 %v2362
        %v2364 = vpop.xlane.xlu0 %2363
        %v2365 = vmul.f32 %v2364, %v495
        %v2366 = vadd.f32 %v2365, 1e-05
        %v2367 = vrsqrt.pop %v2366
        %v2368 = vmul.f32 %v2360, %v2367
        %v2370 = vlaneseq
        %v2371 = vshrl.u32 %v2370, 7
        %v2372 = vsub.s32 0, %v2371
        %v2373 = vrot.slane %v2353, %v2372
        %v2375 = vmul.f32 %v2368, %v2373
        %v2377 = vlaneseq
        %v2378 = vshrl.u32 %v2377, 7
        %v2379 = vsub.s32 0, %v2378
        %v2380 = vrot.slane %v2355, %v2379
        %v2382 = vadd.f32 %v2375, %v2380
        %v2383 = vpack.c.bf16 %v2382, %v2382
        %s2384 = scalar_lea.vmem %s8, 16
        %v2385 = vld [vmem:[%s2384] sm:$0xf]
        %v2386 = vld [vmem:[%s2384 + $0x4] sm:$0xf]
        %v2387 = vld [vmem:[%s2384 + $0x8] sm:$0xf]
        %v2388 = vld [vmem:[%s2384 + $0xc] sm:$0xf]
        %s2389 = scalar_lea.vmem [#allocation10], 1
        %v2390 = vld [vmem:[%s2389] sm:$0x1]
        %v2392 = vlaneseq
        %v2393 = vshrl.u32 %v2392, 7
        %v2394 = vsub.s32 0, %v2393
        %v2395 = vrot.slane %v2390, %v2394
        %v2401 = vunpack.c.l.b16 %v2385
        %v2402 = vunpack.c.l.b16 %v2386
        %v2403 = vunpack.c.l.b16 %v2387
        %v2404 = vunpack.c.l.b16 %v2388
        %v2405 = vpack.c.b16 %v2402, %v2401
        %v2406 = vpack.c.b16 %v2404, %v2403
        %v2410 = vsel %vm491, %v2383, 0
        %2412 = vmatprep.subr.bf16.mxu0 0
        %2413 = vmatpush1.bf16.msra.mxu0 %v2405
        %2414 = vmatprep.subr.bf16.mxu0 0
        %2415 = vmatpush1.bf16.msra.mxu0 %v2406
        %2416 = vmatprep.subr.bf16.mxu0 0
        %2417 = vmatpush1.bf16.msra.mxu0 0
        %2418 = vmatprep.subr.bf16.mxu0 0
        %2419 = vmatpush1.bf16.msra.mxu0 0
        %2420 = vmatprep.subr.bf16.mxu0 0
        %2421 = vmatpush1.bf16.msra.mxu0 0
        %2422 = vmatprep.subr.bf16.mxu0 0
        %2423 = vmatpush1.bf16.msra.mxu0 0
        %2424 = vmatprep.subr.bf16.mxu0 0
        %2425 = vmatpush1.bf16.msra.mxu0 0
        %2426 = vmatprep.subr.bf16.mxu0 0
        %2427 = vmatpush1.bf16.msra.mxu0 0
        %2428 = vmatprep.subr.bf16.mxu0 0
        %2429 = vmatpush1.bf16.msra.mxu0 0
        %2430 = vmatprep.subr.bf16.mxu0 0
        %2431 = vmatpush1.bf16.msra.mxu0 0
        %2432 = vmatprep.subr.bf16.mxu0 0
        %2433 = vmatpush1.bf16.msra.mxu0 0
        %2434 = vmatprep.subr.bf16.mxu0 0
        %2435 = vmatpush1.bf16.msra.mxu0 0
        %2436 = vmatprep.subr.bf16.mxu0 0
        %2437 = vmatpush1.bf16.msra.mxu0 0
        %2438 = vmatprep.subr.bf16.mxu0 0
        %2439 = vmatpush1.bf16.msra.mxu0 0
        %2440 = vmatprep.subr.bf16.mxu0 0
        %2441 = vmatpush1.bf16.msra.mxu0 0
        %2442 = vmatprep.subr.bf16.mxu0 0
        %2443 = vmatpush1.bf16.msra.mxu0 0
        %2444 = vmatprep.mubr.bf16.mxu0 0
        %2445 = vmatmul.mubr.bf16.gmra.mrb[0].mxu0 %v2410
        %v2446 = vpop.f32.mrb[0].mxu0
        %v2447 = vadd.f32 %v2395, %v2446
        %v2448 = vpop.f32.mrb[0].mxu0
        %v2449 = vpop.f32.mrb[0].mxu0
        %v2450 = vpop.f32.mrb[0].mxu0
        %2451 = vdwg.mxu0
        %v2452 = vmax.f32 %v2447, 0.0
        %v2453 = vpack.c.bf16 %v2452, %v2452
        %s2454 = scalar_lea.vmem %s10, 32
        %v2455 = vld [vmem:[%s2454] sm:$0xf]
        %v2456 = vld [vmem:[%s2454 + $0x4] sm:$0xf]
        %v2457 = vld [vmem:[%s2454 + $0x8] sm:$0xf]
        %v2458 = vld [vmem:[%s2454 + $0xc] sm:$0xf]
        %v2459 = vld [vmem:[%s2454 + $0x10] sm:$0xf]
        %v2460 = vld [vmem:[%s2454 + $0x14] sm:$0xf]
        %v2461 = vld [vmem:[%s2454 + $0x18] sm:$0xf]
        %v2462 = vld [vmem:[%s2454 + $0x1c] sm:$0xf]
        %v2471 = vunpack.c.l.b16 %v2455
        %v2472 = vunpack.c.l.b16 %v2456
        %v2473 = vunpack.c.l.b16 %v2457
        %v2474 = vunpack.c.l.b16 %v2458
        %v2475 = vunpack.c.l.b16 %v2459
        %v2476 = vunpack.c.l.b16 %v2460
        %v2477 = vunpack.c.l.b16 %v2461
        %v2478 = vunpack.c.l.b16 %v2462
        %v2479 = vpack.c.b16 %v2472, %v2471
        %v2480 = vpack.c.b16 %v2474, %v2473
        %v2481 = vpack.c.b16 %v2476, %v2475
        %v2482 = vpack.c.b16 %v2478, %v2477
        %v2488 = vsel %vm1459, %v2453, 0
        %2490 = vmatprep.subr.bf16.mxu0 0
        %2491 = vmatpush1.bf16.msra.mxu0 %v2479
        %2492 = vmatprep.subr.bf16.mxu0 0
        %2493 = vmatpush1.bf16.msra.mxu0 %v2480
        %2494 = vmatprep.subr.bf16.mxu0 0
        %2495 = vmatpush1.bf16.msra.mxu0 %v2481
        %2496 = vmatprep.subr.bf16.mxu0 0
        %2497 = vmatpush1.bf16.msra.mxu0 %v2482
        %2498 = vmatprep.subr.bf16.mxu0 0
        %2499 = vmatpush1.bf16.msra.mxu0 0
        %2500 = vmatprep.subr.bf16.mxu0 0
        %2501 = vmatpush1.bf16.msra.mxu0 0
        %2502 = vmatprep.subr.bf16.mxu0 0
        %2503 = vmatpush1.bf16.msra.mxu0 0
        %2504 = vmatprep.subr.bf16.mxu0 0
        %2505 = vmatpush1.bf16.msra.mxu0 0
        %2506 = vmatprep.subr.bf16.mxu0 0
        %2507 = vmatpush1.bf16.msra.mxu0 0
        %2508 = vmatprep.subr.bf16.mxu0 0
        %2509 = vmatpush1.bf16.msra.mxu0 0
        %2510 = vmatprep.subr.bf16.mxu0 0
        %2511 = vmatpush1.bf16.msra.mxu0 0
        %2512 = vmatprep.subr.bf16.mxu0 0
        %2513 = vmatpush1.bf16.msra.mxu0 0
        %2514 = vmatprep.subr.bf16.mxu0 0
        %2515 = vmatpush1.bf16.msra.mxu0 0
        %2516 = vmatprep.subr.bf16.mxu0 0
        %2517 = vmatpush1.bf16.msra.mxu0 0
        %2518 = vmatprep.subr.bf16.mxu0 0
        %2519 = vmatpush1.bf16.msra.mxu0 0
        %2520 = vmatprep.subr.bf16.mxu0 0
        %2521 = vmatpush1.bf16.msra.mxu0 0
        %2522 = vmatprep.mubr.bf16.mxu0 0
        %2523 = vmatmul.mubr.bf16.gmra.mrb[0].mxu0 %v2488
        %v2524 = vpop.f32.mrb[0].mxu0
        %v2525 = vadd.f32 0.0, %v2524
        %v2526 = vpop.f32.mrb[0].mxu0
        %v2527 = vpop.f32.mrb[0].mxu0
        %v2528 = vpop.f32.mrb[0].mxu0
        %2529 = vdwg.mxu0
        %v2530 = vadd.f32 %v2351, %v2525
        %s2531 = scalar_lea.vmem %s11, 1
        %v2532 = vld [vmem:[%s2531] sm:$0x1]
        %v2534 = vlaneseq
        %v2535 = vshrl.u32 %v2534, 7
        %v2536 = vsub.s32 0, %v2535
        %v2537 = vrot.slane %v2532, %v2536
        %v2539 = vadd.f32 %v2530, %v2537
        %2540 = vst.msk [vmem:[%s486] sm:$0xff] %vm491, %v2539
        %s2541 = sand.u32 %s296, 1
        %s2542 = scalar_lea.sflag [#allocation4], %s2541
        %s2543 = sand.u32 %s296, 1
        %s2544 = smul.addr %s2543, 8
        %s2545 = scalar_lea.vmem [#allocation11], %s2544
        // Predicated region
        $region89: #{tpu_custom_call.1} parent=67 // pred_check
          %p2546 = pneg %p306
        $region90: #{tpu_custom_call.1} parent=67 // pred_check_branch
          %2548 = sbr.rel (%p2546) target = $region92
        $region91: #{tpu_custom_call.1} parent=67 // pred_region
          %s2550 = ssub.s32 128, 128
          %2551 = vsyncadd %s2542, %s2550
          %s2552 = smul.addr %s31, 128
          %s2553 = scalar_lea.hbm %s12, %s2552
          %s2555 = sshll.u32 %s2545, 4
          %s2556 = int_to_ptr.vmem [resolvable:$true] %s2555
          %2558 = dma.vmem_to_hbm [thread:$0]  %s2556, 128, %s2553, %s2542
        $region92: #{tpu_custom_call.1} parent=67 // pred_fallthru
          _
      $region68: #{tpu_custom_call.1} parent=5 // pred_fallthru
        _
      %p2559 = scmp.le.s32.totalorder 2, %s26
      // Predicated region
      $region93: #{tpu_custom_call.1} parent=5 // pred_check
        %p2560 = pneg %p2559
      $region94: #{tpu_custom_call.1} parent=5 // pred_check_branch
        %2562 = sbr.rel (%p2560) target = $region96
      $region95: #{tpu_custom_call.1} parent=5 // pred_region
        %s2563 = ssub.s32 %s26, 2
        // Predicated region
        $region97: #{tpu_custom_call.1} parent=95 // pred_check
          %p2564 = pneg %p312
        $region98: #{tpu_custom_call.1} parent=95 // pred_check_branch
          %2566 = sbr.rel (%p2564) target = $region100
        $region99: #{tpu_custom_call.1} parent=95 // pred_region
          %s2567 = sand.u32 %s297, 1
          %s2568 = scalar_lea.sflag [#allocation4], %s2567
          %s2569 = sand.u32 %s297, 1
          %s2570 = smul.addr %s2569, 8
          %s2571 = scalar_lea.vmem [#allocation11], %s2570
          %2572 = dma.done %s2568, 128
        $region100: #{tpu_custom_call.1} parent=95 // pred_fallthru
          _
      $region96: #{tpu_custom_call.1} parent=5 // pred_fallthru
        _
    $region6: #{tpu_custom_call.1} parent=1 // loop_footer
      %s30 = sadd.s32 1, %s26
    $region7: #{tpu_custom_call.1} parent=1 // loop_footer_branch
      %25 = sbr.rel target = $region3
    $region8: #{tpu_custom_call.1} parent=1 // loop_exit
      _
    %2573 = vsyncpa [#allocation3], 1
    %s2574 = scalar_lea.sflag [#allocation3], 1
    %2575 = vsyncpa %s2574, 1
    %2576 = vsyncpa [#allocation6], 1
    %2577 = vsyncpa [#allocation9], 1
    %2578 = vsyncpa [#allocation4], 1
    %s2579 = scalar_lea.sflag [#allocation4], 1
    %2580 = vsyncpa %s2579, 1

</llo_original>
